<compile_context>
chip_gen: v6e
topology: v6e:2x2x1
jax: 0.10.0
libtpu: 0.0.40
codegen_flags: <defaults>
</compile_context>

<pallas_src>
import functools

import jax
import jax.numpy as jnp
from jax.experimental import pallas as pl
from jax.experimental.pallas import tpu as pltpu

_EPS = 1e-5  # nn.BatchNorm default eps


# ----------------------------------------------------------------------------
# Per-generation VMEM handling
# ----------------------------------------------------------------------------
def _vmem_capacity_bytes():
    """Physical per-core VMEM; conservative 64 MiB (v7x) fallback if unknown."""
    try:
        info = pltpu.get_tpu_info()
        for name in ("vmem_capacity_bytes", "vmem_bytes"):
            cap = getattr(info, name, None)
            if cap:
                return int(cap)
    except Exception:
        pass
    return 64 << 20


def _vmem_limit_bytes(cap):
    # ~25% headroom below physical VMEM (never request all of v7x's 64 MiB),
    # capped at ~100 MiB on the 128-MiB generations (v5e/v6e).
    return int(min(cap * 3 // 4, 100 << 20))


def _pick_tile_i(N, H, budget_bytes):
    """Largest row tile (multiple of 8, divisor of N) whose ~8 live f32 working
    buffers of shape (tile, N, H) fit in budget_bytes (cap/8: ~16 MiB on the
    128-MiB parts, ~8 MiB on v7x)."""
    per_row = 8 * N * H * 4
    t = max(8, min(N, (budget_bytes // per_row) // 8 * 8))
    while t > 8 and N % t:
        t -= 8
    return t


def _pick_row_tile(R, cap=512):
    t = max(8, min(R, cap) // 8 * 8)
    while R % t:
        t -= 8
    return t


def _sigmoid(x):
    # One EUP transcendental (tanh) instead of exp + divide: the single EUP slot
    # is the next binding unit once the edge stream is bf16 / on v7x bandwidth.
    return 0.5 * jnp.tanh(0.5 * x) + 0.5


# ----------------------------------------------------------------------------
# Kernel A: fused node-side 1x1 convs  x @ [Wv_e | Wu_n | Wv_n]  (one MXU pass)
# ----------------------------------------------------------------------------
def _node_proj_kernel(x_ref, w3_ref, b3_ref, out_ref):
    out_ref[...] = (jnp.dot(x_ref[...], w3_ref[...],
                            preferred_element_type=jnp.float32)
                    + b3_ref[...]).astype(out_ref.dtype)


def _node_proj(x, lp, *, vmem_limit):
    B, N, H = x.shape
    # MXU fed in the storage dtype; projections kept in f32 (they are small and
    # feed the streamed BN statistics).
    w3 = jnp.concatenate([lp['Wv_e'], lp['Wu_n'], lp['Wv_n']], axis=1).astype(x.dtype)
    b3 = jnp.concatenate([lp['b_v_e'], lp['b_u_n'], lp['b_v_n']], axis=1)   # (1, 3H) f32
    R = B * N                       # flatten (B, N) so tiny B doesn't row-starve the MXU
    tr = _pick_row_tile(R)
    xp = pl.pallas_call(
        _node_proj_kernel,
        grid=(R // tr,),
        in_specs=[pl.BlockSpec((tr, H), lambda r: (r, 0)),
                  pl.BlockSpec((H, 3 * H), lambda r: (0, 0)),
                  pl.BlockSpec((1, 3 * H), lambda r: (0, 0))],
        out_specs=pl.BlockSpec((tr, 3 * H), lambda r: (r, 0)),
        out_shape=jax.ShapeDtypeStruct((R, 3 * H), jnp.float32),
        compiler_params=pltpu.CompilerParams(
            dimension_semantics=("parallel",), vmem_limit_bytes=vmem_limit),
    )(x.reshape(R, H), w3, b3)
    xp = xp.reshape(B, N, 3 * H)
    return xp[..., :H], xp[..., H:2 * H], xp[..., 2 * H:]


# ----------------------------------------------------------------------------
# Shared in-kernel edge transform:  e_tmp[i, j] = U_e e[i, j] + V_e x[j] + V_e x[i]
# ----------------------------------------------------------------------------
def _edge_transform(e2d, w_ref, b_ref, vxe_ref, ti, n, h, row0):
    ue = jnp.dot(e2d, w_ref[...], preferred_element_type=jnp.float32) + b_ref[...]
    vxe_j = vxe_ref[0]                                   # (N, H)  f32
    vxe_i = vxe_ref[0, pl.ds(row0, ti), :]               # (TI, H) f32
    return ue.reshape(ti, n, h) + vxe_j[None, :, :] + vxe_i[:, None, :]


# ----------------------------------------------------------------------------
# Kernel B: gate sums + per-row edge-BatchNorm statistics (layer 0 only)
# ----------------------------------------------------------------------------
def _edge_stats_kernel(e_ref, vxe_ref, wue_ref, bue_ref,
                       gsum_ref, rsum_ref, rsqs_ref):
    _, ti, n, h = e_ref.shape
    row0 = pl.multiple_of(pl.program_id(1) * ti, 8)

    # MXU fed in the storage dtype (bf16 stays bf16); f32 accumulation.
    e_tmp = _edge_transform(e_ref[0].reshape(ti * n, h), wue_ref, bue_ref,
                            vxe_ref, ti, n, h, row0)

    # Per-row (over j) reductions: every grid step writes its own block, so both
    # grid axes stay "parallel" (megacore-friendly); the tiny per-row partials
    # are reduced to the BatchNorm2d batch statistics in JAX glue.
    gsum_ref[...] = jnp.sum(_sigmoid(e_tmp), axis=1).reshape(1, ti, h)
    rsum_ref[...] = jnp.sum(e_tmp, axis=1).reshape(1, ti, h)
    rsqs_ref[...] = jnp.sum(e_tmp * e_tmp, axis=1).reshape(1, ti, h)
    # TODO(synk): for very large N, chunk the j-reduction (fori_loop, unroll=True)
    # to cut the live VMEM of e_tmp.


def _edge_stats(e, vxe, lp, *, tile_i, vmem_limit):
    B, N, _, H = e.shape
    ni = N // tile_i
    row_spec = pl.BlockSpec((1, tile_i, H), lambda b, it: (b, it, 0))
    return pl.pallas_call(
        _edge_stats_kernel,
        grid=(B, ni),
        in_specs=[pl.BlockSpec((1, tile_i, N, H), lambda b, it: (b, it, 0, 0)),
                  pl.BlockSpec((1, N, H), lambda b, it: (b, 0, 0)),
                  pl.BlockSpec((H, H), lambda b, it: (0, 0)),
                  pl.BlockSpec((1, H), lambda b, it: (0, 0))],
        out_specs=(row_spec, row_spec, row_spec),
        out_shape=(jax.ShapeDtypeStruct((B, N, H), jnp.float32),) * 3,
        compiler_params=pltpu.CompilerParams(
            dimension_semantics=("parallel", "parallel"),
            vmem_limit_bytes=vmem_limit),
    )(e, vxe, lp['Wu_e'].astype(e.dtype), lp['b_u_e'])


# ----------------------------------------------------------------------------
# Kernel C (plain, last layer): BN-affine + ReLU + residual, in-place on e
# ----------------------------------------------------------------------------
def _edge_finalize_kernel(e_ref, vxe_ref, wue_ref, bue_ref,
                          escale_ref, eshift_ref, e_out_ref):
    _, ti, n, h = e_ref.shape
    row0 = pl.multiple_of(pl.program_id(1) * ti, 8)

    e_tile = e_ref[0]
    e_tmp = _edge_transform(e_tile.reshape(ti * n, h), wue_ref, bue_ref,
                            vxe_ref, ti, n, h, row0)
    # BN(batch stats) folded to one FMA, then ReLU + residual.
    e_act = jnp.maximum(e_tmp * escale_ref[...].reshape(1, 1, h)
                        + eshift_ref[...].reshape(1, 1, h), 0.0)
    e_out_ref[...] = (e_tile.astype(jnp.float32) + e_act) \
        .astype(e_out_ref.dtype).reshape(1, ti, n, h)


# ----------------------------------------------------------------------------
# Kernel C (fused): finalize layer l AND compute layer l+1's gate/BN statistics
# on the new tile while it is still in VMEM (saves one HBM pass over e).
# ----------------------------------------------------------------------------
def _edge_finalize_fused_kernel(e_ref, vxe_ref, wue_ref, bue_ref,
                                escale_ref, eshift_ref,
                                vxe2_ref, wue2_ref, bue2_ref,
                                e_out_ref, gsum2_ref, rsum2_ref, rsqs2_ref):
    _, ti, n, h = e_ref.shape
    row0 = pl.multiple_of(pl.program_id(1) * ti, 8)

    # ---- finalize layer l on this tile ----
    e_tile = e_ref[0]
    e_tmp = _edge_transform(e_tile.reshape(ti * n, h), wue_ref, bue_ref,
                            vxe_ref, ti, n, h, row0)
    e_act = jnp.maximum(e_tmp * escale_ref[...].reshape(1, 1, h)
                        + eshift_ref[...].reshape(1, 1, h), 0.0)
    # Cast to storage dtype *before* the next-layer pass so the stats match what
    # layer l+1 will re-read from HBM (bit-identical in the bf16 path).
    e_new = (e_tile.astype(jnp.float32) + e_act).astype(e_out_ref.dtype)
    e_out_ref[...] = e_new.reshape(1, ti, n, h)

    # ---- layer l+1 statistics on the freshly written tile (still in VMEM) ----
    e_tmp2 = _edge_transform(e_new.reshape(ti * n, h), wue2_ref, bue2_ref,
                             vxe2_ref, ti, n, h, row0)
    gsum2_ref[...] = jnp.sum(_sigmoid(e_tmp2), axis=1).reshape(1, ti, h)
    rsum2_ref[...] = jnp.sum(e_tmp2, axis=1).reshape(1, ti, h)
    rsqs2_ref[...] = jnp.sum(e_tmp2 * e_tmp2, axis=1).reshape(1, ti, h)


def _edge_specs(B, N, H, tile_i):
    e_spec = pl.BlockSpec((1, tile_i, N, H), lambda b, it: (b, it, 0, 0))
    x_spec = pl.BlockSpec((1, N, H), lambda b, it: (b, 0, 0))
    w_spec = pl.BlockSpec((H, H), lambda b, it: (0, 0))
    v_spec = pl.BlockSpec((1, H), lambda b, it: (0, 0))
    row_spec = pl.BlockSpec((1, tile_i, H), lambda b, it: (b, it, 0))
    return e_spec, x_spec, w_spec, v_spec, row_spec


def _edge_finalize(e, vxe, lp, e_scale, e_shift, *, tile_i, vmem_limit):
    B, N, _, H = e.shape
    ni = N // tile_i
    e_spec, x_spec, w_spec, v_spec, _ = _edge_specs(B, N, H, tile_i)
    return pl.pallas_call(
        _edge_finalize_kernel,
        grid=(B, ni),
        in_specs=[e_spec, x_spec, w_spec, v_spec, v_spec, v_spec],
        out_specs=e_spec,
        out_shape=jax.ShapeDtypeStruct(e.shape, e.dtype),
        input_output_aliases={0: 0},      # e is dead after this call -> in-place under jit
        compiler_params=pltpu.CompilerParams(
            dimension_semantics=("parallel", "parallel"),
            vmem_limit_bytes=vmem_limit),
    )(e, vxe, lp['Wu_e'].astype(e.dtype), lp['b_u_e'], e_scale, e_shift)


def _edge_finalize_fused(e, vxe, lp, e_scale, e_shift, vxe_next, lp_next, *,
                         tile_i, vmem_limit):
    B, N, _, H = e.shape
    ni = N // tile_i
    e_spec, x_spec, w_spec, v_spec, row_spec = _edge_specs(B, N, H, tile_i)
    return pl.pallas_call(
        _edge_finalize_fused_kernel,
        grid=(B, ni),
        in_specs=[e_spec, x_spec, w_spec, v_spec, v_spec, v_spec,
                  x_spec, w_spec, v_spec],
        out_specs=(e_spec, row_spec, row_spec, row_spec),
        out_shape=(jax.ShapeDtypeStruct(e.shape, e.dtype),)
                  + (jax.ShapeDtypeStruct((B, N, H), jnp.float32),) * 3,
        input_output_aliases={0: 0},
        compiler_params=pltpu.CompilerParams(
            dimension_semantics=("parallel", "parallel"),
            vmem_limit_bytes=vmem_limit),
    )(e, vxe, lp['Wu_e'].astype(e.dtype), lp['b_u_e'], e_scale, e_shift,
      vxe_next, lp_next['Wu_e'].astype(e.dtype), lp_next['b_u_e'])


# ----------------------------------------------------------------------------
# Tiny O(H) / O(B*N*H) glue (kept outside the streamed edge kernels)
# ----------------------------------------------------------------------------
def _edge_bn_affine(rowsum, rowsqs, gamma, beta, count):
    # TODO(synk): E[x^2]-E[x]^2 in f32 can cancel for huge B*N^2; switch to a
    # compensated / per-batch-centered accumulation if that regime is hit.
    mean = jnp.sum(rowsum, axis=(0, 1)) / count
    var = jnp.maximum(jnp.sum(rowsqs, axis=(0, 1)) / count - mean * mean, 0.0)
    scale = gamma.reshape(-1) * jax.lax.rsqrt(var + _EPS)
    shift = beta.reshape(-1) - mean * scale
    return scale.reshape(1, -1), shift.reshape(1, -1)


def _node_update(x, uxn, vxn, gate_sum, gamma, beta):
    # NodeFeatures('sum') exactly as written in the torch module: the *self*
    # feature is gated -> x_tmp_i = U_n x_i + (V_n x_i) * sum_j sigmoid(e_ij),
    # then BatchNorm1d(batch stats) + ReLU + residual.
    x_tmp = uxn + vxn * gate_sum                               # (B, N, H) f32
    mean = jnp.mean(x_tmp, axis=(0, 1))
    var = jnp.mean(jnp.square(x_tmp - mean), axis=(0, 1))      # biased, like torch
    scale = gamma.reshape(-1) * jax.lax.rsqrt(var + _EPS)
    shift = beta.reshape(-1) - mean * scale
    x_new = x.astype(jnp.float32) + jnp.maximum(x_tmp * scale + shift, 0.0)
    return x_new.astype(x.dtype)


def _init_embed(coords, params, dtype):
    # TODO(synk): InitEncoder / gather_node_features are not in the provided
    # module source; use a deterministic linear init (coords -> node embed,
    # pairwise distances -> edge embed) and the dense adj_idx=None path.
    x = coords @ params['init_node_W'] + params['init_node_b']             # (B, N, H)
    diff = coords[:, :, None, :] - coords[:, None, :, :]
    dist = jnp.sqrt(jnp.sum(diff * diff, axis=-1) + 1e-12)                 # (B, N, N)
    e = dist[..., None] * params['init_edge_W'] + params['init_edge_b']    # (B, N, N, H)
    return x.astype(dtype), e.astype(dtype)


# ----------------------------------------------------------------------------
# GCNEncoder forward (Pallas path)
# ----------------------------------------------------------------------------
def gcn_encoder_forward(coords, params, *, dtype=jnp.float32, tile_i=None):
    x, e = _init_embed(coords, params, dtype)
    B, N, _, H = e.shape
    assert H % 128 == 0, "pad embedding_dim to a multiple of 128 (lane / MXU tile)"
    assert N % 8 == 0, "pad num_nodes to a multiple of 8 (sublane width)"

    cap = _vmem_capacity_bytes()
    vmem_limit = _vmem_limit_bytes(cap)
    ti = tile_i if tile_i is not None else _pick_tile_i(N, H, cap // 8)
    assert N % ti == 0 and ti % 8 == 0

    layers = params['layers']

    # Layer 0 needs one standalone stats pass over e; every later layer's stats
    # pass is fused into the previous layer's finalize kernel, so the (B,N,N,H)
    # tensor is read+written ~2x per layer instead of 3x.
    vxe, uxn, vxn = _node_proj(x, layers[0], vmem_limit=vmem_limit)
    gate_sum, rowsum, rowsqs = _edge_stats(e, vxe, layers[0],
                                           tile_i=ti, vmem_limit=vmem_limit)

    for l, lp in enumerate(layers):
        e_scale, e_shift = _edge_bn_affine(rowsum, rowsqs,
                                           lp['bn_e_g'], lp['bn_e_b'], B * N * N)
        x = _node_update(x, uxn, vxn, gate_sum, lp['bn_n_g'], lp['bn_n_b'])
        if l + 1 < len(layers):
            lp_next = layers[l + 1]
            # next-layer node projections (needed inside the fused finalize)
            vxe_next, uxn, vxn = _node_proj(x, lp_next, vmem_limit=vmem_limit)
            e, gate_sum, rowsum, rowsqs = _edge_finalize_fused(
                e, vxe, lp, e_scale, e_shift, vxe_next, lp_next,
                tile_i=ti, vmem_limit=vmem_limit)
            vxe = vxe_next
        else:
            e = _edge_finalize(e, vxe, lp, e_scale, e_shift,
                               tile_i=ti, vmem_limit=vmem_limit)

    h = x                                          # == x.permute(0, 2, 1) in torch
    graph_embed = jnp.mean(h.astype(jnp.float32), axis=1).astype(dtype)  # add_graph_dim == 0
    # 'edge_embed' is extra (not in the torch return dict) so the last-layer
    # finalize kernel is exercised / checked as well.
    return {'embeddings': h, 'graph_embed': graph_embed, 'edge_embed': e}


# ----------------------------------------------------------------------------
# Pure-JAX reference (HIGHEST-precision dots)
# ----------------------------------------------------------------------------
def _layer_ref(x, e, p):
    B, N, _, H = e.shape
    hp = jax.lax.Precision.HIGHEST
    xf = x.astype(jnp.float32)
    ef = e.astype(jnp.float32)
    Ue = (jnp.dot(ef.reshape(-1, H), p['Wu_e'], precision=hp) + p['b_u_e']).reshape(B, N, N, H)
    Vxe = (jnp.dot(xf.reshape(-1, H), p['Wv_e'], precision=hp) + p['b_v_e']).reshape(B, N, H)
    Uxn = (jnp.dot(xf.reshape(-1, H), p['Wu_n'], precision=hp) + p['b_u_n']).reshape(B, N, H)
    Vxn = (jnp.dot(xf.reshape(-1, H), p['Wv_n'], precision=hp) + p['b_v_n']).reshape(B, N, H)
    e_tmp = Ue + Vxe[:, None, :, :] + Vxe[:, :, None, :]
    gate = jax.nn.sigmoid(e_tmp)
    x_tmp = Uxn + Vxn * jnp.sum(gate, axis=2)
    em = jnp.mean(e_tmp, axis=(0, 1, 2), keepdims=True)
    ev = jnp.mean((e_tmp - em) ** 2, axis=(0, 1, 2), keepdims=True)
    e_bn = (e_tmp - em) / jnp.sqrt(ev + _EPS) * p['bn_e_g'] + p['bn_e_b']
    xm = jnp.mean(x_tmp, axis=(0, 1), keepdims=True)
    xv = jnp.mean((x_tmp - xm) ** 2, axis=(0, 1), keepdims=True)
    x_bn = (x_tmp - xm) / jnp.sqrt(xv + _EPS) * p['bn_n_g'] + p['bn_n_b']
    x_new = (xf + jnp.maximum(x_bn, 0.0)).astype(x.dtype)
    e_new = (ef + jnp.maximum(e_bn, 0.0)).astype(e.dtype)
    return x_new, e_new


def gcn_encoder_forward_ref(coords, params, *, dtype=jnp.float32):
    x, e = _init_embed(coords, params, dtype)
    for lp in params['layers']:
        x, e = _layer_ref(x, e, lp)
    graph_embed = jnp.mean(x.astype(jnp.float32), axis=1).astype(dtype)
    return {'embeddings': x, 'graph_embed': graph_embed, 'edge_embed': e}


# ----------------------------------------------------------------------------
# Deterministic parameter construction (shapes from the module __init__)
# ----------------------------------------------------------------------------
def make_params(key, H, n_layers):
    keys = jax.random.split(key, 2 + 8 * n_layers)
    lim = 1.0 / jnp.sqrt(jnp.float32(H))

    def w(k, shape, l):
        return jax.random.uniform(k, shape, jnp.float32, -l, l)

    params = {
        'init_node_W': w(keys[0], (2, H), 1.0 / jnp.sqrt(2.0)),
        'init_node_b': jnp.zeros((H,), jnp.float32),
        'init_edge_W': w(keys[1], (H,), 1.0),
        'init_edge_b': jnp.zeros((H,), jnp.float32),
        'layers': [],
    }
    for l in range(n_layers):
        ks = keys[2 + 8 * l: 2 + 8 * (l + 1)]
        params['layers'].append({
            'Wu_e': w(ks[0], (H, H), lim), 'b_u_e': w(ks[1], (1, H), lim),
            'Wv_e': w(ks[2], (H, H), lim), 'b_v_e': w(ks[3], (1, H), lim),
            'Wu_n': w(ks[4], (H, H), lim), 'b_u_n': w(ks[5], (1, H), lim),
            'Wv_n': w(ks[6], (H, H), lim), 'b_v_n': w(ks[7], (1, H), lim),
            'bn_e_g': jnp.ones((1, H), jnp.float32), 'bn_e_b': jnp.zeros((1, H), jnp.float32),
            'bn_n_g': jnp.ones((1, H), jnp.float32), 'bn_n_b': jnp.zeros((1, H), jnp.float32),
        })
    return params


if __name__ == "__main__":
    # H = 128 -> full 128-lane / MXU-tile utilization; N = 16 with tile_i = 8
    # exercises the multi-tile streamed path (grid (2, 2)); n_layers = 2 exercises
    # both the fused (next-layer stats) and the plain last-layer finalize kernels.
    B, N, H = 2, 16, 128
    n_encode_layers = 2

    key = jax.random.PRNGKey(0)
    k_coords, k_params = jax.random.split(key)
    coords = jax.random.uniform(k_coords, (B, N, 2), jnp.float32)
    params = make_params(k_params, H, n_encode_layers)

    fwd = jax.jit(functools.partial(gcn_encoder_forward, tile_i=8))
    out = fwd(coords, params)
    jax.block_until_ready(out)

    ref = gcn_encoder_forward_ref(coords, params)
    assert out['embeddings'].shape == (B, N, H)
    assert out['graph_embed'].shape == (B, H)
    # Default in-kernel MXU precision vs HIGHEST-precision reference dots (and a
    # tanh-based sigmoid): 2e-2 comfortably covers the pass-precision gap while
    # still catching real layout / accumulation bugs (those show up at O(0.1..1)).
    for k in ('embeddings', 'graph_embed', 'edge_embed'):
        assert jnp.allclose(out[k], ref[k], atol=2e-2, rtol=2e-2), k

    # bf16 edge/node tensors in HBM (bandwidth-bound path); the MXU is fed bf16
    # directly, accumulation and BN statistics stay f32 inside the kernels.
    fwd_bf16 = jax.jit(functools.partial(gcn_encoder_forward,
                                         dtype=jnp.bfloat16, tile_i=8))
    out_bf16 = fwd_bf16(coords, params)
    jax.block_until_ready(out_bf16)
    assert jnp.allclose(out_bf16['embeddings'].astype(jnp.float32),
                        ref['embeddings'], atol=1e-1, rtol=1e-1)

    print("KERNEL_OK")
</pallas_src>

<mosaic_0001>
module attributes {stable_mosaic.version = 11 : i64} {
  func.func @_node_proj_kernel(%arg0: i32, %arg1: memref<32x128xf32, #tpu.memory_space<vmem>>, %arg2: memref<128x384xf32, #tpu.memory_space<vmem>>, %arg3: memref<1x384xf32, #tpu.memory_space<vmem>>, %arg4: memref<32x384xf32, #tpu.memory_space<vmem>>) attributes {dimension_semantics = [#tpu.dimension_semantics<parallel>], iteration_bounds = array<i64: 1>, scalar_prefetch = 0 : i64, scratch_operands = 0 : i64, tpu.core_type = #tpu.core_type<tc>, window_params = [{transform_indices = @transform_0, window_bounds = array<i64: 32, 128>}, {pipeline_mode = #tpu.pipeline_mode<synchronous>, transform_indices = @transform_1, window_bounds = array<i64: 128, 384>}, {pipeline_mode = #tpu.pipeline_mode<synchronous>, transform_indices = @transform_2, window_bounds = array<i64: 1, 384>}, {transform_indices = @transform_3, window_bounds = array<i64: 32, 384>}]} {
    %c0 = arith.constant 0 : index
    %c0_0 = arith.constant 0 : index
    %0 = vector.load %arg1[%c0, %c0_0] : memref<32x128xf32, #tpu.memory_space<vmem>>, vector<32x128xf32>
    %c0_1 = arith.constant 0 : index
    %c0_2 = arith.constant 0 : index
    %1 = vector.load %arg2[%c0_1, %c0_2] : memref<128x384xf32, #tpu.memory_space<vmem>>, vector<128x384xf32>
    %cst = arith.constant dense<0.000000e+00> : vector<32x384xf32>
    %2 = tpu.matmul %0, %1, %cst {dimension_numbers = #tpu.dot_dimension_numbers<[1], [0], [0], [1], [0, 0, 1, 1], [], []>} : vector<32x128xf32>, vector<128x384xf32>, vector<32x384xf32> -> vector<32x384xf32>
    %c0_3 = arith.constant 0 : index
    %c0_4 = arith.constant 0 : index
    %3 = vector.load %arg3[%c0_3, %c0_4] : memref<1x384xf32, #tpu.memory_space<vmem>>, vector<1x384xf32>
    %4 = vector.broadcast %3 : vector<1x384xf32> to vector<32x384xf32>
    %5 = arith.addf %2, %4 : vector<32x384xf32>
    %c0_5 = arith.constant 0 : index
    %c0_6 = arith.constant 0 : index
    %6 = vector.load %arg4[%c0_5, %c0_6] : memref<32x384xf32, #tpu.memory_space<vmem>>, vector<32x384xf32>
    tpu.vector_store %arg4[%c0_5, %c0_6], %5 {strides = array<i32>} : memref<32x384xf32, #tpu.memory_space<vmem>>, vector<32x384xf32>,
    return
  }
  func.func @transform_0(%arg0: i32) -> (i32, i32) {
    %c0_i32 = arith.constant 0 : i32
    %c0_i32_0 = arith.constant 0 : i32
    return %arg0, %c0_i32 : i32, i32
  }
  func.func @transform_1(%arg0: i32) -> (i32, i32) {
    %c0_i32 = arith.constant 0 : i32
    %c0_i32_0 = arith.constant 0 : i32
    %c0_i32_1 = arith.constant 0 : i32
    return %c0_i32, %c0_i32_0 : i32, i32
  }
  func.func @transform_2(%arg0: i32) -> (i32, i32) {
    %c0_i32 = arith.constant 0 : i32
    %c0_i32_0 = arith.constant 0 : i32
    %c0_i32_1 = arith.constant 0 : i32
    return %c0_i32, %c0_i32_0 : i32, i32
  }
  func.func @transform_3(%arg0: i32) -> (i32, i32) {
    %c0_i32 = arith.constant 0 : i32
    %c0_i32_0 = arith.constant 0 : i32
    return %arg0, %c0_i32 : i32, i32
  }
}

module attributes {stable_mosaic.version = 11 : i64} {
  func.func @_edge_stats_kernel(%arg0: i32, %arg1: i32, %arg2: memref<1x8x16x128xf32, #tpu.memory_space<vmem>>, %arg3: memref<1x16x128xf32, #tpu.memory_space<vmem>>, %arg4: memref<128x128xf32, #tpu.memory_space<vmem>>, %arg5: memref<1x128xf32, #tpu.memory_space<vmem>>, %arg6: memref<1x8x128xf32, #tpu.memory_space<vmem>>, %arg7: memref<1x8x128xf32, #tpu.memory_space<vmem>>, %arg8: memref<1x8x128xf32, #tpu.memory_space<vmem>>) attributes {dimension_semantics = [#tpu.dimension_semantics<parallel>, #tpu.dimension_semantics<parallel>], iteration_bounds = array<i64: 2, 2>, scalar_prefetch = 0 : i64, scratch_operands = 0 : i64, tpu.core_type = #tpu.core_type<tc>, window_params = [{transform_indices = @transform_0, window_bounds = array<i64: 1, 8, 16, 128>}, {transform_indices = @transform_1, window_bounds = array<i64: 1, 16, 128>}, {pipeline_mode = #tpu.pipeline_mode<synchronous>, transform_indices = @transform_2, window_bounds = array<i64: 128, 128>}, {pipeline_mode = #tpu.pipeline_mode<synchronous>, transform_indices = @transform_3, window_bounds = array<i64: 1, 128>}, {transform_indices = @transform_4, window_bounds = array<i64: 1, 8, 128>}, {transform_indices = @transform_5, window_bounds = array<i64: 1, 8, 128>}, {transform_indices = @transform_6, window_bounds = array<i64: 1, 8, 128>}]} {
    %c8_i32 = arith.constant 8 : i32
    %0 = arith.muli %arg1, %c8_i32 : i32
    %1 = tpu.assume_multiple %0, 8 : i32
    %c0 = arith.constant 0 : index
    %c0_0 = arith.constant 0 : index
    %c0_1 = arith.constant 0 : index
    %c0_2 = arith.constant 0 : index
    %2 = vector.load %arg2[%c0, %c0_0, %c0_1, %c0_2] : memref<1x8x16x128xf32, #tpu.memory_space<vmem>>, vector<1x8x16x128xf32>
    %3 = vector.shape_cast %2 : vector<1x8x16x128xf32> to vector<8x16x128xf32>
    %4 = vector.shape_cast %3 : vector<8x16x128xf32> to vector<128x128xf32>
    %c0_3 = arith.constant 0 : index
    %c0_4 = arith.constant 0 : index
    %5 = vector.load %arg4[%c0_3, %c0_4] : memref<128x128xf32, #tpu.memory_space<vmem>>, vector<128x128xf32>
    %cst = arith.constant dense<0.000000e+00> : vector<128x128xf32>
    %6 = tpu.matmul %4, %5, %cst {dimension_numbers = #tpu.dot_dimension_numbers<[1], [0], [0], [1], [0, 0, 1, 1], [], []>} : vector<128x128xf32>, vector<128x128xf32>, vector<128x128xf32> -> vector<128x128xf32>
    %c0_5 = arith.constant 0 : index
    %c0_6 = arith.constant 0 : index
    %7 = vector.load %arg5[%c0_5, %c0_6] : memref<1x128xf32, #tpu.memory_space<vmem>>, vector<1x128xf32>
    %8 = vector.broadcast %7 : vector<1x128xf32> to vector<128x128xf32>
    %9 = arith.addf %6, %8 : vector<128x128xf32>
    %c0_7 = arith.constant 0 : index
    %c0_8 = arith.constant 0 : index
    %c0_9 = arith.constant 0 : index
    %10 = vector.load %arg3[%c0_7, %c0_8, %c0_9] : memref<1x16x128xf32, #tpu.memory_space<vmem>>, vector<1x16x128xf32>
    %11 = vector.shape_cast %10 : vector<1x16x128xf32> to vector<16x128xf32>
    %c0_10 = arith.constant 0 : index
    %12 = arith.index_cast %1 : i32 to index
    %c0_11 = arith.constant 0 : index
    %13 = vector.load %arg3[%c0_10, %12, %c0_11] : memref<1x16x128xf32, #tpu.memory_space<vmem>>, vector<1x8x128xf32>
    %14 = vector.shape_cast %13 : vector<1x8x128xf32> to vector<8x128xf32>
    %15 = vector.shape_cast %9 : vector<128x128xf32> to vector<8x16x128xf32>
    %16 = vector.shape_cast %11 : vector<16x128xf32> to vector<1x16x128xf32>
    %17 = vector.broadcast %16 : vector<1x16x128xf32> to vector<8x16x128xf32>
    %18 = arith.addf %15, %17 : vector<8x16x128xf32>
    %19 = vector.shape_cast %14 : vector<8x128xf32> to vector<8x1x128xf32>
    %20 = vector.broadcast %19 : vector<8x1x128xf32> to vector<8x16x128xf32>
    %21 = arith.addf %18, %20 : vector<8x16x128xf32>
    %cst_12 = arith.constant 5.000000e-01 : f32
    %22 = vector.broadcast %cst_12 : f32 to vector<8x16x128xf32>
    %23 = arith.mulf %22, %21 : vector<8x16x128xf32>
    %24 = math.tanh %23 : vector<8x16x128xf32>
    %cst_13 = arith.constant 5.000000e-01 : f32
    %25 = vector.broadcast %cst_13 : f32 to vector<8x16x128xf32>
    %26 = arith.mulf %25, %24 : vector<8x16x128xf32>
    %cst_14 = arith.constant 5.000000e-01 : f32
    %27 = vector.broadcast %cst_14 : f32 to vector<8x16x128xf32>
    %28 = arith.addf %26, %27 : vector<8x16x128xf32>
    %cst_15 = arith.constant dense<0.000000e+00> : vector<8x128xf32>
    %29 = vector.multi_reduction <add>, %28, %cst_15 [1] : vector<8x16x128xf32> to vector<8x128xf32>
    %30 = vector.shape_cast %29 : vector<8x128xf32> to vector<1x8x128xf32>
    %c0_16 = arith.constant 0 : index
    %c0_17 = arith.constant 0 : index
    %c0_18 = arith.constant 0 : index
    %31 = vector.load %arg6[%c0_16, %c0_17, %c0_18] : memref<1x8x128xf32, #tpu.memory_space<vmem>>, vector<1x8x128xf32>
    tpu.vector_store %arg6[%c0_16, %c0_17, %c0_18], %30 {strides = array<i32>} : memref<1x8x128xf32, #tpu.memory_space<vmem>>, vector<1x8x128xf32>,
    %cst_19 = arith.constant dense<0.000000e+00> : vector<8x128xf32>
    %32 = vector.multi_reduction <add>, %21, %cst_19 [1] : vector<8x16x128xf32> to vector<8x128xf32>
    %33 = vector.shape_cast %32 : vector<8x128xf32> to vector<1x8x128xf32>
    %c0_20 = arith.constant 0 : index
    %c0_21 = arith.constant 0 : index
    %c0_22 = arith.constant 0 : index
    %34 = vector.load %arg7[%c0_20, %c0_21, %c0_22] : memref<1x8x128xf32, #tpu.memory_space<vmem>>, vector<1x8x128xf32>
    tpu.vector_store %arg7[%c0_20, %c0_21, %c0_22], %33 {strides = array<i32>} : memref<1x8x128xf32, #tpu.memory_space<vmem>>, vector<1x8x128xf32>,
    %35 = arith.mulf %21, %21 : vector<8x16x128xf32>
    %cst_23 = arith.constant dense<0.000000e+00> : vector<8x128xf32>
    %36 = vector.multi_reduction <add>, %35, %cst_23 [1] : vector<8x16x128xf32> to vector<8x128xf32>
    %37 = vector.shape_cast %36 : vector<8x128xf32> to vector<1x8x128xf32>
    %c0_24 = arith.constant 0 : index
    %c0_25 = arith.constant 0 : index
    %c0_26 = arith.constant 0 : index
    %38 = vector.load %arg8[%c0_24, %c0_25, %c0_26] : memref<1x8x128xf32, #tpu.memory_space<vmem>>, vector<1x8x128xf32>
    tpu.vector_store %arg8[%c0_24, %c0_25, %c0_26], %37 {strides = array<i32>} : memref<1x8x128xf32, #tpu.memory_space<vmem>>, vector<1x8x128xf32>,
    return
  }
  func.func @transform_0(%arg0: i32, %arg1: i32) -> (i32, i32, i32, i32) {
    %c0_i32 = arith.constant 0 : i32
    %c0_i32_0 = arith.constant 0 : i32
    %c0_i32_1 = arith.constant 0 : i32
    return %arg0, %arg1, %c0_i32, %c0_i32_0 : i32, i32, i32, i32
  }
  func.func @transform_1(%arg0: i32, %arg1: i32) -> (i32, i32, i32) {
    %c0_i32 = arith.constant 0 : i32
    %c0_i32_0 = arith.constant 0 : i32
    %c0_i32_1 = arith.constant 0 : i32
    return %arg0, %c0_i32, %c0_i32_0 : i32, i32, i32
  }
  func.func @transform_2(%arg0: i32, %arg1: i32) -> (i32, i32) {
    %c0_i32 = arith.constant 0 : i32
    %c0_i32_0 = arith.constant 0 : i32
    %c0_i32_1 = arith.constant 0 : i32
    return %c0_i32, %c0_i32_0 : i32, i32
  }
  func.func @transform_3(%arg0: i32, %arg1: i32) -> (i32, i32) {
    %c0_i32 = arith.constant 0 : i32
    %c0_i32_0 = arith.constant 0 : i32
    %c0_i32_1 = arith.constant 0 : i32
    return %c0_i32, %c0_i32_0 : i32, i32
  }
  func.func @transform_4(%arg0: i32, %arg1: i32) -> (i32, i32, i32) {
    %c0_i32 = arith.constant 0 : i32
    %c0_i32_0 = arith.constant 0 : i32
    return %arg0, %arg1, %c0_i32 : i32, i32, i32
  }
  func.func @transform_5(%arg0: i32, %arg1: i32) -> (i32, i32, i32) {
    %c0_i32 = arith.constant 0 : i32
    %c0_i32_0 = arith.constant 0 : i32
    return %arg0, %arg1, %c0_i32 : i32, i32, i32
  }
  func.func @transform_6(%arg0: i32, %arg1: i32) -> (i32, i32, i32) {
    %c0_i32 = arith.constant 0 : i32
    %c0_i32_0 = arith.constant 0 : i32
    return %arg0, %arg1, %c0_i32 : i32, i32, i32
  }
}

module attributes {stable_mosaic.version = 11 : i64} {
  func.func @_edge_finalize_fused_kernel(%arg0: i32, %arg1: i32, %arg2: memref<1x8x16x128xf32, #tpu.memory_space<vmem>>, %arg3: memref<1x16x128xf32, #tpu.memory_space<vmem>>, %arg4: memref<128x128xf32, #tpu.memory_space<vmem>>, %arg5: memref<1x128xf32, #tpu.memory_space<vmem>>, %arg6: memref<1x128xf32, #tpu.memory_space<vmem>>, %arg7: memref<1x128xf32, #tpu.memory_space<vmem>>, %arg8: memref<1x16x128xf32, #tpu.memory_space<vmem>>, %arg9: memref<128x128xf32, #tpu.memory_space<vmem>>, %arg10: memref<1x128xf32, #tpu.memory_space<vmem>>, %arg11: memref<1x8x16x128xf32, #tpu.memory_space<vmem>>, %arg12: memref<1x8x128xf32, #tpu.memory_space<vmem>>, %arg13: memref<1x8x128xf32, #tpu.memory_space<vmem>>, %arg14: memref<1x8x128xf32, #tpu.memory_space<vmem>>) attributes {dimension_semantics = [#tpu.dimension_semantics<parallel>, #tpu.dimension_semantics<parallel>], iteration_bounds = array<i64: 2, 2>, scalar_prefetch = 0 : i64, scratch_operands = 0 : i64, tpu.core_type = #tpu.core_type<tc>, window_params = [{transform_indices = @transform_0, window_bounds = array<i64: 1, 8, 16, 128>}, {transform_indices = @transform_1, window_bounds = array<i64: 1, 16, 128>}, {pipeline_mode = #tpu.pipeline_mode<synchronous>, transform_indices = @transform_2, window_bounds = array<i64: 128, 128>}, {pipeline_mode = #tpu.pipeline_mode<synchronous>, transform_indices = @transform_3, window_bounds = array<i64: 1, 128>}, {pipeline_mode = #tpu.pipeline_mode<synchronous>, transform_indices = @transform_4, window_bounds = array<i64: 1, 128>}, {pipeline_mode = #tpu.pipeline_mode<synchronous>, transform_indices = @transform_5, window_bounds = array<i64: 1, 128>}, {transform_indices = @transform_6, window_bounds = array<i64: 1, 16, 128>}, {pipeline_mode = #tpu.pipeline_mode<synchronous>, transform_indices = @transform_7, window_bounds = array<i64: 128, 128>}, {pipeline_mode = #tpu.pipeline_mode<synchronous>, transform_indices = @transform_8, window_bounds = array<i64: 1, 128>}, {transform_indices = @transform_9, window_bounds = array<i64: 1, 8, 16, 128>}, {transform_indices = @transform_10, window_bounds = array<i64: 1, 8, 128>}, {transform_indices = @transform_11, window_bounds = array<i64: 1, 8, 128>}, {transform_indices = @transform_12, window_bounds = array<i64: 1, 8, 128>}]} {
    %c8_i32 = arith.constant 8 : i32
    %0 = arith.muli %arg1, %c8_i32 : i32
    %1 = tpu.assume_multiple %0, 8 : i32
    %c0 = arith.constant 0 : index
    %c0_0 = arith.constant 0 : index
    %c0_1 = arith.constant 0 : index
    %c0_2 = arith.constant 0 : index
    %2 = vector.load %arg2[%c0, %c0_0, %c0_1, %c0_2] : memref<1x8x16x128xf32, #tpu.memory_space<vmem>>, vector<1x8x16x128xf32>
    %3 = vector.shape_cast %2 : vector<1x8x16x128xf32> to vector<8x16x128xf32>
    %4 = vector.shape_cast %3 : vector<8x16x128xf32> to vector<128x128xf32>
    %c0_3 = arith.constant 0 : index
    %c0_4 = arith.constant 0 : index
    %5 = vector.load %arg4[%c0_3, %c0_4] : memref<128x128xf32, #tpu.memory_space<vmem>>, vector<128x128xf32>
    %cst = arith.constant dense<0.000000e+00> : vector<128x128xf32>
    %6 = tpu.matmul %4, %5, %cst {dimension_numbers = #tpu.dot_dimension_numbers<[1], [0], [0], [1], [0, 0, 1, 1], [], []>} : vector<128x128xf32>, vector<128x128xf32>, vector<128x128xf32> -> vector<128x128xf32>
    %c0_5 = arith.constant 0 : index
    %c0_6 = arith.constant 0 : index
    %7 = vector.load %arg5[%c0_5, %c0_6] : memref<1x128xf32, #tpu.memory_space<vmem>>, vector<1x128xf32>
    %8 = vector.broadcast %7 : vector<1x128xf32> to vector<128x128xf32>
    %9 = arith.addf %6, %8 : vector<128x128xf32>
    %c0_7 = arith.constant 0 : index
    %c0_8 = arith.constant 0 : index
    %c0_9 = arith.constant 0 : index
    %10 = vector.load %arg3[%c0_7, %c0_8, %c0_9] : memref<1x16x128xf32, #tpu.memory_space<vmem>>, vector<1x16x128xf32>
    %11 = vector.shape_cast %10 : vector<1x16x128xf32> to vector<16x128xf32>
    %c0_10 = arith.constant 0 : index
    %12 = arith.index_cast %1 : i32 to index
    %c0_11 = arith.constant 0 : index
    %13 = vector.load %arg3[%c0_10, %12, %c0_11] : memref<1x16x128xf32, #tpu.memory_space<vmem>>, vector<1x8x128xf32>
    %14 = vector.shape_cast %13 : vector<1x8x128xf32> to vector<8x128xf32>
    %15 = vector.shape_cast %9 : vector<128x128xf32> to vector<8x16x128xf32>
    %16 = vector.shape_cast %11 : vector<16x128xf32> to vector<1x16x128xf32>
    %17 = vector.broadcast %16 : vector<1x16x128xf32> to vector<8x16x128xf32>
    %18 = arith.addf %15, %17 : vector<8x16x128xf32>
    %19 = vector.shape_cast %14 : vector<8x128xf32> to vector<8x1x128xf32>
    %20 = vector.broadcast %19 : vector<8x1x128xf32> to vector<8x16x128xf32>
    %21 = arith.addf %18, %20 : vector<8x16x128xf32>
    %c0_12 = arith.constant 0 : index
    %c0_13 = arith.constant 0 : index
    %22 = vector.load %arg6[%c0_12, %c0_13] : memref<1x128xf32, #tpu.memory_space<vmem>>, vector<1x128xf32>
    %23 = vector.shape_cast %22 : vector<1x128xf32> to vector<1x1x128xf32>
    %24 = vector.broadcast %23 : vector<1x1x128xf32> to vector<8x16x128xf32>
    %25 = arith.mulf %21, %24 : vector<8x16x128xf32>
    %c0_14 = arith.constant 0 : index
    %c0_15 = arith.constant 0 : index
    %26 = vector.load %arg7[%c0_14, %c0_15] : memref<1x128xf32, #tpu.memory_space<vmem>>, vector<1x128xf32>
    %27 = vector.shape_cast %26 : vector<1x128xf32> to vector<1x1x128xf32>
    %28 = vector.broadcast %27 : vector<1x1x128xf32> to vector<8x16x128xf32>
    %29 = arith.addf %25, %28 : vector<8x16x128xf32>
    %cst_16 = arith.constant 0.000000e+00 : f32
    %30 = vector.broadcast %cst_16 : f32 to vector<8x16x128xf32>
    %31 = arith.maximumf %29, %30 : vector<8x16x128xf32>
    %32 = arith.addf %3, %31 : vector<8x16x128xf32>
    %33 = vector.shape_cast %32 : vector<8x16x128xf32> to vector<1x8x16x128xf32>
    %c0_17 = arith.constant 0 : index
    %c0_18 = arith.constant 0 : index
    %c0_19 = arith.constant 0 : index
    %c0_20 = arith.constant 0 : index
    %34 = vector.load %arg11[%c0_17, %c0_18, %c0_19, %c0_20] : memref<1x8x16x128xf32, #tpu.memory_space<vmem>>, vector<1x8x16x128xf32>
    tpu.vector_store %arg11[%c0_17, %c0_18, %c0_19, %c0_20], %33 {strides = array<i32>} : memref<1x8x16x128xf32, #tpu.memory_space<vmem>>, vector<1x8x16x128xf32>,
    %35 = vector.shape_cast %32 : vector<8x16x128xf32> to vector<128x128xf32>
    %c0_21 = arith.constant 0 : index
    %c0_22 = arith.constant 0 : index
    %36 = vector.load %arg9[%c0_21, %c0_22] : memref<128x128xf32, #tpu.memory_space<vmem>>, vector<128x128xf32>
    %cst_23 = arith.constant dense<0.000000e+00> : vector<128x128xf32>
    %37 = tpu.matmul %35, %36, %cst_23 {dimension_numbers = #tpu.dot_dimension_numbers<[1], [0], [0], [1], [0, 0, 1, 1], [], []>} : vector<128x128xf32>, vector<128x128xf32>, vector<128x128xf32> -> vector<128x128xf32>
    %c0_24 = arith.constant 0 : index
    %c0_25 = arith.constant 0 : index
    %38 = vector.load %arg10[%c0_24, %c0_25] : memref<1x128xf32, #tpu.memory_space<vmem>>, vector<1x128xf32>
    %39 = vector.broadcast %38 : vector<1x128xf32> to vector<128x128xf32>
    %40 = arith.addf %37, %39 : vector<128x128xf32>
    %c0_26 = arith.constant 0 : index
    %c0_27 = arith.constant 0 : index
    %c0_28 = arith.constant 0 : index
    %41 = vector.load %arg8[%c0_26, %c0_27, %c0_28] : memref<1x16x128xf32, #tpu.memory_space<vmem>>, vector<1x16x128xf32>
    %42 = vector.shape_cast %41 : vector<1x16x128xf32> to vector<16x128xf32>
    %c0_29 = arith.constant 0 : index
    %43 = arith.index_cast %1 : i32 to index
    %c0_30 = arith.constant 0 : index
    %44 = vector.load %arg8[%c0_29, %43, %c0_30] : memref<1x16x128xf32, #tpu.memory_space<vmem>>, vector<1x8x128xf32>
    %45 = vector.shape_cast %44 : vector<1x8x128xf32> to vector<8x128xf32>
    %46 = vector.shape_cast %40 : vector<128x128xf32> to vector<8x16x128xf32>
    %47 = vector.shape_cast %42 : vector<16x128xf32> to vector<1x16x128xf32>
    %48 = vector.broadcast %47 : vector<1x16x128xf32> to vector<8x16x128xf32>
    %49 = arith.addf %46, %48 : vector<8x16x128xf32>
    %50 = vector.shape_cast %45 : vector<8x128xf32> to vector<8x1x128xf32>
    %51 = vector.broadcast %50 : vector<8x1x128xf32> to vector<8x16x128xf32>
    %52 = arith.addf %49, %51 : vector<8x16x128xf32>
    %cst_31 = arith.constant 5.000000e-01 : f32
    %53 = vector.broadcast %cst_31 : f32 to vector<8x16x128xf32>
    %54 = arith.mulf %53, %52 : vector<8x16x128xf32>
    %55 = math.tanh %54 : vector<8x16x128xf32>
    %cst_32 = arith.constant 5.000000e-01 : f32
    %56 = vector.broadcast %cst_32 : f32 to vector<8x16x128xf32>
    %57 = arith.mulf %56, %55 : vector<8x16x128xf32>
    %cst_33 = arith.constant 5.000000e-01 : f32
    %58 = vector.broadcast %cst_33 : f32 to vector<8x16x128xf32>
    %59 = arith.addf %57, %58 : vector<8x16x128xf32>
    %cst_34 = arith.constant dense<0.000000e+00> : vector<8x128xf32>
    %60 = vector.multi_reduction <add>, %59, %cst_34 [1] : vector<8x16x128xf32> to vector<8x128xf32>
    %61 = vector.shape_cast %60 : vector<8x128xf32> to vector<1x8x128xf32>
    %c0_35 = arith.constant 0 : index
    %c0_36 = arith.constant 0 : index
    %c0_37 = arith.constant 0 : index
    %62 = vector.load %arg12[%c0_35, %c0_36, %c0_37] : memref<1x8x128xf32, #tpu.memory_space<vmem>>, vector<1x8x128xf32>
    tpu.vector_store %arg12[%c0_35, %c0_36, %c0_37], %61 {strides = array<i32>} : memref<1x8x128xf32, #tpu.memory_space<vmem>>, vector<1x8x128xf32>,
    %cst_38 = arith.constant dense<0.000000e+00> : vector<8x128xf32>
    %63 = vector.multi_reduction <add>, %52, %cst_38 [1] : vector<8x16x128xf32> to vector<8x128xf32>
    %64 = vector.shape_cast %63 : vector<8x128xf32> to vector<1x8x128xf32>
    %c0_39 = arith.constant 0 : index
    %c0_40 = arith.constant 0 : index
    %c0_41 = arith.constant 0 : index
    %65 = vector.load %arg13[%c0_39, %c0_40, %c0_41] : memref<1x8x128xf32, #tpu.memory_space<vmem>>, vector<1x8x128xf32>
    tpu.vector_store %arg13[%c0_39, %c0_40, %c0_41], %64 {strides = array<i32>} : memref<1x8x128xf32, #tpu.memory_space<vmem>>, vector<1x8x128xf32>,
    %66 = arith.mulf %52, %52 : vector<8x16x128xf32>
    %cst_42 = arith.constant dense<0.000000e+00> : vector<8x128xf32>
    %67 = vector.multi_reduction <add>, %66, %cst_42 [1] : vector<8x16x128xf32> to vector<8x128xf32>
    %68 = vector.shape_cast %67 : vector<8x128xf32> to vector<1x8x128xf32>
    %c0_43 = arith.constant 0 : index
    %c0_44 = arith.constant 0 : index
    %c0_45 = arith.constant 0 : index
    %69 = vector.load %arg14[%c0_43, %c0_44, %c0_45] : memref<1x8x128xf32, #tpu.memory_space<vmem>>, vector<1x8x128xf32>
    tpu.vector_store %arg14[%c0_43, %c0_44, %c0_45], %68 {strides = array<i32>} : memref<1x8x128xf32, #tpu.memory_space<vmem>>, vector<1x8x128xf32>,
    return
  }
  func.func @transform_0(%arg0: i32, %arg1: i32) -> (i32, i32, i32, i32) {
    %c0_i32 = arith.constant 0 : i32
    %c0_i32_0 = arith.constant 0 : i32
    %c0_i32_1 = arith.constant 0 : i32
    return %arg0, %arg1, %c0_i32, %c0_i32_0 : i32, i32, i32, i32
  }
  func.func @transform_1(%arg0: i32, %arg1: i32) -> (i32, i32, i32) {
    %c0_i32 = arith.constant 0 : i32
    %c0_i32_0 = arith.constant 0 : i32
    %c0_i32_1 = arith.constant 0 : i32
    return %arg0, %c0_i32, %c0_i32_0 : i32, i32, i32
  }
  func.func @transform_2(%arg0: i32, %arg1: i32) -> (i32, i32) {
    %c0_i32 = arith.constant 0 : i32
    %c0_i32_0 = arith.constant 0 : i32
    %c0_i32_1 = arith.constant 0 : i32
    return %c0_i32, %c0_i32_0 : i32, i32
  }
  func.func @transform_3(%arg0: i32, %arg1: i32) -> (i32, i32) {
    %c0_i32 = arith.constant 0 : i32
    %c0_i32_0 = arith.constant 0 : i32
    %c0_i32_1 = arith.constant 0 : i32
    return %c0_i32, %c0_i32_0 : i32, i32
  }
  func.func @transform_4(%arg0: i32, %arg1: i32) -> (i32, i32) {
    %c0_i32 = arith.constant 0 : i32
    %c0_i32_0 = arith.constant 0 : i32
    %c0_i32_1 = arith.constant 0 : i32
    return %c0_i32, %c0_i32_0 : i32, i32
  }
  func.func @transform_5(%arg0: i32, %arg1: i32) -> (i32, i32) {
    %c0_i32 = arith.constant 0 : i32
    %c0_i32_0 = arith.constant 0 : i32
    %c0_i32_1 = arith.constant 0 : i32
    return %c0_i32, %c0_i32_0 : i32, i32
  }
  func.func @transform_6(%arg0: i32, %arg1: i32) -> (i32, i32, i32) {
    %c0_i32 = arith.constant 0 : i32
    %c0_i32_0 = arith.constant 0 : i32
    %c0_i32_1 = arith.constant 0 : i32
    return %arg0, %c0_i32, %c0_i32_0 : i32, i32, i32
  }
  func.func @transform_7(%arg0: i32, %arg1: i32) -> (i32, i32) {
    %c0_i32 = arith.constant 0 : i32
    %c0_i32_0 = arith.constant 0 : i32
    %c0_i32_1 = arith.constant 0 : i32
    return %c0_i32, %c0_i32_0 : i32, i32
  }
  func.func @transform_8(%arg0: i32, %arg1: i32) -> (i32, i32) {
    %c0_i32 = arith.constant 0 : i32
    %c0_i32_0 = arith.constant 0 : i32
    %c0_i32_1 = arith.constant 0 : i32
    return %c0_i32, %c0_i32_0 : i32, i32
  }
  func.func @transform_9(%arg0: i32, %arg1: i32) -> (i32, i32, i32, i32) {
    %c0_i32 = arith.constant 0 : i32
    %c0_i32_0 = arith.constant 0 : i32
    %c0_i32_1 = arith.constant 0 : i32
    return %arg0, %arg1, %c0_i32, %c0_i32_0 : i32, i32, i32, i32
  }
  func.func @transform_10(%arg0: i32, %arg1: i32) -> (i32, i32, i32) {
    %c0_i32 = arith.constant 0 : i32
    %c0_i32_0 = arith.constant 0 : i32
    return %arg0, %arg1, %c0_i32 : i32, i32, i32
  }
  func.func @transform_11(%arg0: i32, %arg1: i32) -> (i32, i32, i32) {
    %c0_i32 = arith.constant 0 : i32
    %c0_i32_0 = arith.constant 0 : i32
    return %arg0, %arg1, %c0_i32 : i32, i32, i32
  }
  func.func @transform_12(%arg0: i32, %arg1: i32) -> (i32, i32, i32) {
    %c0_i32 = arith.constant 0 : i32
    %c0_i32_0 = arith.constant 0 : i32
    return %arg0, %arg1, %c0_i32 : i32, i32, i32
  }
}

module attributes {stable_mosaic.version = 11 : i64} {
  func.func @_edge_finalize_kernel(%arg0: i32, %arg1: i32, %arg2: memref<1x8x16x128xf32, #tpu.memory_space<vmem>>, %arg3: memref<1x16x128xf32, #tpu.memory_space<vmem>>, %arg4: memref<128x128xf32, #tpu.memory_space<vmem>>, %arg5: memref<1x128xf32, #tpu.memory_space<vmem>>, %arg6: memref<1x128xf32, #tpu.memory_space<vmem>>, %arg7: memref<1x128xf32, #tpu.memory_space<vmem>>, %arg8: memref<1x8x16x128xf32, #tpu.memory_space<vmem>>) attributes {dimension_semantics = [#tpu.dimension_semantics<parallel>, #tpu.dimension_semantics<parallel>], iteration_bounds = array<i64: 2, 2>, scalar_prefetch = 0 : i64, scratch_operands = 0 : i64, tpu.core_type = #tpu.core_type<tc>, window_params = [{transform_indices = @transform_0, window_bounds = array<i64: 1, 8, 16, 128>}, {transform_indices = @transform_1, window_bounds = array<i64: 1, 16, 128>}, {pipeline_mode = #tpu.pipeline_mode<synchronous>, transform_indices = @transform_2, window_bounds = array<i64: 128, 128>}, {pipeline_mode = #tpu.pipeline_mode<synchronous>, transform_indices = @transform_3, window_bounds = array<i64: 1, 128>}, {pipeline_mode = #tpu.pipeline_mode<synchronous>, transform_indices = @transform_4, window_bounds = array<i64: 1, 128>}, {pipeline_mode = #tpu.pipeline_mode<synchronous>, transform_indices = @transform_5, window_bounds = array<i64: 1, 128>}, {transform_indices = @transform_6, window_bounds = array<i64: 1, 8, 16, 128>}]} {
    %c8_i32 = arith.constant 8 : i32
    %0 = arith.muli %arg1, %c8_i32 : i32
    %1 = tpu.assume_multiple %0, 8 : i32
    %c0 = arith.constant 0 : index
    %c0_0 = arith.constant 0 : index
    %c0_1 = arith.constant 0 : index
    %c0_2 = arith.constant 0 : index
    %2 = vector.load %arg2[%c0, %c0_0, %c0_1, %c0_2] : memref<1x8x16x128xf32, #tpu.memory_space<vmem>>, vector<1x8x16x128xf32>
    %3 = vector.shape_cast %2 : vector<1x8x16x128xf32> to vector<8x16x128xf32>
    %4 = vector.shape_cast %3 : vector<8x16x128xf32> to vector<128x128xf32>
    %c0_3 = arith.constant 0 : index
    %c0_4 = arith.constant 0 : index
    %5 = vector.load %arg4[%c0_3, %c0_4] : memref<128x128xf32, #tpu.memory_space<vmem>>, vector<128x128xf32>
    %cst = arith.constant dense<0.000000e+00> : vector<128x128xf32>
    %6 = tpu.matmul %4, %5, %cst {dimension_numbers = #tpu.dot_dimension_numbers<[1], [0], [0], [1], [0, 0, 1, 1], [], []>} : vector<128x128xf32>, vector<128x128xf32>, vector<128x128xf32> -> vector<128x128xf32>
    %c0_5 = arith.constant 0 : index
    %c0_6 = arith.constant 0 : index
    %7 = vector.load %arg5[%c0_5, %c0_6] : memref<1x128xf32, #tpu.memory_space<vmem>>, vector<1x128xf32>
    %8 = vector.broadcast %7 : vector<1x128xf32> to vector<128x128xf32>
    %9 = arith.addf %6, %8 : vector<128x128xf32>
    %c0_7 = arith.constant 0 : index
    %c0_8 = arith.constant 0 : index
    %c0_9 = arith.constant 0 : index
    %10 = vector.load %arg3[%c0_7, %c0_8, %c0_9] : memref<1x16x128xf32, #tpu.memory_space<vmem>>, vector<1x16x128xf32>
    %11 = vector.shape_cast %10 : vector<1x16x128xf32> to vector<16x128xf32>
    %c0_10 = arith.constant 0 : index
    %12 = arith.index_cast %1 : i32 to index
    %c0_11 = arith.constant 0 : index
    %13 = vector.load %arg3[%c0_10, %12, %c0_11] : memref<1x16x128xf32, #tpu.memory_space<vmem>>, vector<1x8x128xf32>
    %14 = vector.shape_cast %13 : vector<1x8x128xf32> to vector<8x128xf32>
    %15 = vector.shape_cast %9 : vector<128x128xf32> to vector<8x16x128xf32>
    %16 = vector.shape_cast %11 : vector<16x128xf32> to vector<1x16x128xf32>
    %17 = vector.broadcast %16 : vector<1x16x128xf32> to vector<8x16x128xf32>
    %18 = arith.addf %15, %17 : vector<8x16x128xf32>
    %19 = vector.shape_cast %14 : vector<8x128xf32> to vector<8x1x128xf32>
    %20 = vector.broadcast %19 : vector<8x1x128xf32> to vector<8x16x128xf32>
    %21 = arith.addf %18, %20 : vector<8x16x128xf32>
    %c0_12 = arith.constant 0 : index
    %c0_13 = arith.constant 0 : index
    %22 = vector.load %arg6[%c0_12, %c0_13] : memref<1x128xf32, #tpu.memory_space<vmem>>, vector<1x128xf32>
    %23 = vector.shape_cast %22 : vector<1x128xf32> to vector<1x1x128xf32>
    %24 = vector.broadcast %23 : vector<1x1x128xf32> to vector<8x16x128xf32>
    %25 = arith.mulf %21, %24 : vector<8x16x128xf32>
    %c0_14 = arith.constant 0 : index
    %c0_15 = arith.constant 0 : index
    %26 = vector.load %arg7[%c0_14, %c0_15] : memref<1x128xf32, #tpu.memory_space<vmem>>, vector<1x128xf32>
    %27 = vector.shape_cast %26 : vector<1x128xf32> to vector<1x1x128xf32>
    %28 = vector.broadcast %27 : vector<1x1x128xf32> to vector<8x16x128xf32>
    %29 = arith.addf %25, %28 : vector<8x16x128xf32>
    %cst_16 = arith.constant 0.000000e+00 : f32
    %30 = vector.broadcast %cst_16 : f32 to vector<8x16x128xf32>
    %31 = arith.maximumf %29, %30 : vector<8x16x128xf32>
    %32 = arith.addf %3, %31 : vector<8x16x128xf32>
    %33 = vector.shape_cast %32 : vector<8x16x128xf32> to vector<1x8x16x128xf32>
    %c0_17 = arith.constant 0 : index
    %c0_18 = arith.constant 0 : index
    %c0_19 = arith.constant 0 : index
    %c0_20 = arith.constant 0 : index
    %34 = vector.load %arg8[%c0_17, %c0_18, %c0_19, %c0_20] : memref<1x8x16x128xf32, #tpu.memory_space<vmem>>, vector<1x8x16x128xf32>
    tpu.vector_store %arg8[%c0_17, %c0_18, %c0_19, %c0_20], %33 {strides = array<i32>} : memref<1x8x16x128xf32, #tpu.memory_space<vmem>>, vector<1x8x16x128xf32>,
    return
  }
  func.func @transform_0(%arg0: i32, %arg1: i32) -> (i32, i32, i32, i32) {
    %c0_i32 = arith.constant 0 : i32
    %c0_i32_0 = arith.constant 0 : i32
    %c0_i32_1 = arith.constant 0 : i32
    return %arg0, %arg1, %c0_i32, %c0_i32_0 : i32, i32, i32, i32
  }
  func.func @transform_1(%arg0: i32, %arg1: i32) -> (i32, i32, i32) {
    %c0_i32 = arith.constant 0 : i32
    %c0_i32_0 = arith.constant 0 : i32
    %c0_i32_1 = arith.constant 0 : i32
    return %arg0, %c0_i32, %c0_i32_0 : i32, i32, i32
  }
  func.func @transform_2(%arg0: i32, %arg1: i32) -> (i32, i32) {
    %c0_i32 = arith.constant 0 : i32
    %c0_i32_0 = arith.constant 0 : i32
    %c0_i32_1 = arith.constant 0 : i32
    return %c0_i32, %c0_i32_0 : i32, i32
  }
  func.func @transform_3(%arg0: i32, %arg1: i32) -> (i32, i32) {
    %c0_i32 = arith.constant 0 : i32
    %c0_i32_0 = arith.constant 0 : i32
    %c0_i32_1 = arith.constant 0 : i32
    return %c0_i32, %c0_i32_0 : i32, i32
  }
  func.func @transform_4(%arg0: i32, %arg1: i32) -> (i32, i32) {
    %c0_i32 = arith.constant 0 : i32
    %c0_i32_0 = arith.constant 0 : i32
    %c0_i32_1 = arith.constant 0 : i32
    return %c0_i32, %c0_i32_0 : i32, i32
  }
  func.func @transform_5(%arg0: i32, %arg1: i32) -> (i32, i32) {
    %c0_i32 = arith.constant 0 : i32
    %c0_i32_0 = arith.constant 0 : i32
    %c0_i32_1 = arith.constant 0 : i32
    return %c0_i32, %c0_i32_0 : i32, i32
  }
  func.func @transform_6(%arg0: i32, %arg1: i32) -> (i32, i32, i32, i32) {
    %c0_i32 = arith.constant 0 : i32
    %c0_i32_0 = arith.constant 0 : i32
    %c0_i32_1 = arith.constant 0 : i32
    return %arg0, %arg1, %c0_i32, %c0_i32_0 : i32, i32, i32, i32
  }
}

</mosaic_0001>

<llo_original>
// kernel: gcn_encoder_forward.5
$region0: #{gcn_encoder_forward.5}
  #allocation0 [shape = 'u32[]', space=smem, size = 0x4, offset = 0x4, fixed_abs, tag = 'smem constant byte address 0x4 - core index']
  #allocation1 [shape = 'u32[144,128]{1,0:T(1,128)}', space=vmem, size = 0x12000, scoped, tag = 'internal scratch']
  %s0 = inlined_call_operand.vmem [shape: f32[32,128], index: 0, kind: input, shape index: {}]
  %s1 = inlined_call_operand.vmem [shape: f32[128,384], index: 1, kind: input, shape index: {}]
  %s2 = inlined_call_operand.vmem [shape: f32[1,384], index: 2, kind: input, shape index: {}]
  %s3 = inlined_call_operand.vmem [shape: f32[32,384], index: 3, kind: output, shape index: {}]
  %s4 = sld [smem:[#allocation0]]
  $region22: #{gcn_encoder_forward.5} parent=0
    _
  %s6 = ssub.s32 1, %s4
  %s7 = scalar_select 0, %s6, %s4
  // Predicated region
  $region2: #{gcn_encoder_forward.5} parent=0 // pred_check
    _
  $region3: #{gcn_encoder_forward.5} parent=0 // pred_check_branch
    %9 = sbr.rel (0) target = $region5
  $region4: #{gcn_encoder_forward.5} parent=0 // pred_region
    _
  $region5: #{gcn_encoder_forward.5} parent=0 // pred_fallthru
    _
  // Predicated region
  $region6: #{gcn_encoder_forward.5} parent=0 // pred_check
    _
  $region7: #{gcn_encoder_forward.5} parent=0 // pred_check_branch
    %11 = sbr.rel (0) target = $region9
  $region8: #{gcn_encoder_forward.5} parent=0 // pred_region
    _
  $region9: #{gcn_encoder_forward.5} parent=0 // pred_fallthru
    _
  // Predicated region
  $region10: #{gcn_encoder_forward.5} parent=0 // pred_check
    _
  $region11: #{gcn_encoder_forward.5} parent=0 // pred_check_branch
    %13 = sbr.rel (0) target = $region13
  $region12: #{gcn_encoder_forward.5} parent=0 // pred_region
    _
  $region13: #{gcn_encoder_forward.5} parent=0 // pred_fallthru
    _
  %v14 = vld [vmem:[%s0] sm:$0xff]
  %v15 = vld [vmem:[%s0 + $0x8] sm:$0xff]
  %v16 = vld [vmem:[%s0 + $0x10] sm:$0xff]
  %v17 = vld [vmem:[%s0 + $0x18] sm:$0xff]
  %v18 = vld [vmem:[%s1] sm:$0xff]
  %v19 = vld [vmem:[%s1 + $0x8] sm:$0xff]
  %v20 = vld [vmem:[%s1 + $0x10] sm:$0xff]
  %v21 = vld [vmem:[%s1 + $0x18] sm:$0xff]
  %v22 = vld [vmem:[%s1 + $0x20] sm:$0xff]
  %v23 = vld [vmem:[%s1 + $0x28] sm:$0xff]
  %v24 = vld [vmem:[%s1 + $0x30] sm:$0xff]
  %v25 = vld [vmem:[%s1 + $0x38] sm:$0xff]
  %v26 = vld [vmem:[%s1 + $0x40] sm:$0xff]
  %v27 = vld [vmem:[%s1 + $0x48] sm:$0xff]
  %v28 = vld [vmem:[%s1 + $0x50] sm:$0xff]
  %v29 = vld [vmem:[%s1 + $0x58] sm:$0xff]
  %v30 = vld [vmem:[%s1 + $0x60] sm:$0xff]
  %v31 = vld [vmem:[%s1 + $0x68] sm:$0xff]
  %v32 = vld [vmem:[%s1 + $0x70] sm:$0xff]
  %v33 = vld [vmem:[%s1 + $0x78] sm:$0xff]
  %v34 = vld [vmem:[%s1 + $0x80] sm:$0xff]
  %v35 = vld [vmem:[%s1 + $0x88] sm:$0xff]
  %v36 = vld [vmem:[%s1 + $0x90] sm:$0xff]
  %v37 = vld [vmem:[%s1 + $0x98] sm:$0xff]
  %v38 = vld [vmem:[%s1 + $0xa0] sm:$0xff]
  %v39 = vld [vmem:[%s1 + $0xa8] sm:$0xff]
  %v40 = vld [vmem:[%s1 + $0xb0] sm:$0xff]
  %v41 = vld [vmem:[%s1 + $0xb8] sm:$0xff]
  %v42 = vld [vmem:[%s1 + $0xc0] sm:$0xff]
  %v43 = vld [vmem:[%s1 + $0xc8] sm:$0xff]
  %v44 = vld [vmem:[%s1 + $0xd0] sm:$0xff]
  %v45 = vld [vmem:[%s1 + $0xd8] sm:$0xff]
  %v46 = vld [vmem:[%s1 + $0xe0] sm:$0xff]
  %v47 = vld [vmem:[%s1 + $0xe8] sm:$0xff]
  %v48 = vld [vmem:[%s1 + $0xf0] sm:$0xff]
  %v49 = vld [vmem:[%s1 + $0xf8] sm:$0xff]
  %v50 = vld [vmem:[%s1 + $0x100] sm:$0xff]
  %v51 = vld [vmem:[%s1 + $0x108] sm:$0xff]
  %v52 = vld [vmem:[%s1 + $0x110] sm:$0xff]
  %v53 = vld [vmem:[%s1 + $0x118] sm:$0xff]
  %v54 = vld [vmem:[%s1 + $0x120] sm:$0xff]
  %v55 = vld [vmem:[%s1 + $0x128] sm:$0xff]
  %v56 = vld [vmem:[%s1 + $0x130] sm:$0xff]
  %v57 = vld [vmem:[%s1 + $0x138] sm:$0xff]
  %v58 = vld [vmem:[%s1 + $0x140] sm:$0xff]
  %v59 = vld [vmem:[%s1 + $0x148] sm:$0xff]
  %v60 = vld [vmem:[%s1 + $0x150] sm:$0xff]
  %v61 = vld [vmem:[%s1 + $0x158] sm:$0xff]
  %v62 = vld [vmem:[%s1 + $0x160] sm:$0xff]
  %v63 = vld [vmem:[%s1 + $0x168] sm:$0xff]
  %v64 = vld [vmem:[%s1 + $0x170] sm:$0xff]
  %v65 = vld [vmem:[%s1 + $0x178] sm:$0xff]
  %v66 = vld [vmem:[%s2] sm:$0x7]
  %v68 = vlaneseq
  %v69 = vshrl.u32 %v68, 7
  %v70 = vsub.s32 0, %v69
  %v71 = vrot.slane %v66, %v70
  %v72 = vlaneseq
  %v73 = vshrl.u32 %v72, 7
  %v74 = vsub.s32 1, %v73
  %v75 = vrot.slane %v66, %v74
  %v76 = vlaneseq
  %v77 = vshrl.u32 %v76, 7
  %v78 = vsub.s32 2, %v77
  %v79 = vrot.slane %v66, %v78
  %83 = vmatprep.subr.mxu0 %v64
  %84 = vmatpush1.msra.mxu0 %v63
  %85 = vmatprep.subr.mxu0 %v61
  %86 = vmatpush1.msra.mxu0 %v60
  %87 = vmatprep.subr.mxu0 %v58
  %88 = vmatpush1.msra.mxu0 %v57
  %89 = vmatprep.subr.mxu0 %v55
  %90 = vmatpush1.msra.mxu0 %v54
  %91 = vmatprep.subr.mxu0 %v52
  %92 = vmatpush1.msra.mxu0 %v51
  %93 = vmatprep.subr.mxu0 %v49
  %94 = vmatpush1.msra.mxu0 %v48
  %95 = vmatprep.subr.mxu0 %v46
  %96 = vmatpush1.msra.mxu0 %v45
  %97 = vmatprep.subr.mxu0 %v43
  %98 = vmatpush1.msra.mxu0 %v42
  %99 = vmatprep.subr.mxu0 %v40
  %100 = vmatpush1.msra.mxu0 %v39
  %101 = vmatprep.subr.mxu0 %v37
  %102 = vmatpush1.msra.mxu0 %v36
  %103 = vmatprep.subr.mxu0 %v34
  %104 = vmatpush1.msra.mxu0 %v33
  %105 = vmatprep.subr.mxu0 %v31
  %106 = vmatpush1.msra.mxu0 %v30
  %107 = vmatprep.subr.mxu0 %v28
  %108 = vmatpush1.msra.mxu0 %v27
  %109 = vmatprep.subr.mxu0 %v25
  %110 = vmatpush1.msra.mxu0 %v24
  %111 = vmatprep.subr.mxu0 %v22
  %112 = vmatpush1.msra.mxu0 %v21
  %113 = vmatprep.subr.mxu0 %v19
  %114 = vmatpush1.msra.mxu0 %v18
  %115 = vmatprep.subr.mxu0 0.0
  %116 = vmatpush2.msra.mxu0 0.0
  %117 = vmatprep.subr.mxu0 0.0
  %118 = vmatpush2.msra.mxu0 0.0
  %119 = vmatprep.subr.mxu0 0.0
  %120 = vmatpush2.msra.mxu0 0.0
  %121 = vmatprep.subr.mxu0 0.0
  %122 = vmatpush2.msra.mxu0 0.0
  %123 = vmatprep.subr.mxu0 0.0
  %124 = vmatpush2.msra.mxu0 0.0
  %125 = vmatprep.subr.mxu0 0.0
  %126 = vmatpush2.msra.mxu0 0.0
  %127 = vmatprep.subr.mxu0 0.0
  %128 = vmatpush2.msra.mxu0 0.0
  %129 = vmatprep.subr.mxu0 0.0
  %130 = vmatpush2.msra.mxu0 0.0
  %131 = vmatprep.subr.mxu0 0.0
  %132 = vmatpush2.msra.mxu0 0.0
  %133 = vmatprep.subr.mxu0 0.0
  %134 = vmatpush2.msra.mxu0 0.0
  %135 = vmatprep.subr.mxu0 0.0
  %136 = vmatpush2.msra.mxu0 0.0
  %137 = vmatprep.subr.mxu0 0.0
  %138 = vmatpush2.msra.mxu0 0.0
  %139 = vmatprep.subr.mxu0 0.0
  %140 = vmatpush2.msra.mxu0 0.0
  %141 = vmatprep.subr.mxu0 0.0
  %142 = vmatpush2.msra.mxu0 0.0
  %143 = vmatprep.subr.mxu0 0.0
  %144 = vmatpush2.msra.mxu0 0.0
  %145 = vmatprep.subr.mxu0 0.0
  %146 = vmatpush2.msra.mxu0 0.0
  %147 = vmatprep.mubr.f32.mxu0 0.0
  %148 = vmatmul.mubr.f32.gmra.mxu0 %v14
  %v149 = vpop.f32.mrf.mxu0
  %v150 = vadd.f32 %v71, %v149
  %v151 = vpop.f32.mrf.mxu0
  %v152 = vadd.f32 %v75, %v151
  %153 = vmatprep.mubr.f32.mxu0 0.0
  %154 = vmatmul.mubr.f32.gmra.mxu0 %v15
  %v155 = vpop.f32.mrf.mxu0
  %v156 = vadd.f32 %v71, %v155
  %v157 = vpop.f32.mrf.mxu0
  %v158 = vadd.f32 %v75, %v157
  %159 = vmatprep.mubr.f32.mxu0 0.0
  %160 = vmatmul.mubr.f32.gmra.mxu0 %v16
  %v161 = vpop.f32.mrf.mxu0
  %v162 = vadd.f32 %v71, %v161
  %v163 = vpop.f32.mrf.mxu0
  %v164 = vadd.f32 %v75, %v163
  %165 = vmatprep.mubr.f32.mxu0 0.0
  %166 = vmatmul.mubr.f32.gmra.mxu0 %v17
  %v167 = vpop.f32.mrf.mxu0
  %v168 = vadd.f32 %v71, %v167
  %v169 = vpop.f32.mrf.mxu0
  %v170 = vadd.f32 %v75, %v169
  %171 = vdwg.mxu0
  %172 = vmatprep.subr.mxu0 0.0
  %173 = vmatpush1.msra.mxu0 %v65
  %174 = vmatprep.subr.mxu0 0.0
  %175 = vmatpush1.msra.mxu0 %v62
  %176 = vmatprep.subr.mxu0 0.0
  %177 = vmatpush1.msra.mxu0 %v59
  %178 = vmatprep.subr.mxu0 0.0
  %179 = vmatpush1.msra.mxu0 %v56
  %180 = vmatprep.subr.mxu0 0.0
  %181 = vmatpush1.msra.mxu0 %v53
  %182 = vmatprep.subr.mxu0 0.0
  %183 = vmatpush1.msra.mxu0 %v50
  %184 = vmatprep.subr.mxu0 0.0
  %185 = vmatpush1.msra.mxu0 %v47
  %186 = vmatprep.subr.mxu0 0.0
  %187 = vmatpush1.msra.mxu0 %v44
  %188 = vmatprep.subr.mxu0 0.0
  %189 = vmatpush1.msra.mxu0 %v41
  %190 = vmatprep.subr.mxu0 0.0
  %191 = vmatpush1.msra.mxu0 %v38
  %192 = vmatprep.subr.mxu0 0.0
  %193 = vmatpush1.msra.mxu0 %v35
  %194 = vmatprep.subr.mxu0 0.0
  %195 = vmatpush1.msra.mxu0 %v32
  %196 = vmatprep.subr.mxu0 0.0
  %197 = vmatpush1.msra.mxu0 %v29
  %198 = vmatprep.subr.mxu0 0.0
  %199 = vmatpush1.msra.mxu0 %v26
  %200 = vmatprep.subr.mxu0 0.0
  %201 = vmatpush1.msra.mxu0 %v23
  %202 = vmatprep.subr.mxu0 0.0
  %203 = vmatpush1.msra.mxu0 %v20
  %204 = vmatprep.subr.mxu0 0.0
  %205 = vmatpush2.msra.mxu0 0.0
  %206 = vmatprep.subr.mxu0 0.0
  %207 = vmatpush2.msra.mxu0 0.0
  %208 = vmatprep.subr.mxu0 0.0
  %209 = vmatpush2.msra.mxu0 0.0
  %210 = vmatprep.subr.mxu0 0.0
  %211 = vmatpush2.msra.mxu0 0.0
  %212 = vmatprep.subr.mxu0 0.0
  %213 = vmatpush2.msra.mxu0 0.0
  %214 = vmatprep.subr.mxu0 0.0
  %215 = vmatpush2.msra.mxu0 0.0
  %216 = vmatprep.subr.mxu0 0.0
  %217 = vmatpush2.msra.mxu0 0.0
  %218 = vmatprep.subr.mxu0 0.0
  %219 = vmatpush2.msra.mxu0 0.0
  %220 = vmatprep.subr.mxu0 0.0
  %221 = vmatpush2.msra.mxu0 0.0
  %222 = vmatprep.subr.mxu0 0.0
  %223 = vmatpush2.msra.mxu0 0.0
  %224 = vmatprep.subr.mxu0 0.0
  %225 = vmatpush2.msra.mxu0 0.0
  %226 = vmatprep.subr.mxu0 0.0
  %227 = vmatpush2.msra.mxu0 0.0
  %228 = vmatprep.subr.mxu0 0.0
  %229 = vmatpush2.msra.mxu0 0.0
  %230 = vmatprep.subr.mxu0 0.0
  %231 = vmatpush2.msra.mxu0 0.0
  %232 = vmatprep.subr.mxu0 0.0
  %233 = vmatpush2.msra.mxu0 0.0
  %234 = vmatprep.subr.mxu0 0.0
  %235 = vmatpush2.msra.mxu0 0.0
  %236 = vmatprep.mubr.f32.mxu0 0.0
  %237 = vmatmul.mubr.f32.gmra.mxu0 %v14
  %v238 = vpop.f32.mrf.mxu0
  %v239 = vadd.f32 %v79, %v238
  %v240 = vpop.f32.mrf.mxu0
  %241 = vmatprep.mubr.f32.mxu0 0.0
  %242 = vmatmul.mubr.f32.gmra.mxu0 %v15
  %v243 = vpop.f32.mrf.mxu0
  %v244 = vadd.f32 %v79, %v243
  %v245 = vpop.f32.mrf.mxu0
  %246 = vmatprep.mubr.f32.mxu0 0.0
  %247 = vmatmul.mubr.f32.gmra.mxu0 %v16
  %v248 = vpop.f32.mrf.mxu0
  %v249 = vadd.f32 %v79, %v248
  %v250 = vpop.f32.mrf.mxu0
  %251 = vmatprep.mubr.f32.mxu0 0.0
  %252 = vmatmul.mubr.f32.gmra.mxu0 %v17
  %v253 = vpop.f32.mrf.mxu0
  %v254 = vadd.f32 %v79, %v253
  %v255 = vpop.f32.mrf.mxu0
  %256 = vdwg.mxu0
  %257 = vst [vmem:[%s3] sm:$0xff] %v150
  %258 = vst [vmem:[%s3 + $0x8] sm:$0xff] %v152
  %259 = vst [vmem:[%s3 + $0x10] sm:$0xff] %v239
  %260 = vst [vmem:[%s3 + $0x18] sm:$0xff] %v156
  %261 = vst [vmem:[%s3 + $0x20] sm:$0xff] %v158
  %262 = vst [vmem:[%s3 + $0x28] sm:$0xff] %v244
  %263 = vst [vmem:[%s3 + $0x30] sm:$0xff] %v162
  %264 = vst [vmem:[%s3 + $0x38] sm:$0xff] %v164
  %265 = vst [vmem:[%s3 + $0x40] sm:$0xff] %v249
  %266 = vst [vmem:[%s3 + $0x48] sm:$0xff] %v168
  %267 = vst [vmem:[%s3 + $0x50] sm:$0xff] %v170
  %268 = vst [vmem:[%s3 + $0x58] sm:$0xff] %v254
  // Predicated region
  $region14: #{gcn_encoder_forward.5} parent=0 // pred_check
    _
  $region15: #{gcn_encoder_forward.5} parent=0 // pred_check_branch
    %270 = sbr.rel (0) target = $region17
  $region16: #{gcn_encoder_forward.5} parent=0 // pred_region
    _
  $region17: #{gcn_encoder_forward.5} parent=0 // pred_fallthru
    _
  // Predicated region
  $region18: #{gcn_encoder_forward.5} parent=0 // pred_check
    _
  $region19: #{gcn_encoder_forward.5} parent=0 // pred_check_branch
    %272 = sbr.rel (0) target = $region21
  $region20: #{gcn_encoder_forward.5} parent=0 // pred_region
    _
  $region21: #{gcn_encoder_forward.5} parent=0 // pred_fallthru
    _

// kernel: gcn_encoder_forward.6
$region0: #{gcn_encoder_forward.6}
  #allocation0 [shape = 'u32[]', space=smem, size = 0x4, offset = 0x4, fixed_abs, tag = 'smem constant byte address 0x4 - core index']
  #allocation1 [shape = 'u32[144,128]{1,0:T(1,128)}', space=vmem, size = 0x12000, scoped, tag = 'internal scratch']
  %s0 = inlined_call_operand.vmem [shape: f32[2,16,16,128], index: 0, kind: input, shape index: {}]
  %s1 = inlined_call_operand.vmem [shape: f32[2,16,128], index: 1, kind: input, shape index: {}]
  %s2 = inlined_call_operand.vmem [shape: f32[128,128], index: 2, kind: input, shape index: {}]
  %s3 = inlined_call_operand.vmem [shape: f32[1,128], index: 3, kind: input, shape index: {}]
  %s4 = inlined_call_operand.vmem [shape: f32[2,16,128], index: 4, kind: output, shape index: {0}]
  %s5 = inlined_call_operand.vmem [shape: f32[2,16,128], index: 5, kind: output, shape index: {1}]
  %s6 = inlined_call_operand.vmem [shape: f32[2,16,128], index: 6, kind: output, shape index: {2}]
  %7 = xla_tuple %s4, %s5, %s6
  %s8 = sld [smem:[#allocation0]]
  $region65: #{gcn_encoder_forward.6} parent=0
    _
  %s10 = ssub.s32 1, %s8
  %s11 = scalar_select 0, %s10, %s8
  loop: start=0, step=1, limit=6
  $region2: #{gcn_encoder_forward.6} parent=0 // loop_pre_header
    _
  $region3: #{gcn_encoder_forward.6} parent=0 // loop_header
    %s13 = sphi 0, %s17
    %p14 = scmp.ge.s32.totalorder %s13, 6
    %s20 = sphi 0, %s32
    %s21 = sphi 0, %s28
    %s22 = sphi 0, %s20
    %s23 = sphi 0, %s21
    %s24 = sphi 0, %s22
    %s25 = sphi 0, %s23
    %s37 = sphi 0, %s39
    %s40 = sphi 0, %s37
    %s41 = sphi 0, %s40
    %s57 = sphi 0, %s41
    %s63 = sphi 0, %s65
    %s66 = sphi 0, %s63
    %s67 = sphi 0, %s66
    %s83 = sphi 0, %s67
    %s87 = sphi 0, %s87
    %s89 = sphi 0, %s87
    %s90 = sphi 0, %s89
    %s104 = sphi 0, %s90
    %s108 = sphi 0, %s108
    %s110 = sphi 0, %s108
    %s111 = sphi 0, %s110
    %s125 = sphi 0, %s111
    %s133 = sphi 0, %s135
    %s136 = sphi 0, %s133
    %s137 = sphi 0, %s136
    %s153 = sphi 0, %s137
    %s161 = sphi 0, %s163
    %s164 = sphi 0, %s161
    %s165 = sphi 0, %s164
    %s181 = sphi 0, %s165
    %s189 = sphi 0, %s191
    %s192 = sphi 0, %s189
    %s193 = sphi 0, %s192
    %s209 = sphi 0, %s193
  $region4: #{gcn_encoder_forward.6} parent=0 // loop_header_branch
    %16 = sbr.rel (%p14) target = $region8
  $region5: #{gcn_encoder_forward.6} parent=0 // loop_body
    %s18 = ssub.s32 %s13, 1
    %s19 = ssub.s32 %s13, 2
    %s26 = sadd.s32 1, %s21
    %p27 = scmp.ge.s32.totalorder %s26, 2
    %s28 = scalar_select %p27, 0, %s26
    %s29 = sadd.s32 1, %s20
    %s30 = scalar_select %p27, %s29, %s20
    %p31 = scmp.ge.s32.totalorder %s30, 2
    %s32 = scalar_select %p31, 0, %s30
    %s33 = ssub.s32 %s20, %s32
    %s34 = ssub.s32 %s21, %s28
    %s35 = sor.u32 %s33, %s34
    %p36 = scmp.eq.s32.totalorder %s35, 0
    %s38 = sadd.s32 %s37, 1
    %s39 = scalar_select %p36, %s37, %s38
    %p42 = pneg %p36
    %p43 = scmp.eq.s32.totalorder %s13, 3
    %p44 = por %p42, %p43
    %p45 = scmp.ne.s32.totalorder %s37, %s40
    %p46 = scmp.eq.s32.totalorder %s13, 0
    %p47 = por %p45, %p46
    %p48 = scmp.ne.s32.totalorder %s37, %s40
    %p49 = scmp.eq.s32.totalorder %s18, 3
    %p50 = por %p48, %p49
    %p51 = scmp.ne.s32.totalorder %s40, %s41
    %p52 = scmp.eq.s32.totalorder %s18, 0
    %p53 = por %p51, %p52
    %p54 = scmp.ne.s32.totalorder %s40, %s41
    %p55 = scmp.eq.s32.totalorder %s19, 3
    %p56 = por %p54, %p55
    %p58 = scmp.ne.s32.totalorder %s41, %s57
    %p59 = scmp.eq.s32.totalorder %s19, 0
    %p60 = por %p58, %p59
    %s61 = ssub.s32 %s20, %s32
    %p62 = scmp.eq.s32.totalorder %s61, 0
    %s64 = sadd.s32 %s63, 1
    %s65 = scalar_select %p62, %s63, %s64
    %p68 = pneg %p62
    %p69 = scmp.eq.s32.totalorder %s13, 3
    %p70 = por %p68, %p69
    %p71 = scmp.ne.s32.totalorder %s63, %s66
    %p72 = scmp.eq.s32.totalorder %s13, 0
    %p73 = por %p71, %p72
    %p74 = scmp.ne.s32.totalorder %s63, %s66
    %p75 = scmp.eq.s32.totalorder %s18, 3
    %p76 = por %p74, %p75
    %p77 = scmp.ne.s32.totalorder %s66, %s67
    %p78 = scmp.eq.s32.totalorder %s18, 0
    %p79 = por %p77, %p78
    %p80 = scmp.ne.s32.totalorder %s66, %s67
    %p81 = scmp.eq.s32.totalorder %s19, 3
    %p82 = por %p80, %p81
    %p84 = scmp.ne.s32.totalorder %s67, %s83
    %p85 = scmp.eq.s32.totalorder %s19, 0
    %p86 = por %p84, %p85
    %s88 = sadd.s32 %s87, 1
    %p91 = scmp.eq.s32.totalorder %s13, 3
    %p92 = scmp.ne.s32.totalorder %s87, %s89
    %p93 = scmp.eq.s32.totalorder %s13, 0
    %p94 = por %p92, %p93
    %p95 = scmp.ne.s32.totalorder %s87, %s89
    %p96 = scmp.eq.s32.totalorder %s18, 3
    %p97 = por %p95, %p96
    %p98 = scmp.ne.s32.totalorder %s89, %s90
    %p99 = scmp.eq.s32.totalorder %s18, 0
    %p100 = por %p98, %p99
    %p101 = scmp.ne.s32.totalorder %s89, %s90
    %p102 = scmp.eq.s32.totalorder %s19, 3
    %p103 = por %p101, %p102
    %p105 = scmp.ne.s32.totalorder %s90, %s104
    %p106 = scmp.eq.s32.totalorder %s19, 0
    %p107 = por %p105, %p106
    %s109 = sadd.s32 %s108, 1
    %p112 = scmp.eq.s32.totalorder %s13, 3
    %p113 = scmp.ne.s32.totalorder %s108, %s110
    %p114 = scmp.eq.s32.totalorder %s13, 0
    %p115 = por %p113, %p114
    %p116 = scmp.ne.s32.totalorder %s108, %s110
    %p117 = scmp.eq.s32.totalorder %s18, 3
    %p118 = por %p116, %p117
    %p119 = scmp.ne.s32.totalorder %s110, %s111
    %p120 = scmp.eq.s32.totalorder %s18, 0
    %p121 = por %p119, %p120
    %p122 = scmp.ne.s32.totalorder %s110, %s111
    %p123 = scmp.eq.s32.totalorder %s19, 3
    %p124 = por %p122, %p123
    %p126 = scmp.ne.s32.totalorder %s111, %s125
    %p127 = scmp.eq.s32.totalorder %s19, 0
    %p128 = por %p126, %p127
    %s129 = ssub.s32 %s20, %s32
    %s130 = ssub.s32 %s21, %s28
    %s131 = sor.u32 %s129, %s130
    %p132 = scmp.eq.s32.totalorder %s131, 0
    %s134 = sadd.s32 %s133, 1
    %s135 = scalar_select %p132, %s133, %s134
    %p138 = pneg %p132
    %p139 = scmp.eq.s32.totalorder %s13, 3
    %p140 = por %p138, %p139
    %p141 = scmp.ne.s32.totalorder %s133, %s136
    %p142 = scmp.eq.s32.totalorder %s13, 0
    %p143 = por %p141, %p142
    %p144 = scmp.ne.s32.totalorder %s133, %s136
    %p145 = scmp.eq.s32.totalorder %s18, 3
    %p146 = por %p144, %p145
    %p147 = scmp.ne.s32.totalorder %s136, %s137
    %p148 = scmp.eq.s32.totalorder %s18, 0
    %p149 = por %p147, %p148
    %p150 = scmp.ne.s32.totalorder %s136, %s137
    %p151 = scmp.eq.s32.totalorder %s19, 3
    %p152 = por %p150, %p151
    %p154 = scmp.ne.s32.totalorder %s137, %s153
    %p155 = scmp.eq.s32.totalorder %s19, 0
    %p156 = por %p154, %p155
    %s157 = ssub.s32 %s20, %s32
    %s158 = ssub.s32 %s21, %s28
    %s159 = sor.u32 %s157, %s158
    %p160 = scmp.eq.s32.totalorder %s159, 0
    %s162 = sadd.s32 %s161, 1
    %s163 = scalar_select %p160, %s161, %s162
    %p166 = pneg %p160
    %p167 = scmp.eq.s32.totalorder %s13, 3
    %p168 = por %p166, %p167
    %p169 = scmp.ne.s32.totalorder %s161, %s164
    %p170 = scmp.eq.s32.totalorder %s13, 0
    %p171 = por %p169, %p170
    %p172 = scmp.ne.s32.totalorder %s161, %s164
    %p173 = scmp.eq.s32.totalorder %s18, 3
    %p174 = por %p172, %p173
    %p175 = scmp.ne.s32.totalorder %s164, %s165
    %p176 = scmp.eq.s32.totalorder %s18, 0
    %p177 = por %p175, %p176
    %p178 = scmp.ne.s32.totalorder %s164, %s165
    %p179 = scmp.eq.s32.totalorder %s19, 3
    %p180 = por %p178, %p179
    %p182 = scmp.ne.s32.totalorder %s165, %s181
    %p183 = scmp.eq.s32.totalorder %s19, 0
    %p184 = por %p182, %p183
    %s185 = ssub.s32 %s20, %s32
    %s186 = ssub.s32 %s21, %s28
    %s187 = sor.u32 %s185, %s186
    %p188 = scmp.eq.s32.totalorder %s187, 0
    %s190 = sadd.s32 %s189, 1
    %s191 = scalar_select %p188, %s189, %s190
    %p194 = pneg %p188
    %p195 = scmp.eq.s32.totalorder %s13, 3
    %p196 = por %p194, %p195
    %p197 = scmp.ne.s32.totalorder %s189, %s192
    %p198 = scmp.eq.s32.totalorder %s13, 0
    %p199 = por %p197, %p198
    %p200 = scmp.ne.s32.totalorder %s189, %s192
    %p201 = scmp.eq.s32.totalorder %s18, 3
    %p202 = por %p200, %p201
    %p203 = scmp.ne.s32.totalorder %s192, %s193
    %p204 = scmp.eq.s32.totalorder %s18, 0
    %p205 = por %p203, %p204
    %p206 = scmp.ne.s32.totalorder %s192, %s193
    %p207 = scmp.eq.s32.totalorder %s19, 3
    %p208 = por %p206, %p207
    %p210 = scmp.ne.s32.totalorder %s193, %s209
    %p211 = scmp.eq.s32.totalorder %s19, 0
    %p212 = por %p210, %p211
    %p213 = scmp.le.s32.totalorder 1, %s13
    %p214 = scmp.lt.s32.totalorder %s13, 5
    %p215 = pnand %p213, %p214
    %p216 = pneg %p215
    // Predicated region
    $region9: #{gcn_encoder_forward.6} parent=5 // pred_check
      _
    $region10: #{gcn_encoder_forward.6} parent=5 // pred_check_branch
      %218 = sbr.rel (%p215) target = $region12
    $region11: #{gcn_encoder_forward.6} parent=5 // pred_region
      %s219 = ssub.s32 %s13, 1
      // Predicated region
      $region13: #{gcn_encoder_forward.6} parent=11 // pred_check
        %p220 = pneg %p100
      $region14: #{gcn_encoder_forward.6} parent=11 // pred_check_branch
        %222 = sbr.rel (%p220) target = $region16
      $region15: #{gcn_encoder_forward.6} parent=11 // pred_region
        _
      $region16: #{gcn_encoder_forward.6} parent=11 // pred_fallthru
        _
      // Predicated region
      $region17: #{gcn_encoder_forward.6} parent=11 // pred_check
        %p223 = pneg %p121
      $region18: #{gcn_encoder_forward.6} parent=11 // pred_check_branch
        %225 = sbr.rel (%p223) target = $region20
      $region19: #{gcn_encoder_forward.6} parent=11 // pred_region
        _
      $region20: #{gcn_encoder_forward.6} parent=11 // pred_fallthru
        _
    $region12: #{gcn_encoder_forward.6} parent=5 // pred_fallthru
      _
    %p226 = scmp.lt.s32.totalorder %s13, 4
    // Predicated region
    $region21: #{gcn_encoder_forward.6} parent=5 // pred_check
      %p227 = pneg %p226
    $region22: #{gcn_encoder_forward.6} parent=5 // pred_check_branch
      %229 = sbr.rel (%p227) target = $region24
    $region23: #{gcn_encoder_forward.6} parent=5 // pred_region
      // Predicated region
      $region25: #{gcn_encoder_forward.6} parent=23 // pred_check
        %p230 = pneg %p47
      $region26: #{gcn_encoder_forward.6} parent=23 // pred_check_branch
        %232 = sbr.rel (%p230) target = $region28
      $region27: #{gcn_encoder_forward.6} parent=23 // pred_region
        %s233 = smul.u32 8, %s21
        %p234 = scmp.lt.s32.totalorder %s20, 1
        %s235 = scalar_select %p234, %s20, 1
        %p236 = scmp.lt.s32.totalorder %s233, 15
        %s237 = scalar_select %p236, %s233, 15
        %s238 = smul.addr %s237, 2
        %s239 = smul.addr %s235, 32
        %s240 = sadd.s32 %s238, %s239
        %s241 = smul.addr %s240, 8
        %s242 = scalar_lea.vmem %s0, %s241
        %s243 = smul.u32 8, %s21
      $region28: #{gcn_encoder_forward.6} parent=23 // pred_fallthru
        _
      // Predicated region
      $region29: #{gcn_encoder_forward.6} parent=23 // pred_check
        %p244 = pneg %p73
      $region30: #{gcn_encoder_forward.6} parent=23 // pred_check_branch
        %246 = sbr.rel (%p244) target = $region32
      $region31: #{gcn_encoder_forward.6} parent=23 // pred_region
        %p247 = scmp.lt.s32.totalorder %s20, 1
        %s248 = scalar_select %p247, %s20, 1
        %s249 = smul.addr %s248, 2
        %s250 = smul.addr %s249, 8
        %s251 = scalar_lea.vmem %s1, %s250
      $region32: #{gcn_encoder_forward.6} parent=23 // pred_fallthru
        _
    $region24: #{gcn_encoder_forward.6} parent=5 // pred_fallthru
      _
    %p252 = scmp.le.s32.totalorder 1, %s13
    %p253 = scmp.lt.s32.totalorder %s13, 5
    %p254 = pnand %p252, %p253
    %p255 = pneg %p254
    // Predicated region
    $region33: #{gcn_encoder_forward.6} parent=5 // pred_check
      _
    $region34: #{gcn_encoder_forward.6} parent=5 // pred_check_branch
      %257 = sbr.rel (%p254) target = $region36
    $region35: #{gcn_encoder_forward.6} parent=5 // pred_region
      %s258 = ssub.s32 %s13, 1
      %s259 = smul.u32 8, %s23
      %p260 = scmp.lt.s32.totalorder %s22, 1
      %s261 = scalar_select %p260, %s22, 1
      %p262 = scmp.lt.s32.totalorder %s259, 15
      %s263 = scalar_select %p262, %s259, 15
      %s264 = smul.addr %s263, 2
      %s265 = smul.addr %s261, 32
      %s266 = sadd.s32 %s264, %s265
      %s267 = smul.addr %s266, 8
      %s268 = scalar_lea.vmem %s0, %s267
      %p269 = pneg %p53
      %p270 = pneg %p50
      %p271 = scmp.lt.s32.totalorder %s22, 1
      %s272 = scalar_select %p271, %s22, 1
      %s273 = smul.addr %s272, 2
      %s274 = smul.addr %s273, 8
      %s275 = scalar_lea.vmem %s1, %s274
      %p276 = pneg %p79
      %p277 = pneg %p76
      %p278 = pneg %p100
      %p279 = pneg %p97
      %p280 = pneg %p121
      %p281 = pneg %p118
      %p282 = pneg %p149
      %p283 = pneg %p146
      %p284 = scmp.lt.s32.totalorder %s22, 1
      %s285 = scalar_select %p284, %s22, 1
      %p286 = scmp.lt.s32.totalorder %s23, 1
      %s287 = scalar_select %p286, %s23, 1
      %s288 = smul.addr %s285, 2
      %s289 = sadd.s32 %s287, %s288
      %s290 = smul.addr %s289, 8
      %s291 = scalar_lea.vmem %s4, %s290
      %p292 = pneg %p177
      %p293 = pneg %p174
      %p294 = scmp.lt.s32.totalorder %s22, 1
      %s295 = scalar_select %p294, %s22, 1
      %p296 = scmp.lt.s32.totalorder %s23, 1
      %s297 = scalar_select %p296, %s23, 1
      %s298 = smul.addr %s295, 2
      %s299 = sadd.s32 %s297, %s298
      %s300 = smul.addr %s299, 8
      %s301 = scalar_lea.vmem %s5, %s300
      %p302 = pneg %p205
      %p303 = pneg %p202
      %p304 = scmp.lt.s32.totalorder %s22, 1
      %s305 = scalar_select %p304, %s22, 1
      %p306 = scmp.lt.s32.totalorder %s23, 1
      %s307 = scalar_select %p306, %s23, 1
      %s308 = smul.addr %s305, 2
      %s309 = sadd.s32 %s307, %s308
      %s310 = smul.addr %s309, 8
      %s311 = scalar_lea.vmem %s6, %s310
      %s312 = smul.u32 8, %s23
      %p313 = scmp.lt.s32.totalorder %s22, 1
      %s314 = scalar_select %p313, %s22, 1
      %p315 = scmp.lt.s32.totalorder %s312, 15
      %s316 = scalar_select %p315, %s312, 15
      %s317 = smul.addr %s316, 2
      %s318 = smul.addr %s314, 32
      %s319 = sadd.s32 %s317, %s318
      %s320 = smul.addr %s319, 8
      %s321 = scalar_lea.vmem %s0, %s320
      %s322 = smul.u32 8, %s23
      %p323 = scmp.lt.s32.totalorder %s22, 1
      %s324 = scalar_select %p323, %s22, 1
      %s325 = smul.addr %s324, 2
      %s326 = smul.addr %s325, 8
      %s327 = scalar_lea.vmem %s1, %s326
      %p328 = scmp.lt.s32.totalorder %s22, 1
      %s329 = scalar_select %p328, %s22, 1
      %p330 = scmp.lt.s32.totalorder %s23, 1
      %s331 = scalar_select %p330, %s23, 1
      %s332 = smul.addr %s329, 2
      %s333 = sadd.s32 %s331, %s332
      %s334 = smul.addr %s333, 8
      %s335 = scalar_lea.vmem %s4, %s334
      %p336 = scmp.lt.s32.totalorder %s22, 1
      %s337 = scalar_select %p336, %s22, 1
      %p338 = scmp.lt.s32.totalorder %s23, 1
      %s339 = scalar_select %p338, %s23, 1
      %s340 = smul.addr %s337, 2
      %s341 = sadd.s32 %s339, %s340
      %s342 = smul.addr %s341, 8
      %s343 = scalar_lea.vmem %s5, %s342
      %p344 = scmp.lt.s32.totalorder %s22, 1
      %s345 = scalar_select %p344, %s22, 1
      %p346 = scmp.lt.s32.totalorder %s23, 1
      %s347 = scalar_select %p346, %s23, 1
      %s348 = smul.addr %s345, 2
      %s349 = sadd.s32 %s347, %s348
      %s350 = smul.addr %s349, 8
      %s351 = scalar_lea.vmem %s6, %s350
      %s352 = smul.u32 %s23, 8
      %v353 = vld [vmem:[%s321] sm:$0xff]
      %v354 = vld [vmem:[%s321 + $0x8] sm:$0xff]
      %v355 = vld [vmem:[%s321 + $0x10] sm:$0xff]
      %v356 = vld [vmem:[%s321 + $0x18] sm:$0xff]
      %v357 = vld [vmem:[%s321 + $0x20] sm:$0xff]
      %v358 = vld [vmem:[%s321 + $0x28] sm:$0xff]
      %v359 = vld [vmem:[%s321 + $0x30] sm:$0xff]
      %v360 = vld [vmem:[%s321 + $0x38] sm:$0xff]
      %v361 = vld [vmem:[%s321 + $0x40] sm:$0xff]
      %v362 = vld [vmem:[%s321 + $0x48] sm:$0xff]
      %v363 = vld [vmem:[%s321 + $0x50] sm:$0xff]
      %v364 = vld [vmem:[%s321 + $0x58] sm:$0xff]
      %v365 = vld [vmem:[%s321 + $0x60] sm:$0xff]
      %v366 = vld [vmem:[%s321 + $0x68] sm:$0xff]
      %v367 = vld [vmem:[%s321 + $0x70] sm:$0xff]
      %v368 = vld [vmem:[%s321 + $0x78] sm:$0xff]
      %v369 = vld [vmem:[%s2] sm:$0xff]
      %v370 = vld [vmem:[%s2 + $0x8] sm:$0xff]
      %v371 = vld [vmem:[%s2 + $0x10] sm:$0xff]
      %v372 = vld [vmem:[%s2 + $0x18] sm:$0xff]
      %v373 = vld [vmem:[%s2 + $0x20] sm:$0xff]
      %v374 = vld [vmem:[%s2 + $0x28] sm:$0xff]
      %v375 = vld [vmem:[%s2 + $0x30] sm:$0xff]
      %v376 = vld [vmem:[%s2 + $0x38] sm:$0xff]
      %v377 = vld [vmem:[%s2 + $0x40] sm:$0xff]
      %v378 = vld [vmem:[%s2 + $0x48] sm:$0xff]
      %v379 = vld [vmem:[%s2 + $0x50] sm:$0xff]
      %v380 = vld [vmem:[%s2 + $0x58] sm:$0xff]
      %v381 = vld [vmem:[%s2 + $0x60] sm:$0xff]
      %v382 = vld [vmem:[%s2 + $0x68] sm:$0xff]
      %v383 = vld [vmem:[%s2 + $0x70] sm:$0xff]
      %v384 = vld [vmem:[%s2 + $0x78] sm:$0xff]
      %v385 = vld [vmem:[%s3] sm:$0x1]
      %v387 = vlaneseq
      %v388 = vshrl.u32 %v387, 7
      %v389 = vsub.s32 0, %v388
      %v390 = vrot.slane %v385, %v389
      %392 = vmatprep.subr.mxu0 0.0
      %393 = vmatpush1.msra.mxu0 %v384
      %394 = vmatprep.subr.mxu0 0.0
      %395 = vmatpush1.msra.mxu0 %v383
      %396 = vmatprep.subr.mxu0 0.0
      %397 = vmatpush1.msra.mxu0 %v382
      %398 = vmatprep.subr.mxu0 0.0
      %399 = vmatpush1.msra.mxu0 %v381
      %400 = vmatprep.subr.mxu0 0.0
      %401 = vmatpush1.msra.mxu0 %v380
      %402 = vmatprep.subr.mxu0 0.0
      %403 = vmatpush1.msra.mxu0 %v379
      %404 = vmatprep.subr.mxu0 0.0
      %405 = vmatpush1.msra.mxu0 %v378
      %406 = vmatprep.subr.mxu0 0.0
      %407 = vmatpush1.msra.mxu0 %v377
      %408 = vmatprep.subr.mxu0 0.0
      %409 = vmatpush1.msra.mxu0 %v376
      %410 = vmatprep.subr.mxu0 0.0
      %411 = vmatpush1.msra.mxu0 %v375
      %412 = vmatprep.subr.mxu0 0.0
      %413 = vmatpush1.msra.mxu0 %v374
      %414 = vmatprep.subr.mxu0 0.0
      %415 = vmatpush1.msra.mxu0 %v373
      %416 = vmatprep.subr.mxu0 0.0
      %417 = vmatpush1.msra.mxu0 %v372
      %418 = vmatprep.subr.mxu0 0.0
      %419 = vmatpush1.msra.mxu0 %v371
      %420 = vmatprep.subr.mxu0 0.0
      %421 = vmatpush1.msra.mxu0 %v370
      %422 = vmatprep.subr.mxu0 0.0
      %423 = vmatpush1.msra.mxu0 %v369
      %424 = vmatprep.subr.mxu0 0.0
      %425 = vmatpush2.msra.mxu0 0.0
      %426 = vmatprep.subr.mxu0 0.0
      %427 = vmatpush2.msra.mxu0 0.0
      %428 = vmatprep.subr.mxu0 0.0
      %429 = vmatpush2.msra.mxu0 0.0
      %430 = vmatprep.subr.mxu0 0.0
      %431 = vmatpush2.msra.mxu0 0.0
      %432 = vmatprep.subr.mxu0 0.0
      %433 = vmatpush2.msra.mxu0 0.0
      %434 = vmatprep.subr.mxu0 0.0
      %435 = vmatpush2.msra.mxu0 0.0
      %436 = vmatprep.subr.mxu0 0.0
      %437 = vmatpush2.msra.mxu0 0.0
      %438 = vmatprep.subr.mxu0 0.0
      %439 = vmatpush2.msra.mxu0 0.0
      %440 = vmatprep.subr.mxu0 0.0
      %441 = vmatpush2.msra.mxu0 0.0
      %442 = vmatprep.subr.mxu0 0.0
      %443 = vmatpush2.msra.mxu0 0.0
      %444 = vmatprep.subr.mxu0 0.0
      %445 = vmatpush2.msra.mxu0 0.0
      %446 = vmatprep.subr.mxu0 0.0
      %447 = vmatpush2.msra.mxu0 0.0
      %448 = vmatprep.subr.mxu0 0.0
      %449 = vmatpush2.msra.mxu0 0.0
      %450 = vmatprep.subr.mxu0 0.0
      %451 = vmatpush2.msra.mxu0 0.0
      %452 = vmatprep.subr.mxu0 0.0
      %453 = vmatpush2.msra.mxu0 0.0
      %454 = vmatprep.subr.mxu0 0.0
      %455 = vmatpush2.msra.mxu0 0.0
      %456 = vmatprep.mubr.f32.mxu0 0.0
      %457 = vmatmul.mubr.f32.gmra.mxu0 %v353
      %v458 = vpop.f32.mrf.mxu0
      %v459 = vadd.f32 %v390, %v458
      %v460 = vpop.f32.mrf.mxu0
      %461 = vmatprep.mubr.f32.mxu0 0.0
      %462 = vmatmul.mubr.f32.gmra.mxu0 %v354
      %v463 = vpop.f32.mrf.mxu0
      %v464 = vadd.f32 %v390, %v463
      %v465 = vpop.f32.mrf.mxu0
      %466 = vmatprep.mubr.f32.mxu0 0.0
      %467 = vmatmul.mubr.f32.gmra.mxu0 %v355
      %v468 = vpop.f32.mrf.mxu0
      %v469 = vadd.f32 %v390, %v468
      %v470 = vpop.f32.mrf.mxu0
      %471 = vmatprep.mubr.f32.mxu0 0.0
      %472 = vmatmul.mubr.f32.gmra.mxu0 %v356
      %v473 = vpop.f32.mrf.mxu0
      %v474 = vadd.f32 %v390, %v473
      %v475 = vpop.f32.mrf.mxu0
      %476 = vmatprep.mubr.f32.mxu0 0.0
      %477 = vmatmul.mubr.f32.gmra.mxu0 %v357
      %v478 = vpop.f32.mrf.mxu0
      %v479 = vadd.f32 %v390, %v478
      %v480 = vpop.f32.mrf.mxu0
      %481 = vmatprep.mubr.f32.mxu0 0.0
      %482 = vmatmul.mubr.f32.gmra.mxu0 %v358
      %v483 = vpop.f32.mrf.mxu0
      %v484 = vadd.f32 %v390, %v483
      %v485 = vpop.f32.mrf.mxu0
      %486 = vmatprep.mubr.f32.mxu0 0.0
      %487 = vmatmul.mubr.f32.gmra.mxu0 %v359
      %v488 = vpop.f32.mrf.mxu0
      %v489 = vadd.f32 %v390, %v488
      %v490 = vpop.f32.mrf.mxu0
      %491 = vmatprep.mubr.f32.mxu0 0.0
      %492 = vmatmul.mubr.f32.gmra.mxu0 %v360
      %v493 = vpop.f32.mrf.mxu0
      %v494 = vadd.f32 %v390, %v493
      %v495 = vpop.f32.mrf.mxu0
      %496 = vmatprep.mubr.f32.mxu0 0.0
      %497 = vmatmul.mubr.f32.gmra.mxu0 %v361
      %v498 = vpop.f32.mrf.mxu0
      %v499 = vadd.f32 %v390, %v498
      %v500 = vpop.f32.mrf.mxu0
      %501 = vmatprep.mubr.f32.mxu0 0.0
      %502 = vmatmul.mubr.f32.gmra.mxu0 %v362
      %v503 = vpop.f32.mrf.mxu0
      %v504 = vadd.f32 %v390, %v503
      %v505 = vpop.f32.mrf.mxu0
      %506 = vmatprep.mubr.f32.mxu0 0.0
      %507 = vmatmul.mubr.f32.gmra.mxu0 %v363
      %v508 = vpop.f32.mrf.mxu0
      %v509 = vadd.f32 %v390, %v508
      %v510 = vpop.f32.mrf.mxu0
      %511 = vmatprep.mubr.f32.mxu0 0.0
      %512 = vmatmul.mubr.f32.gmra.mxu0 %v364
      %v513 = vpop.f32.mrf.mxu0
      %v514 = vadd.f32 %v390, %v513
      %v515 = vpop.f32.mrf.mxu0
      %516 = vmatprep.mubr.f32.mxu0 0.0
      %517 = vmatmul.mubr.f32.gmra.mxu0 %v365
      %v518 = vpop.f32.mrf.mxu0
      %v519 = vadd.f32 %v390, %v518
      %v520 = vpop.f32.mrf.mxu0
      %521 = vmatprep.mubr.f32.mxu0 0.0
      %522 = vmatmul.mubr.f32.gmra.mxu0 %v366
      %v523 = vpop.f32.mrf.mxu0
      %v524 = vadd.f32 %v390, %v523
      %v525 = vpop.f32.mrf.mxu0
      %526 = vmatprep.mubr.f32.mxu0 0.0
      %527 = vmatmul.mubr.f32.gmra.mxu0 %v367
      %v528 = vpop.f32.mrf.mxu0
      %v529 = vadd.f32 %v390, %v528
      %v530 = vpop.f32.mrf.mxu0
      %531 = vmatprep.mubr.f32.mxu0 0.0
      %532 = vmatmul.mubr.f32.gmra.mxu0 %v368
      %v533 = vpop.f32.mrf.mxu0
      %v534 = vadd.f32 %v390, %v533
      %v535 = vpop.f32.mrf.mxu0
      %536 = vdwg.mxu0
      %v537 = vld [vmem:[%s327] sm:$0xff]
      %v538 = vld [vmem:[%s327 + $0x8] sm:$0xff]
      %s539 = scalar_lea.vmem %s327, %s352
      %v540 = vld [vmem:[%s539] sm:$0xff]
      %v541 = vadd.f32 %v459, %v537
      %v542 = vadd.f32 %v464, %v538
      %v543 = vadd.f32 %v469, %v537
      %v544 = vadd.f32 %v474, %v538
      %v545 = vadd.f32 %v479, %v537
      %v546 = vadd.f32 %v484, %v538
      %v547 = vadd.f32 %v489, %v537
      %v548 = vadd.f32 %v494, %v538
      %v549 = vadd.f32 %v499, %v537
      %v550 = vadd.f32 %v504, %v538
      %v551 = vadd.f32 %v509, %v537
      %v552 = vadd.f32 %v514, %v538
      %v553 = vadd.f32 %v519, %v537
      %v554 = vadd.f32 %v524, %v538
      %v555 = vadd.f32 %v529, %v537
      %v556 = vadd.f32 %v534, %v538
      %v558 = vcombine.high %v540, %v540
      %v560 = vunpack.c.l.s4 1966171168
      %v561 = vunpack.c.0.s8 %v560
      %v562 = vlaneseq
      %v563 = vshrl.u32 %v562, 7
      %v564 = vsub.s32 %v561, %v563
      %v565 = vrot.slane %v540, %v564
      %v567 = vunpack.c.l.s4 1966171168
      %v568 = vunpack.c.0.s8 %v567
      %v569 = vlaneseq
      %v570 = vshrl.u32 %v569, 7
      %v571 = vsub.s32 %v568, %v570
      %v572 = vrot.slane %v558, %v571
      %v573 = vcombine.high %v565, %v565
      %v574 = vcombine.high %v572, %v572
      %v576 = vunpack.c.l.s4 1966171168
      %v577 = vunpack.c.0.s8 %v576
      %v578 = vlaneseq
      %v579 = vshrl.u32 %v578, 7
      %v580 = vsub.s32 %v577, %v579
      %v581 = vrot.slane %v565, %v580
      %v583 = vunpack.c.l.s4 1966171168
      %v584 = vunpack.c.0.s8 %v583
      %v585 = vlaneseq
      %v586 = vshrl.u32 %v585, 7
      %v587 = vsub.s32 %v584, %v586
      %v588 = vrot.slane %v572, %v587
      %v590 = vunpack.c.l.s4 1966171168
      %v591 = vunpack.c.0.s8 %v590
      %v592 = vlaneseq
      %v593 = vshrl.u32 %v592, 7
      %v594 = vsub.s32 %v591, %v593
      %v595 = vrot.slane %v573, %v594
      %v597 = vunpack.c.l.s4 1966171168
      %v598 = vunpack.c.0.s8 %v597
      %v599 = vlaneseq
      %v600 = vshrl.u32 %v599, 7
      %v601 = vsub.s32 %v598, %v600
      %v602 = vrot.slane %v574, %v601
      %v603 = vcombine.high %v581, %v581
      %v604 = vcombine.high %v588, %v588
      %v605 = vcombine.high %v595, %v595
      %v606 = vcombine.high %v602, %v602
      %v607 = vlaneseq
      %v608 = vshrl.u32 %v607, 7
      %v609 = vsub.s32 0, %v608
      %v610 = vrot.slane %v581, %v609
      %v611 = vlaneseq
      %v612 = vshrl.u32 %v611, 7
      %v613 = vsub.s32 0, %v612
      %v614 = vrot.slane %v595, %v613
      %v615 = vlaneseq
      %v616 = vshrl.u32 %v615, 7
      %v617 = vsub.s32 0, %v616
      %v618 = vrot.slane %v603, %v617
      %v619 = vlaneseq
      %v620 = vshrl.u32 %v619, 7
      %v621 = vsub.s32 0, %v620
      %v622 = vrot.slane %v605, %v621
      %v623 = vlaneseq
      %v624 = vshrl.u32 %v623, 7
      %v625 = vsub.s32 0, %v624
      %v626 = vrot.slane %v588, %v625
      %v627 = vlaneseq
      %v628 = vshrl.u32 %v627, 7
      %v629 = vsub.s32 0, %v628
      %v630 = vrot.slane %v602, %v629
      %v631 = vlaneseq
      %v632 = vshrl.u32 %v631, 7
      %v633 = vsub.s32 0, %v632
      %v634 = vrot.slane %v604, %v633
      %v635 = vlaneseq
      %v636 = vshrl.u32 %v635, 7
      %v637 = vsub.s32 0, %v636
      %v638 = vrot.slane %v606, %v637
      %v647 = vadd.f32 %v541, %v610
      %v648 = vadd.f32 %v542, %v610
      %v649 = vadd.f32 %v543, %v614
      %v650 = vadd.f32 %v544, %v614
      %v651 = vadd.f32 %v545, %v618
      %v652 = vadd.f32 %v546, %v618
      %v653 = vadd.f32 %v547, %v622
      %v654 = vadd.f32 %v548, %v622
      %v655 = vadd.f32 %v549, %v626
      %v656 = vadd.f32 %v550, %v626
      %v657 = vadd.f32 %v551, %v630
      %v658 = vadd.f32 %v552, %v630
      %v659 = vadd.f32 %v553, %v634
      %v660 = vadd.f32 %v554, %v634
      %v661 = vadd.f32 %v555, %v638
      %v662 = vadd.f32 %v556, %v638
      %v663 = vmul.f32 %v647, 0.5
      %v664 = vmul.f32 %v648, 0.5
      %v665 = vmul.f32 %v649, 0.5
      %v666 = vmul.f32 %v650, 0.5
      %v667 = vmul.f32 %v651, 0.5
      %v668 = vmul.f32 %v652, 0.5
      %v669 = vmul.f32 %v653, 0.5
      %v670 = vmul.f32 %v654, 0.5
      %v671 = vmul.f32 %v655, 0.5
      %v672 = vmul.f32 %v656, 0.5
      %v673 = vmul.f32 %v657, 0.5
      %v674 = vmul.f32 %v658, 0.5
      %v675 = vmul.f32 %v659, 0.5
      %v676 = vmul.f32 %v660, 0.5
      %v677 = vmul.f32 %v661, 0.5
      %v678 = vmul.f32 %v662, 0.5
      %v679 = vtanh.pop %v663
      %v680 = vtanh.pop %v664
      %v681 = vtanh.pop %v665
      %v682 = vtanh.pop %v666
      %v683 = vtanh.pop %v667
      %v684 = vtanh.pop %v668
      %v685 = vtanh.pop %v669
      %v686 = vtanh.pop %v670
      %v687 = vtanh.pop %v671
      %v688 = vtanh.pop %v672
      %v689 = vtanh.pop %v673
      %v690 = vtanh.pop %v674
      %v691 = vtanh.pop %v675
      %v692 = vtanh.pop %v676
      %v693 = vtanh.pop %v677
      %v694 = vtanh.pop %v678
      %v695 = vmul.f32 %v679, 0.5
      %v696 = vmul.f32 %v680, 0.5
      %v697 = vmul.f32 %v681, 0.5
      %v698 = vmul.f32 %v682, 0.5
      %v699 = vmul.f32 %v683, 0.5
      %v700 = vmul.f32 %v684, 0.5
      %v701 = vmul.f32 %v685, 0.5
      %v702 = vmul.f32 %v686, 0.5
      %v703 = vmul.f32 %v687, 0.5
      %v704 = vmul.f32 %v688, 0.5
      %v705 = vmul.f32 %v689, 0.5
      %v706 = vmul.f32 %v690, 0.5
      %v707 = vmul.f32 %v691, 0.5
      %v708 = vmul.f32 %v692, 0.5
      %v709 = vmul.f32 %v693, 0.5
      %v710 = vmul.f32 %v694, 0.5
      %v711 = vadd.f32 %v695, 0.5
      %v712 = vadd.f32 %v696, 0.5
      %v713 = vadd.f32 %v697, 0.5
      %v714 = vadd.f32 %v698, 0.5
      %v715 = vadd.f32 %v699, 0.5
      %v716 = vadd.f32 %v700, 0.5
      %v717 = vadd.f32 %v701, 0.5
      %v718 = vadd.f32 %v702, 0.5
      %v719 = vadd.f32 %v703, 0.5
      %v720 = vadd.f32 %v704, 0.5
      %v721 = vadd.f32 %v705, 0.5
      %v722 = vadd.f32 %v706, 0.5
      %v723 = vadd.f32 %v707, 0.5
      %v724 = vadd.f32 %v708, 0.5
      %v725 = vadd.f32 %v709, 0.5
      %v726 = vadd.f32 %v710, 0.5
      %v727 = vadd.f32 %v711, %v712
      %v728 = vrot.slane %v727, 4
      %v729 = vadd.f32 %v727, %v728
      %v730 = vrot.slane %v729, 2
      %v731 = vadd.f32 %v729, %v730
      %v732 = vrot.slane %v731, 1
      %v733 = vadd.f32 %v731, %v732
      %v734 = vadd.f32 %v713, %v714
      %v735 = vrot.slane %v734, 4
      %v736 = vadd.f32 %v734, %v735
      %v737 = vrot.slane %v736, 2
      %v738 = vadd.f32 %v736, %v737
      %v739 = vrot.slane %v738, 1
      %v740 = vadd.f32 %v738, %v739
      %v741 = vadd.f32 %v715, %v716
      %v742 = vrot.slane %v741, 4
      %v743 = vadd.f32 %v741, %v742
      %v744 = vrot.slane %v743, 2
      %v745 = vadd.f32 %v743, %v744
      %v746 = vrot.slane %v745, 1
      %v747 = vadd.f32 %v745, %v746
      %v748 = vadd.f32 %v717, %v718
      %v749 = vrot.slane %v748, 4
      %v750 = vadd.f32 %v748, %v749
      %v751 = vrot.slane %v750, 2
      %v752 = vadd.f32 %v750, %v751
      %v753 = vrot.slane %v752, 1
      %v754 = vadd.f32 %v752, %v753
      %v755 = vadd.f32 %v719, %v720
      %v756 = vrot.slane %v755, 4
      %v757 = vadd.f32 %v755, %v756
      %v758 = vrot.slane %v757, 2
      %v759 = vadd.f32 %v757, %v758
      %v760 = vrot.slane %v759, 1
      %v761 = vadd.f32 %v759, %v760
      %v762 = vadd.f32 %v721, %v722
      %v763 = vrot.slane %v762, 4
      %v764 = vadd.f32 %v762, %v763
      %v765 = vrot.slane %v764, 2
      %v766 = vadd.f32 %v764, %v765
      %v767 = vrot.slane %v766, 1
      %v768 = vadd.f32 %v766, %v767
      %v769 = vadd.f32 %v723, %v724
      %v770 = vrot.slane %v769, 4
      %v771 = vadd.f32 %v769, %v770
      %v772 = vrot.slane %v771, 2
      %v773 = vadd.f32 %v771, %v772
      %v774 = vrot.slane %v773, 1
      %v775 = vadd.f32 %v773, %v774
      %v776 = vadd.f32 %v725, %v726
      %v777 = vrot.slane %v776, 4
      %v778 = vadd.f32 %v776, %v777
      %v779 = vrot.slane %v778, 2
      %v780 = vadd.f32 %v778, %v779
      %v781 = vrot.slane %v780, 1
      %v782 = vadd.f32 %v780, %v781
      %vm791 = vcmask 1041409
      %v792 = vsel %vm791, %v740, %v733
      %vm793 = vcmask 1042434
      %v794 = vsel %vm793, %v747, %v792
      %vm795 = vcmask 1043459
      %v796 = vsel %vm795, %v754, %v794
      %vm797 = vcmask 1044484
      %v798 = vsel %vm797, %v761, %v796
      %vm799 = vcmask 1045509
      %v800 = vsel %vm799, %v768, %v798
      %vm801 = vcmask 1046534
      %v802 = vsel %vm801, %v775, %v800
      %vm803 = vcmask 1047559
      %v804 = vsel %vm803, %v782, %v802
      %806 = vst [vmem:[%s335] sm:$0xff] %v804
      %v807 = vadd.f32 %v647, %v648
      %v808 = vrot.slane %v807, 4
      %v809 = vadd.f32 %v807, %v808
      %v810 = vrot.slane %v809, 2
      %v811 = vadd.f32 %v809, %v810
      %v812 = vrot.slane %v811, 1
      %v813 = vadd.f32 %v811, %v812
      %v814 = vadd.f32 %v649, %v650
      %v815 = vrot.slane %v814, 4
      %v816 = vadd.f32 %v814, %v815
      %v817 = vrot.slane %v816, 2
      %v818 = vadd.f32 %v816, %v817
      %v819 = vrot.slane %v818, 1
      %v820 = vadd.f32 %v818, %v819
      %v821 = vadd.f32 %v651, %v652
      %v822 = vrot.slane %v821, 4
      %v823 = vadd.f32 %v821, %v822
      %v824 = vrot.slane %v823, 2
      %v825 = vadd.f32 %v823, %v824
      %v826 = vrot.slane %v825, 1
      %v827 = vadd.f32 %v825, %v826
      %v828 = vadd.f32 %v653, %v654
      %v829 = vrot.slane %v828, 4
      %v830 = vadd.f32 %v828, %v829
      %v831 = vrot.slane %v830, 2
      %v832 = vadd.f32 %v830, %v831
      %v833 = vrot.slane %v832, 1
      %v834 = vadd.f32 %v832, %v833
      %v835 = vadd.f32 %v655, %v656
      %v836 = vrot.slane %v835, 4
      %v837 = vadd.f32 %v835, %v836
      %v838 = vrot.slane %v837, 2
      %v839 = vadd.f32 %v837, %v838
      %v840 = vrot.slane %v839, 1
      %v841 = vadd.f32 %v839, %v840
      %v842 = vadd.f32 %v657, %v658
      %v843 = vrot.slane %v842, 4
      %v844 = vadd.f32 %v842, %v843
      %v845 = vrot.slane %v844, 2
      %v846 = vadd.f32 %v844, %v845
      %v847 = vrot.slane %v846, 1
      %v848 = vadd.f32 %v846, %v847
      %v849 = vadd.f32 %v659, %v660
      %v850 = vrot.slane %v849, 4
      %v851 = vadd.f32 %v849, %v850
      %v852 = vrot.slane %v851, 2
      %v853 = vadd.f32 %v851, %v852
      %v854 = vrot.slane %v853, 1
      %v855 = vadd.f32 %v853, %v854
      %v856 = vadd.f32 %v661, %v662
      %v857 = vrot.slane %v856, 4
      %v858 = vadd.f32 %v856, %v857
      %v859 = vrot.slane %v858, 2
      %v860 = vadd.f32 %v858, %v859
      %v861 = vrot.slane %v860, 1
      %v862 = vadd.f32 %v860, %v861
      %v871 = vsel %vm791, %v820, %v813
      %v872 = vsel %vm793, %v827, %v871
      %v873 = vsel %vm795, %v834, %v872
      %v874 = vsel %vm797, %v841, %v873
      %v875 = vsel %vm799, %v848, %v874
      %v876 = vsel %vm801, %v855, %v875
      %v877 = vsel %vm803, %v862, %v876
      %879 = vst [vmem:[%s343] sm:$0xff] %v877
      %v880 = vmul.f32 %v647, %v647
      %v881 = vmul.f32 %v648, %v648
      %v882 = vmul.f32 %v649, %v649
      %v883 = vmul.f32 %v650, %v650
      %v884 = vmul.f32 %v651, %v651
      %v885 = vmul.f32 %v652, %v652
      %v886 = vmul.f32 %v653, %v653
      %v887 = vmul.f32 %v654, %v654
      %v888 = vmul.f32 %v655, %v655
      %v889 = vmul.f32 %v656, %v656
      %v890 = vmul.f32 %v657, %v657
      %v891 = vmul.f32 %v658, %v658
      %v892 = vmul.f32 %v659, %v659
      %v893 = vmul.f32 %v660, %v660
      %v894 = vmul.f32 %v661, %v661
      %v895 = vmul.f32 %v662, %v662
      %v896 = vadd.f32 %v880, %v881
      %v897 = vrot.slane %v896, 4
      %v898 = vadd.f32 %v896, %v897
      %v899 = vrot.slane %v898, 2
      %v900 = vadd.f32 %v898, %v899
      %v901 = vrot.slane %v900, 1
      %v902 = vadd.f32 %v900, %v901
      %v903 = vadd.f32 %v882, %v883
      %v904 = vrot.slane %v903, 4
      %v905 = vadd.f32 %v903, %v904
      %v906 = vrot.slane %v905, 2
      %v907 = vadd.f32 %v905, %v906
      %v908 = vrot.slane %v907, 1
      %v909 = vadd.f32 %v907, %v908
      %v910 = vadd.f32 %v884, %v885
      %v911 = vrot.slane %v910, 4
      %v912 = vadd.f32 %v910, %v911
      %v913 = vrot.slane %v912, 2
      %v914 = vadd.f32 %v912, %v913
      %v915 = vrot.slane %v914, 1
      %v916 = vadd.f32 %v914, %v915
      %v917 = vadd.f32 %v886, %v887
      %v918 = vrot.slane %v917, 4
      %v919 = vadd.f32 %v917, %v918
      %v920 = vrot.slane %v919, 2
      %v921 = vadd.f32 %v919, %v920
      %v922 = vrot.slane %v921, 1
      %v923 = vadd.f32 %v921, %v922
      %v924 = vadd.f32 %v888, %v889
      %v925 = vrot.slane %v924, 4
      %v926 = vadd.f32 %v924, %v925
      %v927 = vrot.slane %v926, 2
      %v928 = vadd.f32 %v926, %v927
      %v929 = vrot.slane %v928, 1
      %v930 = vadd.f32 %v928, %v929
      %v931 = vadd.f32 %v890, %v891
      %v932 = vrot.slane %v931, 4
      %v933 = vadd.f32 %v931, %v932
      %v934 = vrot.slane %v933, 2
      %v935 = vadd.f32 %v933, %v934
      %v936 = vrot.slane %v935, 1
      %v937 = vadd.f32 %v935, %v936
      %v938 = vadd.f32 %v892, %v893
      %v939 = vrot.slane %v938, 4
      %v940 = vadd.f32 %v938, %v939
      %v941 = vrot.slane %v940, 2
      %v942 = vadd.f32 %v940, %v941
      %v943 = vrot.slane %v942, 1
      %v944 = vadd.f32 %v942, %v943
      %v945 = vadd.f32 %v894, %v895
      %v946 = vrot.slane %v945, 4
      %v947 = vadd.f32 %v945, %v946
      %v948 = vrot.slane %v947, 2
      %v949 = vadd.f32 %v947, %v948
      %v950 = vrot.slane %v949, 1
      %v951 = vadd.f32 %v949, %v950
      %v960 = vsel %vm791, %v909, %v902
      %v961 = vsel %vm793, %v916, %v960
      %v962 = vsel %vm795, %v923, %v961
      %v963 = vsel %vm797, %v930, %v962
      %v964 = vsel %vm799, %v937, %v963
      %v965 = vsel %vm801, %v944, %v964
      %v966 = vsel %vm803, %v951, %v965
      %968 = vst [vmem:[%s351] sm:$0xff] %v966
      %p969 = scmp.lt.s32.totalorder %s22, 1
      %s970 = scalar_select %p969, %s22, 1
      %p971 = scmp.lt.s32.totalorder %s23, 1
      %s972 = scalar_select %p971, %s23, 1
      %s973 = smul.addr %s970, 2
      %s974 = sadd.s32 %s972, %s973
      %s975 = smul.addr %s974, 8
      %s976 = scalar_lea.vmem %s4, %s975
      %p977 = scmp.lt.s32.totalorder %s22, 1
      %s978 = scalar_select %p977, %s22, 1
      %p979 = scmp.lt.s32.totalorder %s23, 1
      %s980 = scalar_select %p979, %s23, 1
      %s981 = smul.addr %s978, 2
      %s982 = sadd.s32 %s980, %s981
      %s983 = smul.addr %s982, 8
      %s984 = scalar_lea.vmem %s5, %s983
      %p985 = scmp.lt.s32.totalorder %s22, 1
      %s986 = scalar_select %p985, %s22, 1
      %p987 = scmp.lt.s32.totalorder %s23, 1
      %s988 = scalar_select %p987, %s23, 1
      %s989 = smul.addr %s986, 2
      %s990 = sadd.s32 %s988, %s989
      %s991 = smul.addr %s990, 8
      %s992 = scalar_lea.vmem %s6, %s991
      // Predicated region
      $region37: #{gcn_encoder_forward.6} parent=35 // pred_check
        %p993 = pneg %p146
      $region38: #{gcn_encoder_forward.6} parent=35 // pred_check_branch
        %995 = sbr.rel (%p993) target = $region40
      $region39: #{gcn_encoder_forward.6} parent=35 // pred_region
        _
      $region40: #{gcn_encoder_forward.6} parent=35 // pred_fallthru
        _
      // Predicated region
      $region41: #{gcn_encoder_forward.6} parent=35 // pred_check
        %p996 = pneg %p174
      $region42: #{gcn_encoder_forward.6} parent=35 // pred_check_branch
        %998 = sbr.rel (%p996) target = $region44
      $region43: #{gcn_encoder_forward.6} parent=35 // pred_region
        _
      $region44: #{gcn_encoder_forward.6} parent=35 // pred_fallthru
        _
      // Predicated region
      $region45: #{gcn_encoder_forward.6} parent=35 // pred_check
        %p999 = pneg %p202
      $region46: #{gcn_encoder_forward.6} parent=35 // pred_check_branch
        %1001 = sbr.rel (%p999) target = $region48
      $region47: #{gcn_encoder_forward.6} parent=35 // pred_region
        _
      $region48: #{gcn_encoder_forward.6} parent=35 // pred_fallthru
        _
    $region36: #{gcn_encoder_forward.6} parent=5 // pred_fallthru
      _
    %p1002 = scmp.le.s32.totalorder 2, %s13
    // Predicated region
    $region49: #{gcn_encoder_forward.6} parent=5 // pred_check
      %p1003 = pneg %p1002
    $region50: #{gcn_encoder_forward.6} parent=5 // pred_check_branch
      %1005 = sbr.rel (%p1003) target = $region52
    $region51: #{gcn_encoder_forward.6} parent=5 // pred_region
      %s1006 = ssub.s32 %s13, 2
      // Predicated region
      $region53: #{gcn_encoder_forward.6} parent=51 // pred_check
        %p1007 = pneg %p152
      $region54: #{gcn_encoder_forward.6} parent=51 // pred_check_branch
        %1009 = sbr.rel (%p1007) target = $region56
      $region55: #{gcn_encoder_forward.6} parent=51 // pred_region
        %p1010 = scmp.lt.s32.totalorder %s24, 1
        %s1011 = scalar_select %p1010, %s24, 1
        %p1012 = scmp.lt.s32.totalorder %s25, 1
        %s1013 = scalar_select %p1012, %s25, 1
        %s1014 = smul.addr %s1011, 2
        %s1015 = sadd.s32 %s1013, %s1014
        %s1016 = smul.addr %s1015, 8
        %s1017 = scalar_lea.vmem %s4, %s1016
      $region56: #{gcn_encoder_forward.6} parent=51 // pred_fallthru
        _
      // Predicated region
      $region57: #{gcn_encoder_forward.6} parent=51 // pred_check
        %p1018 = pneg %p180
      $region58: #{gcn_encoder_forward.6} parent=51 // pred_check_branch
        %1020 = sbr.rel (%p1018) target = $region60
      $region59: #{gcn_encoder_forward.6} parent=51 // pred_region
        %p1021 = scmp.lt.s32.totalorder %s24, 1
        %s1022 = scalar_select %p1021, %s24, 1
        %p1023 = scmp.lt.s32.totalorder %s25, 1
        %s1024 = scalar_select %p1023, %s25, 1
        %s1025 = smul.addr %s1022, 2
        %s1026 = sadd.s32 %s1024, %s1025
        %s1027 = smul.addr %s1026, 8
        %s1028 = scalar_lea.vmem %s5, %s1027
      $region60: #{gcn_encoder_forward.6} parent=51 // pred_fallthru
        _
      // Predicated region
      $region61: #{gcn_encoder_forward.6} parent=51 // pred_check
        %p1029 = pneg %p208
      $region62: #{gcn_encoder_forward.6} parent=51 // pred_check_branch
        %1031 = sbr.rel (%p1029) target = $region64
      $region63: #{gcn_encoder_forward.6} parent=51 // pred_region
        %p1032 = scmp.lt.s32.totalorder %s24, 1
        %s1033 = scalar_select %p1032, %s24, 1
        %p1034 = scmp.lt.s32.totalorder %s25, 1
        %s1035 = scalar_select %p1034, %s25, 1
        %s1036 = smul.addr %s1033, 2
        %s1037 = sadd.s32 %s1035, %s1036
        %s1038 = smul.addr %s1037, 8
        %s1039 = scalar_lea.vmem %s6, %s1038
      $region64: #{gcn_encoder_forward.6} parent=51 // pred_fallthru
        _
    $region52: #{gcn_encoder_forward.6} parent=5 // pred_fallthru
      _
  $region6: #{gcn_encoder_forward.6} parent=0 // loop_footer
    %s17 = sadd.s32 1, %s13
  $region7: #{gcn_encoder_forward.6} parent=0 // loop_footer_branch
    %12 = sbr.rel target = $region3
  $region8: #{gcn_encoder_forward.6} parent=0 // loop_exit
    _

// kernel: gcn_encoder_forward.9
$region0: #{gcn_encoder_forward.9}
  #allocation0 [shape = 'u32[]', space=smem, size = 0x4, offset = 0x4, fixed_abs, tag = 'smem constant byte address 0x4 - core index']
  #allocation1 [shape = 'u32[144,128]{1,0:T(1,128)}', space=vmem, size = 0x12000, scoped, tag = 'internal scratch']
  %s0 = inlined_call_operand.vmem [shape: f32[2,16,16,128], index: 0, kind: input, shape index: {}, may-alias: {0,6}]
  %s1 = inlined_call_operand.vmem [shape: f32[2,16,128], index: 1, kind: input, shape index: {}]
  %s2 = inlined_call_operand.vmem [shape: f32[128,128], index: 2, kind: input, shape index: {}]
  %s3 = inlined_call_operand.vmem [shape: f32[1,128], index: 3, kind: input, shape index: {}]
  %s4 = inlined_call_operand.vmem [shape: f32[1,128], index: 4, kind: input, shape index: {}]
  %s5 = inlined_call_operand.vmem [shape: f32[1,128], index: 5, kind: input, shape index: {}]
  %s6 = inlined_call_operand.vmem [shape: f32[2,16,16,128], index: 6, kind: output, shape index: {}, may-alias: {0,6}]
  %s7 = sld [smem:[#allocation0]]
  $region57: #{gcn_encoder_forward.9} parent=0
    _
  %s9 = ssub.s32 1, %s7
  %s10 = scalar_select 0, %s9, %s7
  loop: start=0, step=1, limit=6
  $region2: #{gcn_encoder_forward.9} parent=0 // loop_pre_header
    _
  $region3: #{gcn_encoder_forward.9} parent=0 // loop_header
    %s12 = sphi 0, %s16
    %p13 = scmp.ge.s32.totalorder %s12, 6
    %s19 = sphi 0, %s31
    %s20 = sphi 0, %s27
    %s21 = sphi 0, %s19
    %s22 = sphi 0, %s20
    %s23 = sphi 0, %s21
    %s24 = sphi 0, %s22
    %s36 = sphi 0, %s38
    %s39 = sphi 0, %s36
    %s40 = sphi 0, %s39
    %s56 = sphi 0, %s40
    %s62 = sphi 0, %s64
    %s65 = sphi 0, %s62
    %s66 = sphi 0, %s65
    %s82 = sphi 0, %s66
    %s86 = sphi 0, %s86
    %s88 = sphi 0, %s86
    %s89 = sphi 0, %s88
    %s103 = sphi 0, %s89
    %s107 = sphi 0, %s107
    %s109 = sphi 0, %s107
    %s110 = sphi 0, %s109
    %s124 = sphi 0, %s110
    %s128 = sphi 0, %s128
    %s130 = sphi 0, %s128
    %s131 = sphi 0, %s130
    %s145 = sphi 0, %s131
    %s149 = sphi 0, %s149
    %s151 = sphi 0, %s149
    %s152 = sphi 0, %s151
    %s166 = sphi 0, %s152
    %s174 = sphi 0, %s176
    %s177 = sphi 0, %s174
    %s178 = sphi 0, %s177
    %s194 = sphi 0, %s178
  $region4: #{gcn_encoder_forward.9} parent=0 // loop_header_branch
    %15 = sbr.rel (%p13) target = $region8
  $region5: #{gcn_encoder_forward.9} parent=0 // loop_body
    %s17 = ssub.s32 %s12, 1
    %s18 = ssub.s32 %s12, 2
    %s25 = sadd.s32 1, %s20
    %p26 = scmp.ge.s32.totalorder %s25, 2
    %s27 = scalar_select %p26, 0, %s25
    %s28 = sadd.s32 1, %s19
    %s29 = scalar_select %p26, %s28, %s19
    %p30 = scmp.ge.s32.totalorder %s29, 2
    %s31 = scalar_select %p30, 0, %s29
    %s32 = ssub.s32 %s19, %s31
    %s33 = ssub.s32 %s20, %s27
    %s34 = sor.u32 %s32, %s33
    %p35 = scmp.eq.s32.totalorder %s34, 0
    %s37 = sadd.s32 %s36, 1
    %s38 = scalar_select %p35, %s36, %s37
    %p41 = pneg %p35
    %p42 = scmp.eq.s32.totalorder %s12, 3
    %p43 = por %p41, %p42
    %p44 = scmp.ne.s32.totalorder %s36, %s39
    %p45 = scmp.eq.s32.totalorder %s12, 0
    %p46 = por %p44, %p45
    %p47 = scmp.ne.s32.totalorder %s36, %s39
    %p48 = scmp.eq.s32.totalorder %s17, 3
    %p49 = por %p47, %p48
    %p50 = scmp.ne.s32.totalorder %s39, %s40
    %p51 = scmp.eq.s32.totalorder %s17, 0
    %p52 = por %p50, %p51
    %p53 = scmp.ne.s32.totalorder %s39, %s40
    %p54 = scmp.eq.s32.totalorder %s18, 3
    %p55 = por %p53, %p54
    %p57 = scmp.ne.s32.totalorder %s40, %s56
    %p58 = scmp.eq.s32.totalorder %s18, 0
    %p59 = por %p57, %p58
    %s60 = ssub.s32 %s19, %s31
    %p61 = scmp.eq.s32.totalorder %s60, 0
    %s63 = sadd.s32 %s62, 1
    %s64 = scalar_select %p61, %s62, %s63
    %p67 = pneg %p61
    %p68 = scmp.eq.s32.totalorder %s12, 3
    %p69 = por %p67, %p68
    %p70 = scmp.ne.s32.totalorder %s62, %s65
    %p71 = scmp.eq.s32.totalorder %s12, 0
    %p72 = por %p70, %p71
    %p73 = scmp.ne.s32.totalorder %s62, %s65
    %p74 = scmp.eq.s32.totalorder %s17, 3
    %p75 = por %p73, %p74
    %p76 = scmp.ne.s32.totalorder %s65, %s66
    %p77 = scmp.eq.s32.totalorder %s17, 0
    %p78 = por %p76, %p77
    %p79 = scmp.ne.s32.totalorder %s65, %s66
    %p80 = scmp.eq.s32.totalorder %s18, 3
    %p81 = por %p79, %p80
    %p83 = scmp.ne.s32.totalorder %s66, %s82
    %p84 = scmp.eq.s32.totalorder %s18, 0
    %p85 = por %p83, %p84
    %s87 = sadd.s32 %s86, 1
    %p90 = scmp.eq.s32.totalorder %s12, 3
    %p91 = scmp.ne.s32.totalorder %s86, %s88
    %p92 = scmp.eq.s32.totalorder %s12, 0
    %p93 = por %p91, %p92
    %p94 = scmp.ne.s32.totalorder %s86, %s88
    %p95 = scmp.eq.s32.totalorder %s17, 3
    %p96 = por %p94, %p95
    %p97 = scmp.ne.s32.totalorder %s88, %s89
    %p98 = scmp.eq.s32.totalorder %s17, 0
    %p99 = por %p97, %p98
    %p100 = scmp.ne.s32.totalorder %s88, %s89
    %p101 = scmp.eq.s32.totalorder %s18, 3
    %p102 = por %p100, %p101
    %p104 = scmp.ne.s32.totalorder %s89, %s103
    %p105 = scmp.eq.s32.totalorder %s18, 0
    %p106 = por %p104, %p105
    %s108 = sadd.s32 %s107, 1
    %p111 = scmp.eq.s32.totalorder %s12, 3
    %p112 = scmp.ne.s32.totalorder %s107, %s109
    %p113 = scmp.eq.s32.totalorder %s12, 0
    %p114 = por %p112, %p113
    %p115 = scmp.ne.s32.totalorder %s107, %s109
    %p116 = scmp.eq.s32.totalorder %s17, 3
    %p117 = por %p115, %p116
    %p118 = scmp.ne.s32.totalorder %s109, %s110
    %p119 = scmp.eq.s32.totalorder %s17, 0
    %p120 = por %p118, %p119
    %p121 = scmp.ne.s32.totalorder %s109, %s110
    %p122 = scmp.eq.s32.totalorder %s18, 3
    %p123 = por %p121, %p122
    %p125 = scmp.ne.s32.totalorder %s110, %s124
    %p126 = scmp.eq.s32.totalorder %s18, 0
    %p127 = por %p125, %p126
    %s129 = sadd.s32 %s128, 1
    %p132 = scmp.eq.s32.totalorder %s12, 3
    %p133 = scmp.ne.s32.totalorder %s128, %s130
    %p134 = scmp.eq.s32.totalorder %s12, 0
    %p135 = por %p133, %p134
    %p136 = scmp.ne.s32.totalorder %s128, %s130
    %p137 = scmp.eq.s32.totalorder %s17, 3
    %p138 = por %p136, %p137
    %p139 = scmp.ne.s32.totalorder %s130, %s131
    %p140 = scmp.eq.s32.totalorder %s17, 0
    %p141 = por %p139, %p140
    %p142 = scmp.ne.s32.totalorder %s130, %s131
    %p143 = scmp.eq.s32.totalorder %s18, 3
    %p144 = por %p142, %p143
    %p146 = scmp.ne.s32.totalorder %s131, %s145
    %p147 = scmp.eq.s32.totalorder %s18, 0
    %p148 = por %p146, %p147
    %s150 = sadd.s32 %s149, 1
    %p153 = scmp.eq.s32.totalorder %s12, 3
    %p154 = scmp.ne.s32.totalorder %s149, %s151
    %p155 = scmp.eq.s32.totalorder %s12, 0
    %p156 = por %p154, %p155
    %p157 = scmp.ne.s32.totalorder %s149, %s151
    %p158 = scmp.eq.s32.totalorder %s17, 3
    %p159 = por %p157, %p158
    %p160 = scmp.ne.s32.totalorder %s151, %s152
    %p161 = scmp.eq.s32.totalorder %s17, 0
    %p162 = por %p160, %p161
    %p163 = scmp.ne.s32.totalorder %s151, %s152
    %p164 = scmp.eq.s32.totalorder %s18, 3
    %p165 = por %p163, %p164
    %p167 = scmp.ne.s32.totalorder %s152, %s166
    %p168 = scmp.eq.s32.totalorder %s18, 0
    %p169 = por %p167, %p168
    %s170 = ssub.s32 %s19, %s31
    %s171 = ssub.s32 %s20, %s27
    %s172 = sor.u32 %s170, %s171
    %p173 = scmp.eq.s32.totalorder %s172, 0
    %s175 = sadd.s32 %s174, 1
    %s176 = scalar_select %p173, %s174, %s175
    %p179 = pneg %p173
    %p180 = scmp.eq.s32.totalorder %s12, 3
    %p181 = por %p179, %p180
    %p182 = scmp.ne.s32.totalorder %s174, %s177
    %p183 = scmp.eq.s32.totalorder %s12, 0
    %p184 = por %p182, %p183
    %p185 = scmp.ne.s32.totalorder %s174, %s177
    %p186 = scmp.eq.s32.totalorder %s17, 3
    %p187 = por %p185, %p186
    %p188 = scmp.ne.s32.totalorder %s177, %s178
    %p189 = scmp.eq.s32.totalorder %s17, 0
    %p190 = por %p188, %p189
    %p191 = scmp.ne.s32.totalorder %s177, %s178
    %p192 = scmp.eq.s32.totalorder %s18, 3
    %p193 = por %p191, %p192
    %p195 = scmp.ne.s32.totalorder %s178, %s194
    %p196 = scmp.eq.s32.totalorder %s18, 0
    %p197 = por %p195, %p196
    %p198 = scmp.le.s32.totalorder 1, %s12
    %p199 = scmp.lt.s32.totalorder %s12, 5
    %p200 = pnand %p198, %p199
    %p201 = pneg %p200
    // Predicated region
    $region9: #{gcn_encoder_forward.9} parent=5 // pred_check
      _
    $region10: #{gcn_encoder_forward.9} parent=5 // pred_check_branch
      %203 = sbr.rel (%p200) target = $region12
    $region11: #{gcn_encoder_forward.9} parent=5 // pred_region
      %s204 = ssub.s32 %s12, 1
      // Predicated region
      $region13: #{gcn_encoder_forward.9} parent=11 // pred_check
        %p205 = pneg %p99
      $region14: #{gcn_encoder_forward.9} parent=11 // pred_check_branch
        %207 = sbr.rel (%p205) target = $region16
      $region15: #{gcn_encoder_forward.9} parent=11 // pred_region
        _
      $region16: #{gcn_encoder_forward.9} parent=11 // pred_fallthru
        _
      // Predicated region
      $region17: #{gcn_encoder_forward.9} parent=11 // pred_check
        %p208 = pneg %p120
      $region18: #{gcn_encoder_forward.9} parent=11 // pred_check_branch
        %210 = sbr.rel (%p208) target = $region20
      $region19: #{gcn_encoder_forward.9} parent=11 // pred_region
        _
      $region20: #{gcn_encoder_forward.9} parent=11 // pred_fallthru
        _
      // Predicated region
      $region21: #{gcn_encoder_forward.9} parent=11 // pred_check
        %p211 = pneg %p141
      $region22: #{gcn_encoder_forward.9} parent=11 // pred_check_branch
        %213 = sbr.rel (%p211) target = $region24
      $region23: #{gcn_encoder_forward.9} parent=11 // pred_region
        _
      $region24: #{gcn_encoder_forward.9} parent=11 // pred_fallthru
        _
      // Predicated region
      $region25: #{gcn_encoder_forward.9} parent=11 // pred_check
        %p214 = pneg %p162
      $region26: #{gcn_encoder_forward.9} parent=11 // pred_check_branch
        %216 = sbr.rel (%p214) target = $region28
      $region27: #{gcn_encoder_forward.9} parent=11 // pred_region
        _
      $region28: #{gcn_encoder_forward.9} parent=11 // pred_fallthru
        _
    $region12: #{gcn_encoder_forward.9} parent=5 // pred_fallthru
      _
    %p217 = scmp.lt.s32.totalorder %s12, 4
    // Predicated region
    $region29: #{gcn_encoder_forward.9} parent=5 // pred_check
      %p218 = pneg %p217
    $region30: #{gcn_encoder_forward.9} parent=5 // pred_check_branch
      %220 = sbr.rel (%p218) target = $region32
    $region31: #{gcn_encoder_forward.9} parent=5 // pred_region
      // Predicated region
      $region33: #{gcn_encoder_forward.9} parent=31 // pred_check
        %p221 = pneg %p46
      $region34: #{gcn_encoder_forward.9} parent=31 // pred_check_branch
        %223 = sbr.rel (%p221) target = $region36
      $region35: #{gcn_encoder_forward.9} parent=31 // pred_region
        %s224 = smul.u32 8, %s20
        %p225 = scmp.lt.s32.totalorder %s19, 1
        %s226 = scalar_select %p225, %s19, 1
        %p227 = scmp.lt.s32.totalorder %s224, 15
        %s228 = scalar_select %p227, %s224, 15
        %s229 = smul.addr %s228, 2
        %s230 = smul.addr %s226, 32
        %s231 = sadd.s32 %s229, %s230
        %s232 = smul.addr %s231, 8
        %s233 = scalar_lea.vmem %s0, %s232
        %s234 = smul.u32 8, %s20
      $region36: #{gcn_encoder_forward.9} parent=31 // pred_fallthru
        _
      // Predicated region
      $region37: #{gcn_encoder_forward.9} parent=31 // pred_check
        %p235 = pneg %p72
      $region38: #{gcn_encoder_forward.9} parent=31 // pred_check_branch
        %237 = sbr.rel (%p235) target = $region40
      $region39: #{gcn_encoder_forward.9} parent=31 // pred_region
        %p238 = scmp.lt.s32.totalorder %s19, 1
        %s239 = scalar_select %p238, %s19, 1
        %s240 = smul.addr %s239, 2
        %s241 = smul.addr %s240, 8
        %s242 = scalar_lea.vmem %s1, %s241
      $region40: #{gcn_encoder_forward.9} parent=31 // pred_fallthru
        _
    $region32: #{gcn_encoder_forward.9} parent=5 // pred_fallthru
      _
    %p243 = scmp.le.s32.totalorder 1, %s12
    %p244 = scmp.lt.s32.totalorder %s12, 5
    %p245 = pnand %p243, %p244
    %p246 = pneg %p245
    // Predicated region
    $region41: #{gcn_encoder_forward.9} parent=5 // pred_check
      _
    $region42: #{gcn_encoder_forward.9} parent=5 // pred_check_branch
      %248 = sbr.rel (%p245) target = $region44
    $region43: #{gcn_encoder_forward.9} parent=5 // pred_region
      %s249 = ssub.s32 %s12, 1
      %s250 = smul.u32 8, %s22
      %p251 = scmp.lt.s32.totalorder %s21, 1
      %s252 = scalar_select %p251, %s21, 1
      %p253 = scmp.lt.s32.totalorder %s250, 15
      %s254 = scalar_select %p253, %s250, 15
      %s255 = smul.addr %s254, 2
      %s256 = smul.addr %s252, 32
      %s257 = sadd.s32 %s255, %s256
      %s258 = smul.addr %s257, 8
      %s259 = scalar_lea.vmem %s0, %s258
      %p260 = pneg %p52
      %p261 = pneg %p49
      %p262 = scmp.lt.s32.totalorder %s21, 1
      %s263 = scalar_select %p262, %s21, 1
      %s264 = smul.addr %s263, 2
      %s265 = smul.addr %s264, 8
      %s266 = scalar_lea.vmem %s1, %s265
      %p267 = pneg %p78
      %p268 = pneg %p75
      %p269 = pneg %p99
      %p270 = pneg %p96
      %p271 = pneg %p120
      %p272 = pneg %p117
      %p273 = pneg %p141
      %p274 = pneg %p138
      %p275 = pneg %p162
      %p276 = pneg %p159
      %p277 = pneg %p190
      %p278 = pneg %p187
      %s279 = smul.u32 8, %s22
      %p280 = scmp.lt.s32.totalorder %s21, 1
      %s281 = scalar_select %p280, %s21, 1
      %p282 = scmp.lt.s32.totalorder %s279, 15
      %s283 = scalar_select %p282, %s279, 15
      %s284 = smul.addr %s283, 2
      %s285 = smul.addr %s281, 32
      %s286 = sadd.s32 %s284, %s285
      %s287 = smul.addr %s286, 8
      %s288 = scalar_lea.vmem %s6, %s287
      %s289 = smul.u32 8, %s22
      %p290 = scmp.lt.s32.totalorder %s21, 1
      %s291 = scalar_select %p290, %s21, 1
      %p292 = scmp.lt.s32.totalorder %s289, 15
      %s293 = scalar_select %p292, %s289, 15
      %s294 = smul.addr %s293, 2
      %s295 = smul.addr %s291, 32
      %s296 = sadd.s32 %s294, %s295
      %s297 = smul.addr %s296, 8
      %s298 = scalar_lea.vmem %s0, %s297
      %s299 = smul.u32 8, %s22
      %p300 = scmp.lt.s32.totalorder %s21, 1
      %s301 = scalar_select %p300, %s21, 1
      %s302 = smul.addr %s301, 2
      %s303 = smul.addr %s302, 8
      %s304 = scalar_lea.vmem %s1, %s303
      %s305 = smul.u32 8, %s22
      %p306 = scmp.lt.s32.totalorder %s21, 1
      %s307 = scalar_select %p306, %s21, 1
      %p308 = scmp.lt.s32.totalorder %s305, 15
      %s309 = scalar_select %p308, %s305, 15
      %s310 = smul.addr %s309, 2
      %s311 = smul.addr %s307, 32
      %s312 = sadd.s32 %s310, %s311
      %s313 = smul.addr %s312, 8
      %s314 = scalar_lea.vmem %s6, %s313
      %s315 = smul.u32 8, %s22
      %s316 = smul.u32 %s22, 8
      %v317 = vld [vmem:[%s298] sm:$0xff]
      %v318 = vld [vmem:[%s298 + $0x8] sm:$0xff]
      %v319 = vld [vmem:[%s298 + $0x10] sm:$0xff]
      %v320 = vld [vmem:[%s298 + $0x18] sm:$0xff]
      %v321 = vld [vmem:[%s298 + $0x20] sm:$0xff]
      %v322 = vld [vmem:[%s298 + $0x28] sm:$0xff]
      %v323 = vld [vmem:[%s298 + $0x30] sm:$0xff]
      %v324 = vld [vmem:[%s298 + $0x38] sm:$0xff]
      %v325 = vld [vmem:[%s298 + $0x40] sm:$0xff]
      %v326 = vld [vmem:[%s298 + $0x48] sm:$0xff]
      %v327 = vld [vmem:[%s298 + $0x50] sm:$0xff]
      %v328 = vld [vmem:[%s298 + $0x58] sm:$0xff]
      %v329 = vld [vmem:[%s298 + $0x60] sm:$0xff]
      %v330 = vld [vmem:[%s298 + $0x68] sm:$0xff]
      %v331 = vld [vmem:[%s298 + $0x70] sm:$0xff]
      %v332 = vld [vmem:[%s298 + $0x78] sm:$0xff]
      %v333 = vld [vmem:[%s2] sm:$0xff]
      %v334 = vld [vmem:[%s2 + $0x8] sm:$0xff]
      %v335 = vld [vmem:[%s2 + $0x10] sm:$0xff]
      %v336 = vld [vmem:[%s2 + $0x18] sm:$0xff]
      %v337 = vld [vmem:[%s2 + $0x20] sm:$0xff]
      %v338 = vld [vmem:[%s2 + $0x28] sm:$0xff]
      %v339 = vld [vmem:[%s2 + $0x30] sm:$0xff]
      %v340 = vld [vmem:[%s2 + $0x38] sm:$0xff]
      %v341 = vld [vmem:[%s2 + $0x40] sm:$0xff]
      %v342 = vld [vmem:[%s2 + $0x48] sm:$0xff]
      %v343 = vld [vmem:[%s2 + $0x50] sm:$0xff]
      %v344 = vld [vmem:[%s2 + $0x58] sm:$0xff]
      %v345 = vld [vmem:[%s2 + $0x60] sm:$0xff]
      %v346 = vld [vmem:[%s2 + $0x68] sm:$0xff]
      %v347 = vld [vmem:[%s2 + $0x70] sm:$0xff]
      %v348 = vld [vmem:[%s2 + $0x78] sm:$0xff]
      %v349 = vld [vmem:[%s3] sm:$0x1]
      %v351 = vlaneseq
      %v352 = vshrl.u32 %v351, 7
      %v353 = vsub.s32 0, %v352
      %v354 = vrot.slane %v349, %v353
      %356 = vmatprep.subr.mxu0 0.0
      %357 = vmatpush1.msra.mxu0 %v348
      %358 = vmatprep.subr.mxu0 0.0
      %359 = vmatpush1.msra.mxu0 %v347
      %360 = vmatprep.subr.mxu0 0.0
      %361 = vmatpush1.msra.mxu0 %v346
      %362 = vmatprep.subr.mxu0 0.0
      %363 = vmatpush1.msra.mxu0 %v345
      %364 = vmatprep.subr.mxu0 0.0
      %365 = vmatpush1.msra.mxu0 %v344
      %366 = vmatprep.subr.mxu0 0.0
      %367 = vmatpush1.msra.mxu0 %v343
      %368 = vmatprep.subr.mxu0 0.0
      %369 = vmatpush1.msra.mxu0 %v342
      %370 = vmatprep.subr.mxu0 0.0
      %371 = vmatpush1.msra.mxu0 %v341
      %372 = vmatprep.subr.mxu0 0.0
      %373 = vmatpush1.msra.mxu0 %v340
      %374 = vmatprep.subr.mxu0 0.0
      %375 = vmatpush1.msra.mxu0 %v339
      %376 = vmatprep.subr.mxu0 0.0
      %377 = vmatpush1.msra.mxu0 %v338
      %378 = vmatprep.subr.mxu0 0.0
      %379 = vmatpush1.msra.mxu0 %v337
      %380 = vmatprep.subr.mxu0 0.0
      %381 = vmatpush1.msra.mxu0 %v336
      %382 = vmatprep.subr.mxu0 0.0
      %383 = vmatpush1.msra.mxu0 %v335
      %384 = vmatprep.subr.mxu0 0.0
      %385 = vmatpush1.msra.mxu0 %v334
      %386 = vmatprep.subr.mxu0 0.0
      %387 = vmatpush1.msra.mxu0 %v333
      %388 = vmatprep.subr.mxu0 0.0
      %389 = vmatpush2.msra.mxu0 0.0
      %390 = vmatprep.subr.mxu0 0.0
      %391 = vmatpush2.msra.mxu0 0.0
      %392 = vmatprep.subr.mxu0 0.0
      %393 = vmatpush2.msra.mxu0 0.0
      %394 = vmatprep.subr.mxu0 0.0
      %395 = vmatpush2.msra.mxu0 0.0
      %396 = vmatprep.subr.mxu0 0.0
      %397 = vmatpush2.msra.mxu0 0.0
      %398 = vmatprep.subr.mxu0 0.0
      %399 = vmatpush2.msra.mxu0 0.0
      %400 = vmatprep.subr.mxu0 0.0
      %401 = vmatpush2.msra.mxu0 0.0
      %402 = vmatprep.subr.mxu0 0.0
      %403 = vmatpush2.msra.mxu0 0.0
      %404 = vmatprep.subr.mxu0 0.0
      %405 = vmatpush2.msra.mxu0 0.0
      %406 = vmatprep.subr.mxu0 0.0
      %407 = vmatpush2.msra.mxu0 0.0
      %408 = vmatprep.subr.mxu0 0.0
      %409 = vmatpush2.msra.mxu0 0.0
      %410 = vmatprep.subr.mxu0 0.0
      %411 = vmatpush2.msra.mxu0 0.0
      %412 = vmatprep.subr.mxu0 0.0
      %413 = vmatpush2.msra.mxu0 0.0
      %414 = vmatprep.subr.mxu0 0.0
      %415 = vmatpush2.msra.mxu0 0.0
      %416 = vmatprep.subr.mxu0 0.0
      %417 = vmatpush2.msra.mxu0 0.0
      %418 = vmatprep.subr.mxu0 0.0
      %419 = vmatpush2.msra.mxu0 0.0
      %420 = vmatprep.mubr.f32.mxu0 0.0
      %421 = vmatmul.mubr.f32.gmra.mxu0 %v317
      %v422 = vpop.f32.mrf.mxu0
      %v423 = vadd.f32 %v354, %v422
      %v424 = vpop.f32.mrf.mxu0
      %425 = vmatprep.mubr.f32.mxu0 0.0
      %426 = vmatmul.mubr.f32.gmra.mxu0 %v318
      %v427 = vpop.f32.mrf.mxu0
      %v428 = vadd.f32 %v354, %v427
      %v429 = vpop.f32.mrf.mxu0
      %430 = vmatprep.mubr.f32.mxu0 0.0
      %431 = vmatmul.mubr.f32.gmra.mxu0 %v319
      %v432 = vpop.f32.mrf.mxu0
      %v433 = vadd.f32 %v354, %v432
      %v434 = vpop.f32.mrf.mxu0
      %435 = vmatprep.mubr.f32.mxu0 0.0
      %436 = vmatmul.mubr.f32.gmra.mxu0 %v320
      %v437 = vpop.f32.mrf.mxu0
      %v438 = vadd.f32 %v354, %v437
      %v439 = vpop.f32.mrf.mxu0
      %440 = vmatprep.mubr.f32.mxu0 0.0
      %441 = vmatmul.mubr.f32.gmra.mxu0 %v321
      %v442 = vpop.f32.mrf.mxu0
      %v443 = vadd.f32 %v354, %v442
      %v444 = vpop.f32.mrf.mxu0
      %445 = vmatprep.mubr.f32.mxu0 0.0
      %446 = vmatmul.mubr.f32.gmra.mxu0 %v322
      %v447 = vpop.f32.mrf.mxu0
      %v448 = vadd.f32 %v354, %v447
      %v449 = vpop.f32.mrf.mxu0
      %450 = vmatprep.mubr.f32.mxu0 0.0
      %451 = vmatmul.mubr.f32.gmra.mxu0 %v323
      %v452 = vpop.f32.mrf.mxu0
      %v453 = vadd.f32 %v354, %v452
      %v454 = vpop.f32.mrf.mxu0
      %455 = vmatprep.mubr.f32.mxu0 0.0
      %456 = vmatmul.mubr.f32.gmra.mxu0 %v324
      %v457 = vpop.f32.mrf.mxu0
      %v458 = vadd.f32 %v354, %v457
      %v459 = vpop.f32.mrf.mxu0
      %460 = vmatprep.mubr.f32.mxu0 0.0
      %461 = vmatmul.mubr.f32.gmra.mxu0 %v325
      %v462 = vpop.f32.mrf.mxu0
      %v463 = vadd.f32 %v354, %v462
      %v464 = vpop.f32.mrf.mxu0
      %465 = vmatprep.mubr.f32.mxu0 0.0
      %466 = vmatmul.mubr.f32.gmra.mxu0 %v326
      %v467 = vpop.f32.mrf.mxu0
      %v468 = vadd.f32 %v354, %v467
      %v469 = vpop.f32.mrf.mxu0
      %470 = vmatprep.mubr.f32.mxu0 0.0
      %471 = vmatmul.mubr.f32.gmra.mxu0 %v327
      %v472 = vpop.f32.mrf.mxu0
      %v473 = vadd.f32 %v354, %v472
      %v474 = vpop.f32.mrf.mxu0
      %475 = vmatprep.mubr.f32.mxu0 0.0
      %476 = vmatmul.mubr.f32.gmra.mxu0 %v328
      %v477 = vpop.f32.mrf.mxu0
      %v478 = vadd.f32 %v354, %v477
      %v479 = vpop.f32.mrf.mxu0
      %480 = vmatprep.mubr.f32.mxu0 0.0
      %481 = vmatmul.mubr.f32.gmra.mxu0 %v329
      %v482 = vpop.f32.mrf.mxu0
      %v483 = vadd.f32 %v354, %v482
      %v484 = vpop.f32.mrf.mxu0
      %485 = vmatprep.mubr.f32.mxu0 0.0
      %486 = vmatmul.mubr.f32.gmra.mxu0 %v330
      %v487 = vpop.f32.mrf.mxu0
      %v488 = vadd.f32 %v354, %v487
      %v489 = vpop.f32.mrf.mxu0
      %490 = vmatprep.mubr.f32.mxu0 0.0
      %491 = vmatmul.mubr.f32.gmra.mxu0 %v331
      %v492 = vpop.f32.mrf.mxu0
      %v493 = vadd.f32 %v354, %v492
      %v494 = vpop.f32.mrf.mxu0
      %495 = vmatprep.mubr.f32.mxu0 0.0
      %496 = vmatmul.mubr.f32.gmra.mxu0 %v332
      %v497 = vpop.f32.mrf.mxu0
      %v498 = vadd.f32 %v354, %v497
      %v499 = vpop.f32.mrf.mxu0
      %500 = vdwg.mxu0
      %v501 = vld [vmem:[%s304] sm:$0xff]
      %v502 = vld [vmem:[%s304 + $0x8] sm:$0xff]
      %s503 = scalar_lea.vmem %s304, %s316
      %v504 = vld [vmem:[%s503] sm:$0xff]
      %v505 = vadd.f32 %v423, %v501
      %v506 = vadd.f32 %v428, %v502
      %v507 = vadd.f32 %v433, %v501
      %v508 = vadd.f32 %v438, %v502
      %v509 = vadd.f32 %v443, %v501
      %v510 = vadd.f32 %v448, %v502
      %v511 = vadd.f32 %v453, %v501
      %v512 = vadd.f32 %v458, %v502
      %v513 = vadd.f32 %v463, %v501
      %v514 = vadd.f32 %v468, %v502
      %v515 = vadd.f32 %v473, %v501
      %v516 = vadd.f32 %v478, %v502
      %v517 = vadd.f32 %v483, %v501
      %v518 = vadd.f32 %v488, %v502
      %v519 = vadd.f32 %v493, %v501
      %v520 = vadd.f32 %v498, %v502
      %v522 = vcombine.high %v504, %v504
      %v524 = vunpack.c.l.s4 1966171168
      %v525 = vunpack.c.0.s8 %v524
      %v526 = vlaneseq
      %v527 = vshrl.u32 %v526, 7
      %v528 = vsub.s32 %v525, %v527
      %v529 = vrot.slane %v504, %v528
      %v531 = vunpack.c.l.s4 1966171168
      %v532 = vunpack.c.0.s8 %v531
      %v533 = vlaneseq
      %v534 = vshrl.u32 %v533, 7
      %v535 = vsub.s32 %v532, %v534
      %v536 = vrot.slane %v522, %v535
      %v537 = vcombine.high %v529, %v529
      %v538 = vcombine.high %v536, %v536
      %v540 = vunpack.c.l.s4 1966171168
      %v541 = vunpack.c.0.s8 %v540
      %v542 = vlaneseq
      %v543 = vshrl.u32 %v542, 7
      %v544 = vsub.s32 %v541, %v543
      %v545 = vrot.slane %v529, %v544
      %v547 = vunpack.c.l.s4 1966171168
      %v548 = vunpack.c.0.s8 %v547
      %v549 = vlaneseq
      %v550 = vshrl.u32 %v549, 7
      %v551 = vsub.s32 %v548, %v550
      %v552 = vrot.slane %v536, %v551
      %v554 = vunpack.c.l.s4 1966171168
      %v555 = vunpack.c.0.s8 %v554
      %v556 = vlaneseq
      %v557 = vshrl.u32 %v556, 7
      %v558 = vsub.s32 %v555, %v557
      %v559 = vrot.slane %v537, %v558
      %v561 = vunpack.c.l.s4 1966171168
      %v562 = vunpack.c.0.s8 %v561
      %v563 = vlaneseq
      %v564 = vshrl.u32 %v563, 7
      %v565 = vsub.s32 %v562, %v564
      %v566 = vrot.slane %v538, %v565
      %v567 = vcombine.high %v545, %v545
      %v568 = vcombine.high %v552, %v552
      %v569 = vcombine.high %v559, %v559
      %v570 = vcombine.high %v566, %v566
      %v571 = vlaneseq
      %v572 = vshrl.u32 %v571, 7
      %v573 = vsub.s32 0, %v572
      %v574 = vrot.slane %v545, %v573
      %v575 = vlaneseq
      %v576 = vshrl.u32 %v575, 7
      %v577 = vsub.s32 0, %v576
      %v578 = vrot.slane %v559, %v577
      %v579 = vlaneseq
      %v580 = vshrl.u32 %v579, 7
      %v581 = vsub.s32 0, %v580
      %v582 = vrot.slane %v567, %v581
      %v583 = vlaneseq
      %v584 = vshrl.u32 %v583, 7
      %v585 = vsub.s32 0, %v584
      %v586 = vrot.slane %v569, %v585
      %v587 = vlaneseq
      %v588 = vshrl.u32 %v587, 7
      %v589 = vsub.s32 0, %v588
      %v590 = vrot.slane %v552, %v589
      %v591 = vlaneseq
      %v592 = vshrl.u32 %v591, 7
      %v593 = vsub.s32 0, %v592
      %v594 = vrot.slane %v566, %v593
      %v595 = vlaneseq
      %v596 = vshrl.u32 %v595, 7
      %v597 = vsub.s32 0, %v596
      %v598 = vrot.slane %v568, %v597
      %v599 = vlaneseq
      %v600 = vshrl.u32 %v599, 7
      %v601 = vsub.s32 0, %v600
      %v602 = vrot.slane %v570, %v601
      %v611 = vadd.f32 %v505, %v574
      %v612 = vadd.f32 %v506, %v574
      %v613 = vadd.f32 %v507, %v578
      %v614 = vadd.f32 %v508, %v578
      %v615 = vadd.f32 %v509, %v582
      %v616 = vadd.f32 %v510, %v582
      %v617 = vadd.f32 %v511, %v586
      %v618 = vadd.f32 %v512, %v586
      %v619 = vadd.f32 %v513, %v590
      %v620 = vadd.f32 %v514, %v590
      %v621 = vadd.f32 %v515, %v594
      %v622 = vadd.f32 %v516, %v594
      %v623 = vadd.f32 %v517, %v598
      %v624 = vadd.f32 %v518, %v598
      %v625 = vadd.f32 %v519, %v602
      %v626 = vadd.f32 %v520, %v602
      %v627 = vld [vmem:[%s4] sm:$0x1]
      %v629 = vlaneseq
      %v630 = vshrl.u32 %v629, 7
      %v631 = vsub.s32 0, %v630
      %v632 = vrot.slane %v627, %v631
      %v634 = vmul.f32 %v611, %v632
      %v635 = vmul.f32 %v612, %v632
      %v636 = vmul.f32 %v613, %v632
      %v637 = vmul.f32 %v614, %v632
      %v638 = vmul.f32 %v615, %v632
      %v639 = vmul.f32 %v616, %v632
      %v640 = vmul.f32 %v617, %v632
      %v641 = vmul.f32 %v618, %v632
      %v642 = vmul.f32 %v619, %v632
      %v643 = vmul.f32 %v620, %v632
      %v644 = vmul.f32 %v621, %v632
      %v645 = vmul.f32 %v622, %v632
      %v646 = vmul.f32 %v623, %v632
      %v647 = vmul.f32 %v624, %v632
      %v648 = vmul.f32 %v625, %v632
      %v649 = vmul.f32 %v626, %v632
      %v650 = vld [vmem:[%s5] sm:$0x1]
      %v652 = vlaneseq
      %v653 = vshrl.u32 %v652, 7
      %v654 = vsub.s32 0, %v653
      %v655 = vrot.slane %v650, %v654
      %v657 = vadd.f32 %v634, %v655
      %v658 = vadd.f32 %v635, %v655
      %v659 = vadd.f32 %v636, %v655
      %v660 = vadd.f32 %v637, %v655
      %v661 = vadd.f32 %v638, %v655
      %v662 = vadd.f32 %v639, %v655
      %v663 = vadd.f32 %v640, %v655
      %v664 = vadd.f32 %v641, %v655
      %v665 = vadd.f32 %v642, %v655
      %v666 = vadd.f32 %v643, %v655
      %v667 = vadd.f32 %v644, %v655
      %v668 = vadd.f32 %v645, %v655
      %v669 = vadd.f32 %v646, %v655
      %v670 = vadd.f32 %v647, %v655
      %v671 = vadd.f32 %v648, %v655
      %v672 = vadd.f32 %v649, %v655
      %v673 = vmax.f32 %v657, 0.0
      %v674 = vmax.f32 %v658, 0.0
      %v675 = vmax.f32 %v659, 0.0
      %v676 = vmax.f32 %v660, 0.0
      %v677 = vmax.f32 %v661, 0.0
      %v678 = vmax.f32 %v662, 0.0
      %v679 = vmax.f32 %v663, 0.0
      %v680 = vmax.f32 %v664, 0.0
      %v681 = vmax.f32 %v665, 0.0
      %v682 = vmax.f32 %v666, 0.0
      %v683 = vmax.f32 %v667, 0.0
      %v684 = vmax.f32 %v668, 0.0
      %v685 = vmax.f32 %v669, 0.0
      %v686 = vmax.f32 %v670, 0.0
      %v687 = vmax.f32 %v671, 0.0
      %v688 = vmax.f32 %v672, 0.0
      %v689 = vadd.f32 %v317, %v673
      %v690 = vadd.f32 %v318, %v674
      %v691 = vadd.f32 %v319, %v675
      %v692 = vadd.f32 %v320, %v676
      %v693 = vadd.f32 %v321, %v677
      %v694 = vadd.f32 %v322, %v678
      %v695 = vadd.f32 %v323, %v679
      %v696 = vadd.f32 %v324, %v680
      %v697 = vadd.f32 %v325, %v681
      %v698 = vadd.f32 %v326, %v682
      %v699 = vadd.f32 %v327, %v683
      %v700 = vadd.f32 %v328, %v684
      %v701 = vadd.f32 %v329, %v685
      %v702 = vadd.f32 %v330, %v686
      %v703 = vadd.f32 %v331, %v687
      %v704 = vadd.f32 %v332, %v688
      %705 = vst [vmem:[%s314] sm:$0xff] %v689
      %706 = vst [vmem:[%s314 + $0x8] sm:$0xff] %v690
      %707 = vst [vmem:[%s314 + $0x10] sm:$0xff] %v691
      %708 = vst [vmem:[%s314 + $0x18] sm:$0xff] %v692
      %709 = vst [vmem:[%s314 + $0x20] sm:$0xff] %v693
      %710 = vst [vmem:[%s314 + $0x28] sm:$0xff] %v694
      %711 = vst [vmem:[%s314 + $0x30] sm:$0xff] %v695
      %712 = vst [vmem:[%s314 + $0x38] sm:$0xff] %v696
      %713 = vst [vmem:[%s314 + $0x40] sm:$0xff] %v697
      %714 = vst [vmem:[%s314 + $0x48] sm:$0xff] %v698
      %715 = vst [vmem:[%s314 + $0x50] sm:$0xff] %v699
      %716 = vst [vmem:[%s314 + $0x58] sm:$0xff] %v700
      %717 = vst [vmem:[%s314 + $0x60] sm:$0xff] %v701
      %718 = vst [vmem:[%s314 + $0x68] sm:$0xff] %v702
      %719 = vst [vmem:[%s314 + $0x70] sm:$0xff] %v703
      %720 = vst [vmem:[%s314 + $0x78] sm:$0xff] %v704
      %s721 = smul.u32 8, %s22
      %p722 = scmp.lt.s32.totalorder %s21, 1
      %s723 = scalar_select %p722, %s21, 1
      %p724 = scmp.lt.s32.totalorder %s721, 15
      %s725 = scalar_select %p724, %s721, 15
      %s726 = smul.addr %s725, 2
      %s727 = smul.addr %s723, 32
      %s728 = sadd.s32 %s726, %s727
      %s729 = smul.addr %s728, 8
      %s730 = scalar_lea.vmem %s6, %s729
      // Predicated region
      $region45: #{gcn_encoder_forward.9} parent=43 // pred_check
        %p731 = pneg %p187
      $region46: #{gcn_encoder_forward.9} parent=43 // pred_check_branch
        %733 = sbr.rel (%p731) target = $region48
      $region47: #{gcn_encoder_forward.9} parent=43 // pred_region
        %s734 = smul.u32 8, %s22
      $region48: #{gcn_encoder_forward.9} parent=43 // pred_fallthru
        _
    $region44: #{gcn_encoder_forward.9} parent=5 // pred_fallthru
      _
    %p735 = scmp.le.s32.totalorder 2, %s12
    // Predicated region
    $region49: #{gcn_encoder_forward.9} parent=5 // pred_check
      %p736 = pneg %p735
    $region50: #{gcn_encoder_forward.9} parent=5 // pred_check_branch
      %738 = sbr.rel (%p736) target = $region52
    $region51: #{gcn_encoder_forward.9} parent=5 // pred_region
      %s739 = ssub.s32 %s12, 2
      // Predicated region
      $region53: #{gcn_encoder_forward.9} parent=51 // pred_check
        %p740 = pneg %p193
      $region54: #{gcn_encoder_forward.9} parent=51 // pred_check_branch
        %742 = sbr.rel (%p740) target = $region56
      $region55: #{gcn_encoder_forward.9} parent=51 // pred_region
        %s743 = smul.u32 8, %s24
        %p744 = scmp.lt.s32.totalorder %s23, 1
        %s745 = scalar_select %p744, %s23, 1
        %p746 = scmp.lt.s32.totalorder %s743, 15
        %s747 = scalar_select %p746, %s743, 15
        %s748 = smul.addr %s747, 2
        %s749 = smul.addr %s745, 32
        %s750 = sadd.s32 %s748, %s749
        %s751 = smul.addr %s750, 8
        %s752 = scalar_lea.vmem %s6, %s751
      $region56: #{gcn_encoder_forward.9} parent=51 // pred_fallthru
        _
    $region52: #{gcn_encoder_forward.9} parent=5 // pred_fallthru
      _
  $region6: #{gcn_encoder_forward.9} parent=0 // loop_footer
    %s16 = sadd.s32 1, %s12
  $region7: #{gcn_encoder_forward.9} parent=0 // loop_footer_branch
    %11 = sbr.rel target = $region3
  $region8: #{gcn_encoder_forward.9} parent=0 // loop_exit
    _

// kernel: gcn_encoder_forward.8
$region0: #{gcn_encoder_forward.8}
  #allocation0 [shape = 'u32[]', space=smem, size = 0x4, offset = 0x4, fixed_abs, tag = 'smem constant byte address 0x4 - core index']
  #allocation1 [shape = 'u32[144,128]{1,0:T(1,128)}', space=vmem, size = 0x12000, scoped, tag = 'internal scratch']
  %s0 = inlined_call_operand.vmem [shape: f32[2,16,16,128], index: 0, kind: input, shape index: {}, may-alias: {0,9}]
  %s1 = inlined_call_operand.vmem [shape: f32[2,16,128], index: 1, kind: input, shape index: {}]
  %s2 = inlined_call_operand.vmem [shape: f32[128,128], index: 2, kind: input, shape index: {}]
  %s3 = inlined_call_operand.vmem [shape: f32[1,128], index: 3, kind: input, shape index: {}]
  %s4 = inlined_call_operand.vmem [shape: f32[1,128], index: 4, kind: input, shape index: {}]
  %s5 = inlined_call_operand.vmem [shape: f32[1,128], index: 5, kind: input, shape index: {}]
  %s6 = inlined_call_operand.vmem [shape: f32[2,16,128], index: 6, kind: input, shape index: {}]
  %s7 = inlined_call_operand.vmem [shape: f32[128,128], index: 7, kind: input, shape index: {}]
  %s8 = inlined_call_operand.vmem [shape: f32[1,128], index: 8, kind: input, shape index: {}]
  %s9 = inlined_call_operand.vmem [shape: f32[2,16,16,128], index: 9, kind: output, shape index: {0}, may-alias: {0,9}]
  %s10 = inlined_call_operand.vmem [shape: f32[2,16,128], index: 10, kind: output, shape index: {1}]
  %s11 = inlined_call_operand.vmem [shape: f32[2,16,128], index: 11, kind: output, shape index: {2}]
  %s12 = inlined_call_operand.vmem [shape: f32[2,16,128], index: 12, kind: output, shape index: {3}]
  %13 = xla_tuple %s9, %s10, %s11, %s12
  %s14 = sld [smem:[#allocation0]]
  $region93: #{gcn_encoder_forward.8} parent=0
    _
  %s16 = ssub.s32 1, %s14
  %s17 = scalar_select 0, %s16, %s14
  loop: start=0, step=1, limit=6
  $region2: #{gcn_encoder_forward.8} parent=0 // loop_pre_header
    _
  $region3: #{gcn_encoder_forward.8} parent=0 // loop_header
    %s19 = sphi 0, %s23
    %p20 = scmp.ge.s32.totalorder %s19, 6
    %s26 = sphi 0, %s38
    %s27 = sphi 0, %s34
    %s28 = sphi 0, %s26
    %s29 = sphi 0, %s27
    %s30 = sphi 0, %s28
    %s31 = sphi 0, %s29
    %s43 = sphi 0, %s45
    %s46 = sphi 0, %s43
    %s47 = sphi 0, %s46
    %s63 = sphi 0, %s47
    %s69 = sphi 0, %s71
    %s72 = sphi 0, %s69
    %s73 = sphi 0, %s72
    %s89 = sphi 0, %s73
    %s93 = sphi 0, %s93
    %s95 = sphi 0, %s93
    %s96 = sphi 0, %s95
    %s110 = sphi 0, %s96
    %s114 = sphi 0, %s114
    %s116 = sphi 0, %s114
    %s117 = sphi 0, %s116
    %s131 = sphi 0, %s117
    %s135 = sphi 0, %s135
    %s137 = sphi 0, %s135
    %s138 = sphi 0, %s137
    %s152 = sphi 0, %s138
    %s156 = sphi 0, %s156
    %s158 = sphi 0, %s156
    %s159 = sphi 0, %s158
    %s173 = sphi 0, %s159
    %s179 = sphi 0, %s181
    %s182 = sphi 0, %s179
    %s183 = sphi 0, %s182
    %s199 = sphi 0, %s183
    %s203 = sphi 0, %s203
    %s205 = sphi 0, %s203
    %s206 = sphi 0, %s205
    %s220 = sphi 0, %s206
    %s224 = sphi 0, %s224
    %s226 = sphi 0, %s224
    %s227 = sphi 0, %s226
    %s241 = sphi 0, %s227
    %s249 = sphi 0, %s251
    %s252 = sphi 0, %s249
    %s253 = sphi 0, %s252
    %s269 = sphi 0, %s253
    %s277 = sphi 0, %s279
    %s280 = sphi 0, %s277
    %s281 = sphi 0, %s280
    %s297 = sphi 0, %s281
    %s305 = sphi 0, %s307
    %s308 = sphi 0, %s305
    %s309 = sphi 0, %s308
    %s325 = sphi 0, %s309
    %s333 = sphi 0, %s335
    %s336 = sphi 0, %s333
    %s337 = sphi 0, %s336
    %s353 = sphi 0, %s337
  $region4: #{gcn_encoder_forward.8} parent=0 // loop_header_branch
    %22 = sbr.rel (%p20) target = $region8
  $region5: #{gcn_encoder_forward.8} parent=0 // loop_body
    %s24 = ssub.s32 %s19, 1
    %s25 = ssub.s32 %s19, 2
    %s32 = sadd.s32 1, %s27
    %p33 = scmp.ge.s32.totalorder %s32, 2
    %s34 = scalar_select %p33, 0, %s32
    %s35 = sadd.s32 1, %s26
    %s36 = scalar_select %p33, %s35, %s26
    %p37 = scmp.ge.s32.totalorder %s36, 2
    %s38 = scalar_select %p37, 0, %s36
    %s39 = ssub.s32 %s26, %s38
    %s40 = ssub.s32 %s27, %s34
    %s41 = sor.u32 %s39, %s40
    %p42 = scmp.eq.s32.totalorder %s41, 0
    %s44 = sadd.s32 %s43, 1
    %s45 = scalar_select %p42, %s43, %s44
    %p48 = pneg %p42
    %p49 = scmp.eq.s32.totalorder %s19, 3
    %p50 = por %p48, %p49
    %p51 = scmp.ne.s32.totalorder %s43, %s46
    %p52 = scmp.eq.s32.totalorder %s19, 0
    %p53 = por %p51, %p52
    %p54 = scmp.ne.s32.totalorder %s43, %s46
    %p55 = scmp.eq.s32.totalorder %s24, 3
    %p56 = por %p54, %p55
    %p57 = scmp.ne.s32.totalorder %s46, %s47
    %p58 = scmp.eq.s32.totalorder %s24, 0
    %p59 = por %p57, %p58
    %p60 = scmp.ne.s32.totalorder %s46, %s47
    %p61 = scmp.eq.s32.totalorder %s25, 3
    %p62 = por %p60, %p61
    %p64 = scmp.ne.s32.totalorder %s47, %s63
    %p65 = scmp.eq.s32.totalorder %s25, 0
    %p66 = por %p64, %p65
    %s67 = ssub.s32 %s26, %s38
    %p68 = scmp.eq.s32.totalorder %s67, 0
    %s70 = sadd.s32 %s69, 1
    %s71 = scalar_select %p68, %s69, %s70
    %p74 = pneg %p68
    %p75 = scmp.eq.s32.totalorder %s19, 3
    %p76 = por %p74, %p75
    %p77 = scmp.ne.s32.totalorder %s69, %s72
    %p78 = scmp.eq.s32.totalorder %s19, 0
    %p79 = por %p77, %p78
    %p80 = scmp.ne.s32.totalorder %s69, %s72
    %p81 = scmp.eq.s32.totalorder %s24, 3
    %p82 = por %p80, %p81
    %p83 = scmp.ne.s32.totalorder %s72, %s73
    %p84 = scmp.eq.s32.totalorder %s24, 0
    %p85 = por %p83, %p84
    %p86 = scmp.ne.s32.totalorder %s72, %s73
    %p87 = scmp.eq.s32.totalorder %s25, 3
    %p88 = por %p86, %p87
    %p90 = scmp.ne.s32.totalorder %s73, %s89
    %p91 = scmp.eq.s32.totalorder %s25, 0
    %p92 = por %p90, %p91
    %s94 = sadd.s32 %s93, 1
    %p97 = scmp.eq.s32.totalorder %s19, 3
    %p98 = scmp.ne.s32.totalorder %s93, %s95
    %p99 = scmp.eq.s32.totalorder %s19, 0
    %p100 = por %p98, %p99
    %p101 = scmp.ne.s32.totalorder %s93, %s95
    %p102 = scmp.eq.s32.totalorder %s24, 3
    %p103 = por %p101, %p102
    %p104 = scmp.ne.s32.totalorder %s95, %s96
    %p105 = scmp.eq.s32.totalorder %s24, 0
    %p106 = por %p104, %p105
    %p107 = scmp.ne.s32.totalorder %s95, %s96
    %p108 = scmp.eq.s32.totalorder %s25, 3
    %p109 = por %p107, %p108
    %p111 = scmp.ne.s32.totalorder %s96, %s110
    %p112 = scmp.eq.s32.totalorder %s25, 0
    %p113 = por %p111, %p112
    %s115 = sadd.s32 %s114, 1
    %p118 = scmp.eq.s32.totalorder %s19, 3
    %p119 = scmp.ne.s32.totalorder %s114, %s116
    %p120 = scmp.eq.s32.totalorder %s19, 0
    %p121 = por %p119, %p120
    %p122 = scmp.ne.s32.totalorder %s114, %s116
    %p123 = scmp.eq.s32.totalorder %s24, 3
    %p124 = por %p122, %p123
    %p125 = scmp.ne.s32.totalorder %s116, %s117
    %p126 = scmp.eq.s32.totalorder %s24, 0
    %p127 = por %p125, %p126
    %p128 = scmp.ne.s32.totalorder %s116, %s117
    %p129 = scmp.eq.s32.totalorder %s25, 3
    %p130 = por %p128, %p129
    %p132 = scmp.ne.s32.totalorder %s117, %s131
    %p133 = scmp.eq.s32.totalorder %s25, 0
    %p134 = por %p132, %p133
    %s136 = sadd.s32 %s135, 1
    %p139 = scmp.eq.s32.totalorder %s19, 3
    %p140 = scmp.ne.s32.totalorder %s135, %s137
    %p141 = scmp.eq.s32.totalorder %s19, 0
    %p142 = por %p140, %p141
    %p143 = scmp.ne.s32.totalorder %s135, %s137
    %p144 = scmp.eq.s32.totalorder %s24, 3
    %p145 = por %p143, %p144
    %p146 = scmp.ne.s32.totalorder %s137, %s138
    %p147 = scmp.eq.s32.totalorder %s24, 0
    %p148 = por %p146, %p147
    %p149 = scmp.ne.s32.totalorder %s137, %s138
    %p150 = scmp.eq.s32.totalorder %s25, 3
    %p151 = por %p149, %p150
    %p153 = scmp.ne.s32.totalorder %s138, %s152
    %p154 = scmp.eq.s32.totalorder %s25, 0
    %p155 = por %p153, %p154
    %s157 = sadd.s32 %s156, 1
    %p160 = scmp.eq.s32.totalorder %s19, 3
    %p161 = scmp.ne.s32.totalorder %s156, %s158
    %p162 = scmp.eq.s32.totalorder %s19, 0
    %p163 = por %p161, %p162
    %p164 = scmp.ne.s32.totalorder %s156, %s158
    %p165 = scmp.eq.s32.totalorder %s24, 3
    %p166 = por %p164, %p165
    %p167 = scmp.ne.s32.totalorder %s158, %s159
    %p168 = scmp.eq.s32.totalorder %s24, 0
    %p169 = por %p167, %p168
    %p170 = scmp.ne.s32.totalorder %s158, %s159
    %p171 = scmp.eq.s32.totalorder %s25, 3
    %p172 = por %p170, %p171
    %p174 = scmp.ne.s32.totalorder %s159, %s173
    %p175 = scmp.eq.s32.totalorder %s25, 0
    %p176 = por %p174, %p175
    %s177 = ssub.s32 %s26, %s38
    %p178 = scmp.eq.s32.totalorder %s177, 0
    %s180 = sadd.s32 %s179, 1
    %s181 = scalar_select %p178, %s179, %s180
    %p184 = pneg %p178
    %p185 = scmp.eq.s32.totalorder %s19, 3
    %p186 = por %p184, %p185
    %p187 = scmp.ne.s32.totalorder %s179, %s182
    %p188 = scmp.eq.s32.totalorder %s19, 0
    %p189 = por %p187, %p188
    %p190 = scmp.ne.s32.totalorder %s179, %s182
    %p191 = scmp.eq.s32.totalorder %s24, 3
    %p192 = por %p190, %p191
    %p193 = scmp.ne.s32.totalorder %s182, %s183
    %p194 = scmp.eq.s32.totalorder %s24, 0
    %p195 = por %p193, %p194
    %p196 = scmp.ne.s32.totalorder %s182, %s183
    %p197 = scmp.eq.s32.totalorder %s25, 3
    %p198 = por %p196, %p197
    %p200 = scmp.ne.s32.totalorder %s183, %s199
    %p201 = scmp.eq.s32.totalorder %s25, 0
    %p202 = por %p200, %p201
    %s204 = sadd.s32 %s203, 1
    %p207 = scmp.eq.s32.totalorder %s19, 3
    %p208 = scmp.ne.s32.totalorder %s203, %s205
    %p209 = scmp.eq.s32.totalorder %s19, 0
    %p210 = por %p208, %p209
    %p211 = scmp.ne.s32.totalorder %s203, %s205
    %p212 = scmp.eq.s32.totalorder %s24, 3
    %p213 = por %p211, %p212
    %p214 = scmp.ne.s32.totalorder %s205, %s206
    %p215 = scmp.eq.s32.totalorder %s24, 0
    %p216 = por %p214, %p215
    %p217 = scmp.ne.s32.totalorder %s205, %s206
    %p218 = scmp.eq.s32.totalorder %s25, 3
    %p219 = por %p217, %p218
    %p221 = scmp.ne.s32.totalorder %s206, %s220
    %p222 = scmp.eq.s32.totalorder %s25, 0
    %p223 = por %p221, %p222
    %s225 = sadd.s32 %s224, 1
    %p228 = scmp.eq.s32.totalorder %s19, 3
    %p229 = scmp.ne.s32.totalorder %s224, %s226
    %p230 = scmp.eq.s32.totalorder %s19, 0
    %p231 = por %p229, %p230
    %p232 = scmp.ne.s32.totalorder %s224, %s226
    %p233 = scmp.eq.s32.totalorder %s24, 3
    %p234 = por %p232, %p233
    %p235 = scmp.ne.s32.totalorder %s226, %s227
    %p236 = scmp.eq.s32.totalorder %s24, 0
    %p237 = por %p235, %p236
    %p238 = scmp.ne.s32.totalorder %s226, %s227
    %p239 = scmp.eq.s32.totalorder %s25, 3
    %p240 = por %p238, %p239
    %p242 = scmp.ne.s32.totalorder %s227, %s241
    %p243 = scmp.eq.s32.totalorder %s25, 0
    %p244 = por %p242, %p243
    %s245 = ssub.s32 %s26, %s38
    %s246 = ssub.s32 %s27, %s34
    %s247 = sor.u32 %s245, %s246
    %p248 = scmp.eq.s32.totalorder %s247, 0
    %s250 = sadd.s32 %s249, 1
    %s251 = scalar_select %p248, %s249, %s250
    %p254 = pneg %p248
    %p255 = scmp.eq.s32.totalorder %s19, 3
    %p256 = por %p254, %p255
    %p257 = scmp.ne.s32.totalorder %s249, %s252
    %p258 = scmp.eq.s32.totalorder %s19, 0
    %p259 = por %p257, %p258
    %p260 = scmp.ne.s32.totalorder %s249, %s252
    %p261 = scmp.eq.s32.totalorder %s24, 3
    %p262 = por %p260, %p261
    %p263 = scmp.ne.s32.totalorder %s252, %s253
    %p264 = scmp.eq.s32.totalorder %s24, 0
    %p265 = por %p263, %p264
    %p266 = scmp.ne.s32.totalorder %s252, %s253
    %p267 = scmp.eq.s32.totalorder %s25, 3
    %p268 = por %p266, %p267
    %p270 = scmp.ne.s32.totalorder %s253, %s269
    %p271 = scmp.eq.s32.totalorder %s25, 0
    %p272 = por %p270, %p271
    %s273 = ssub.s32 %s26, %s38
    %s274 = ssub.s32 %s27, %s34
    %s275 = sor.u32 %s273, %s274
    %p276 = scmp.eq.s32.totalorder %s275, 0
    %s278 = sadd.s32 %s277, 1
    %s279 = scalar_select %p276, %s277, %s278
    %p282 = pneg %p276
    %p283 = scmp.eq.s32.totalorder %s19, 3
    %p284 = por %p282, %p283
    %p285 = scmp.ne.s32.totalorder %s277, %s280
    %p286 = scmp.eq.s32.totalorder %s19, 0
    %p287 = por %p285, %p286
    %p288 = scmp.ne.s32.totalorder %s277, %s280
    %p289 = scmp.eq.s32.totalorder %s24, 3
    %p290 = por %p288, %p289
    %p291 = scmp.ne.s32.totalorder %s280, %s281
    %p292 = scmp.eq.s32.totalorder %s24, 0
    %p293 = por %p291, %p292
    %p294 = scmp.ne.s32.totalorder %s280, %s281
    %p295 = scmp.eq.s32.totalorder %s25, 3
    %p296 = por %p294, %p295
    %p298 = scmp.ne.s32.totalorder %s281, %s297
    %p299 = scmp.eq.s32.totalorder %s25, 0
    %p300 = por %p298, %p299
    %s301 = ssub.s32 %s26, %s38
    %s302 = ssub.s32 %s27, %s34
    %s303 = sor.u32 %s301, %s302
    %p304 = scmp.eq.s32.totalorder %s303, 0
    %s306 = sadd.s32 %s305, 1
    %s307 = scalar_select %p304, %s305, %s306
    %p310 = pneg %p304
    %p311 = scmp.eq.s32.totalorder %s19, 3
    %p312 = por %p310, %p311
    %p313 = scmp.ne.s32.totalorder %s305, %s308
    %p314 = scmp.eq.s32.totalorder %s19, 0
    %p315 = por %p313, %p314
    %p316 = scmp.ne.s32.totalorder %s305, %s308
    %p317 = scmp.eq.s32.totalorder %s24, 3
    %p318 = por %p316, %p317
    %p319 = scmp.ne.s32.totalorder %s308, %s309
    %p320 = scmp.eq.s32.totalorder %s24, 0
    %p321 = por %p319, %p320
    %p322 = scmp.ne.s32.totalorder %s308, %s309
    %p323 = scmp.eq.s32.totalorder %s25, 3
    %p324 = por %p322, %p323
    %p326 = scmp.ne.s32.totalorder %s309, %s325
    %p327 = scmp.eq.s32.totalorder %s25, 0
    %p328 = por %p326, %p327
    %s329 = ssub.s32 %s26, %s38
    %s330 = ssub.s32 %s27, %s34
    %s331 = sor.u32 %s329, %s330
    %p332 = scmp.eq.s32.totalorder %s331, 0
    %s334 = sadd.s32 %s333, 1
    %s335 = scalar_select %p332, %s333, %s334
    %p338 = pneg %p332
    %p339 = scmp.eq.s32.totalorder %s19, 3
    %p340 = por %p338, %p339
    %p341 = scmp.ne.s32.totalorder %s333, %s336
    %p342 = scmp.eq.s32.totalorder %s19, 0
    %p343 = por %p341, %p342
    %p344 = scmp.ne.s32.totalorder %s333, %s336
    %p345 = scmp.eq.s32.totalorder %s24, 3
    %p346 = por %p344, %p345
    %p347 = scmp.ne.s32.totalorder %s336, %s337
    %p348 = scmp.eq.s32.totalorder %s24, 0
    %p349 = por %p347, %p348
    %p350 = scmp.ne.s32.totalorder %s336, %s337
    %p351 = scmp.eq.s32.totalorder %s25, 3
    %p352 = por %p350, %p351
    %p354 = scmp.ne.s32.totalorder %s337, %s353
    %p355 = scmp.eq.s32.totalorder %s25, 0
    %p356 = por %p354, %p355
    %p357 = scmp.le.s32.totalorder 1, %s19
    %p358 = scmp.lt.s32.totalorder %s19, 5
    %p359 = pnand %p357, %p358
    %p360 = pneg %p359
    // Predicated region
    $region9: #{gcn_encoder_forward.8} parent=5 // pred_check
      _
    $region10: #{gcn_encoder_forward.8} parent=5 // pred_check_branch
      %362 = sbr.rel (%p359) target = $region12
    $region11: #{gcn_encoder_forward.8} parent=5 // pred_region
      %s363 = ssub.s32 %s19, 1
      // Predicated region
      $region13: #{gcn_encoder_forward.8} parent=11 // pred_check
        %p364 = pneg %p106
      $region14: #{gcn_encoder_forward.8} parent=11 // pred_check_branch
        %366 = sbr.rel (%p364) target = $region16
      $region15: #{gcn_encoder_forward.8} parent=11 // pred_region
        _
      $region16: #{gcn_encoder_forward.8} parent=11 // pred_fallthru
        _
      // Predicated region
      $region17: #{gcn_encoder_forward.8} parent=11 // pred_check
        %p367 = pneg %p127
      $region18: #{gcn_encoder_forward.8} parent=11 // pred_check_branch
        %369 = sbr.rel (%p367) target = $region20
      $region19: #{gcn_encoder_forward.8} parent=11 // pred_region
        _
      $region20: #{gcn_encoder_forward.8} parent=11 // pred_fallthru
        _
      // Predicated region
      $region21: #{gcn_encoder_forward.8} parent=11 // pred_check
        %p370 = pneg %p148
      $region22: #{gcn_encoder_forward.8} parent=11 // pred_check_branch
        %372 = sbr.rel (%p370) target = $region24
      $region23: #{gcn_encoder_forward.8} parent=11 // pred_region
        _
      $region24: #{gcn_encoder_forward.8} parent=11 // pred_fallthru
        _
      // Predicated region
      $region25: #{gcn_encoder_forward.8} parent=11 // pred_check
        %p373 = pneg %p169
      $region26: #{gcn_encoder_forward.8} parent=11 // pred_check_branch
        %375 = sbr.rel (%p373) target = $region28
      $region27: #{gcn_encoder_forward.8} parent=11 // pred_region
        _
      $region28: #{gcn_encoder_forward.8} parent=11 // pred_fallthru
        _
      // Predicated region
      $region29: #{gcn_encoder_forward.8} parent=11 // pred_check
        %p376 = pneg %p216
      $region30: #{gcn_encoder_forward.8} parent=11 // pred_check_branch
        %378 = sbr.rel (%p376) target = $region32
      $region31: #{gcn_encoder_forward.8} parent=11 // pred_region
        _
      $region32: #{gcn_encoder_forward.8} parent=11 // pred_fallthru
        _
      // Predicated region
      $region33: #{gcn_encoder_forward.8} parent=11 // pred_check
        %p379 = pneg %p237
      $region34: #{gcn_encoder_forward.8} parent=11 // pred_check_branch
        %381 = sbr.rel (%p379) target = $region36
      $region35: #{gcn_encoder_forward.8} parent=11 // pred_region
        _
      $region36: #{gcn_encoder_forward.8} parent=11 // pred_fallthru
        _
    $region12: #{gcn_encoder_forward.8} parent=5 // pred_fallthru
      _
    %p382 = scmp.lt.s32.totalorder %s19, 4
    // Predicated region
    $region37: #{gcn_encoder_forward.8} parent=5 // pred_check
      %p383 = pneg %p382
    $region38: #{gcn_encoder_forward.8} parent=5 // pred_check_branch
      %385 = sbr.rel (%p383) target = $region40
    $region39: #{gcn_encoder_forward.8} parent=5 // pred_region
      // Predicated region
      $region41: #{gcn_encoder_forward.8} parent=39 // pred_check
        %p386 = pneg %p53
      $region42: #{gcn_encoder_forward.8} parent=39 // pred_check_branch
        %388 = sbr.rel (%p386) target = $region44
      $region43: #{gcn_encoder_forward.8} parent=39 // pred_region
        %s389 = smul.u32 8, %s27
        %p390 = scmp.lt.s32.totalorder %s26, 1
        %s391 = scalar_select %p390, %s26, 1
        %p392 = scmp.lt.s32.totalorder %s389, 15
        %s393 = scalar_select %p392, %s389, 15
        %s394 = smul.addr %s393, 2
        %s395 = smul.addr %s391, 32
        %s396 = sadd.s32 %s394, %s395
        %s397 = smul.addr %s396, 8
        %s398 = scalar_lea.vmem %s0, %s397
        %s399 = smul.u32 8, %s27
      $region44: #{gcn_encoder_forward.8} parent=39 // pred_fallthru
        _
      // Predicated region
      $region45: #{gcn_encoder_forward.8} parent=39 // pred_check
        %p400 = pneg %p79
      $region46: #{gcn_encoder_forward.8} parent=39 // pred_check_branch
        %402 = sbr.rel (%p400) target = $region48
      $region47: #{gcn_encoder_forward.8} parent=39 // pred_region
        %p403 = scmp.lt.s32.totalorder %s26, 1
        %s404 = scalar_select %p403, %s26, 1
        %s405 = smul.addr %s404, 2
        %s406 = smul.addr %s405, 8
        %s407 = scalar_lea.vmem %s1, %s406
      $region48: #{gcn_encoder_forward.8} parent=39 // pred_fallthru
        _
      // Predicated region
      $region49: #{gcn_encoder_forward.8} parent=39 // pred_check
        %p408 = pneg %p189
      $region50: #{gcn_encoder_forward.8} parent=39 // pred_check_branch
        %410 = sbr.rel (%p408) target = $region52
      $region51: #{gcn_encoder_forward.8} parent=39 // pred_region
        %p411 = scmp.lt.s32.totalorder %s26, 1
        %s412 = scalar_select %p411, %s26, 1
        %s413 = smul.addr %s412, 2
        %s414 = smul.addr %s413, 8
        %s415 = scalar_lea.vmem %s6, %s414
      $region52: #{gcn_encoder_forward.8} parent=39 // pred_fallthru
        _
    $region40: #{gcn_encoder_forward.8} parent=5 // pred_fallthru
      _
    %p416 = scmp.le.s32.totalorder 1, %s19
    %p417 = scmp.lt.s32.totalorder %s19, 5
    %p418 = pnand %p416, %p417
    %p419 = pneg %p418
    // Predicated region
    $region53: #{gcn_encoder_forward.8} parent=5 // pred_check
      _
    $region54: #{gcn_encoder_forward.8} parent=5 // pred_check_branch
      %421 = sbr.rel (%p418) target = $region56
    $region55: #{gcn_encoder_forward.8} parent=5 // pred_region
      %s422 = ssub.s32 %s19, 1
      %s423 = smul.u32 8, %s29
      %p424 = scmp.lt.s32.totalorder %s28, 1
      %s425 = scalar_select %p424, %s28, 1
      %p426 = scmp.lt.s32.totalorder %s423, 15
      %s427 = scalar_select %p426, %s423, 15
      %s428 = smul.addr %s427, 2
      %s429 = smul.addr %s425, 32
      %s430 = sadd.s32 %s428, %s429
      %s431 = smul.addr %s430, 8
      %s432 = scalar_lea.vmem %s0, %s431
      %p433 = pneg %p59
      %p434 = pneg %p56
      %p435 = scmp.lt.s32.totalorder %s28, 1
      %s436 = scalar_select %p435, %s28, 1
      %s437 = smul.addr %s436, 2
      %s438 = smul.addr %s437, 8
      %s439 = scalar_lea.vmem %s1, %s438
      %p440 = pneg %p85
      %p441 = pneg %p82
      %p442 = pneg %p106
      %p443 = pneg %p103
      %p444 = pneg %p127
      %p445 = pneg %p124
      %p446 = pneg %p148
      %p447 = pneg %p145
      %p448 = pneg %p169
      %p449 = pneg %p166
      %p450 = scmp.lt.s32.totalorder %s28, 1
      %s451 = scalar_select %p450, %s28, 1
      %s452 = smul.addr %s451, 2
      %s453 = smul.addr %s452, 8
      %s454 = scalar_lea.vmem %s6, %s453
      %p455 = pneg %p195
      %p456 = pneg %p192
      %p457 = pneg %p216
      %p458 = pneg %p213
      %p459 = pneg %p237
      %p460 = pneg %p234
      %p461 = pneg %p265
      %p462 = pneg %p262
      %s463 = smul.u32 8, %s29
      %p464 = scmp.lt.s32.totalorder %s28, 1
      %s465 = scalar_select %p464, %s28, 1
      %p466 = scmp.lt.s32.totalorder %s463, 15
      %s467 = scalar_select %p466, %s463, 15
      %s468 = smul.addr %s467, 2
      %s469 = smul.addr %s465, 32
      %s470 = sadd.s32 %s468, %s469
      %s471 = smul.addr %s470, 8
      %s472 = scalar_lea.vmem %s9, %s471
      %p473 = pneg %p293
      %p474 = pneg %p290
      %p475 = scmp.lt.s32.totalorder %s28, 1
      %s476 = scalar_select %p475, %s28, 1
      %p477 = scmp.lt.s32.totalorder %s29, 1
      %s478 = scalar_select %p477, %s29, 1
      %s479 = smul.addr %s476, 2
      %s480 = sadd.s32 %s478, %s479
      %s481 = smul.addr %s480, 8
      %s482 = scalar_lea.vmem %s10, %s481
      %p483 = pneg %p321
      %p484 = pneg %p318
      %p485 = scmp.lt.s32.totalorder %s28, 1
      %s486 = scalar_select %p485, %s28, 1
      %p487 = scmp.lt.s32.totalorder %s29, 1
      %s488 = scalar_select %p487, %s29, 1
      %s489 = smul.addr %s486, 2
      %s490 = sadd.s32 %s488, %s489
      %s491 = smul.addr %s490, 8
      %s492 = scalar_lea.vmem %s11, %s491
      %p493 = pneg %p349
      %p494 = pneg %p346
      %p495 = scmp.lt.s32.totalorder %s28, 1
      %s496 = scalar_select %p495, %s28, 1
      %p497 = scmp.lt.s32.totalorder %s29, 1
      %s498 = scalar_select %p497, %s29, 1
      %s499 = smul.addr %s496, 2
      %s500 = sadd.s32 %s498, %s499
      %s501 = smul.addr %s500, 8
      %s502 = scalar_lea.vmem %s12, %s501
      %s503 = smul.u32 8, %s29
      %p504 = scmp.lt.s32.totalorder %s28, 1
      %s505 = scalar_select %p504, %s28, 1
      %p506 = scmp.lt.s32.totalorder %s503, 15
      %s507 = scalar_select %p506, %s503, 15
      %s508 = smul.addr %s507, 2
      %s509 = smul.addr %s505, 32
      %s510 = sadd.s32 %s508, %s509
      %s511 = smul.addr %s510, 8
      %s512 = scalar_lea.vmem %s0, %s511
      %s513 = smul.u32 8, %s29
      %p514 = scmp.lt.s32.totalorder %s28, 1
      %s515 = scalar_select %p514, %s28, 1
      %s516 = smul.addr %s515, 2
      %s517 = smul.addr %s516, 8
      %s518 = scalar_lea.vmem %s1, %s517
      %p519 = scmp.lt.s32.totalorder %s28, 1
      %s520 = scalar_select %p519, %s28, 1
      %s521 = smul.addr %s520, 2
      %s522 = smul.addr %s521, 8
      %s523 = scalar_lea.vmem %s6, %s522
      %s524 = smul.u32 8, %s29
      %p525 = scmp.lt.s32.totalorder %s28, 1
      %s526 = scalar_select %p525, %s28, 1
      %p527 = scmp.lt.s32.totalorder %s524, 15
      %s528 = scalar_select %p527, %s524, 15
      %s529 = smul.addr %s528, 2
      %s530 = smul.addr %s526, 32
      %s531 = sadd.s32 %s529, %s530
      %s532 = smul.addr %s531, 8
      %s533 = scalar_lea.vmem %s9, %s532
      %s534 = smul.u32 8, %s29
      %p535 = scmp.lt.s32.totalorder %s28, 1
      %s536 = scalar_select %p535, %s28, 1
      %p537 = scmp.lt.s32.totalorder %s29, 1
      %s538 = scalar_select %p537, %s29, 1
      %s539 = smul.addr %s536, 2
      %s540 = sadd.s32 %s538, %s539
      %s541 = smul.addr %s540, 8
      %s542 = scalar_lea.vmem %s10, %s541
      %p543 = scmp.lt.s32.totalorder %s28, 1
      %s544 = scalar_select %p543, %s28, 1
      %p545 = scmp.lt.s32.totalorder %s29, 1
      %s546 = scalar_select %p545, %s29, 1
      %s547 = smul.addr %s544, 2
      %s548 = sadd.s32 %s546, %s547
      %s549 = smul.addr %s548, 8
      %s550 = scalar_lea.vmem %s11, %s549
      %p551 = scmp.lt.s32.totalorder %s28, 1
      %s552 = scalar_select %p551, %s28, 1
      %p553 = scmp.lt.s32.totalorder %s29, 1
      %s554 = scalar_select %p553, %s29, 1
      %s555 = smul.addr %s552, 2
      %s556 = sadd.s32 %s554, %s555
      %s557 = smul.addr %s556, 8
      %s558 = scalar_lea.vmem %s12, %s557
      %s559 = smul.u32 %s29, 8
      %v560 = vld [vmem:[%s512] sm:$0xff]
      %v561 = vld [vmem:[%s512 + $0x8] sm:$0xff]
      %v562 = vld [vmem:[%s512 + $0x10] sm:$0xff]
      %v563 = vld [vmem:[%s512 + $0x18] sm:$0xff]
      %v564 = vld [vmem:[%s512 + $0x20] sm:$0xff]
      %v565 = vld [vmem:[%s512 + $0x28] sm:$0xff]
      %v566 = vld [vmem:[%s512 + $0x30] sm:$0xff]
      %v567 = vld [vmem:[%s512 + $0x38] sm:$0xff]
      %v568 = vld [vmem:[%s512 + $0x40] sm:$0xff]
      %v569 = vld [vmem:[%s512 + $0x48] sm:$0xff]
      %v570 = vld [vmem:[%s512 + $0x50] sm:$0xff]
      %v571 = vld [vmem:[%s512 + $0x58] sm:$0xff]
      %v572 = vld [vmem:[%s512 + $0x60] sm:$0xff]
      %v573 = vld [vmem:[%s512 + $0x68] sm:$0xff]
      %v574 = vld [vmem:[%s512 + $0x70] sm:$0xff]
      %v575 = vld [vmem:[%s512 + $0x78] sm:$0xff]
      %v576 = vld [vmem:[%s2] sm:$0xff]
      %v577 = vld [vmem:[%s2 + $0x8] sm:$0xff]
      %v578 = vld [vmem:[%s2 + $0x10] sm:$0xff]
      %v579 = vld [vmem:[%s2 + $0x18] sm:$0xff]
      %v580 = vld [vmem:[%s2 + $0x20] sm:$0xff]
      %v581 = vld [vmem:[%s2 + $0x28] sm:$0xff]
      %v582 = vld [vmem:[%s2 + $0x30] sm:$0xff]
      %v583 = vld [vmem:[%s2 + $0x38] sm:$0xff]
      %v584 = vld [vmem:[%s2 + $0x40] sm:$0xff]
      %v585 = vld [vmem:[%s2 + $0x48] sm:$0xff]
      %v586 = vld [vmem:[%s2 + $0x50] sm:$0xff]
      %v587 = vld [vmem:[%s2 + $0x58] sm:$0xff]
      %v588 = vld [vmem:[%s2 + $0x60] sm:$0xff]
      %v589 = vld [vmem:[%s2 + $0x68] sm:$0xff]
      %v590 = vld [vmem:[%s2 + $0x70] sm:$0xff]
      %v591 = vld [vmem:[%s2 + $0x78] sm:$0xff]
      %v592 = vld [vmem:[%s3] sm:$0x1]
      %v594 = vlaneseq
      %v595 = vshrl.u32 %v594, 7
      %v596 = vsub.s32 0, %v595
      %v597 = vrot.slane %v592, %v596
      %599 = vmatprep.subr.mxu0 0.0
      %600 = vmatpush1.msra.mxu0 %v591
      %601 = vmatprep.subr.mxu0 0.0
      %602 = vmatpush1.msra.mxu0 %v590
      %603 = vmatprep.subr.mxu0 0.0
      %604 = vmatpush1.msra.mxu0 %v589
      %605 = vmatprep.subr.mxu0 0.0
      %606 = vmatpush1.msra.mxu0 %v588
      %607 = vmatprep.subr.mxu0 0.0
      %608 = vmatpush1.msra.mxu0 %v587
      %609 = vmatprep.subr.mxu0 0.0
      %610 = vmatpush1.msra.mxu0 %v586
      %611 = vmatprep.subr.mxu0 0.0
      %612 = vmatpush1.msra.mxu0 %v585
      %613 = vmatprep.subr.mxu0 0.0
      %614 = vmatpush1.msra.mxu0 %v584
      %615 = vmatprep.subr.mxu0 0.0
      %616 = vmatpush1.msra.mxu0 %v583
      %617 = vmatprep.subr.mxu0 0.0
      %618 = vmatpush1.msra.mxu0 %v582
      %619 = vmatprep.subr.mxu0 0.0
      %620 = vmatpush1.msra.mxu0 %v581
      %621 = vmatprep.subr.mxu0 0.0
      %622 = vmatpush1.msra.mxu0 %v580
      %623 = vmatprep.subr.mxu0 0.0
      %624 = vmatpush1.msra.mxu0 %v579
      %625 = vmatprep.subr.mxu0 0.0
      %626 = vmatpush1.msra.mxu0 %v578
      %627 = vmatprep.subr.mxu0 0.0
      %628 = vmatpush1.msra.mxu0 %v577
      %629 = vmatprep.subr.mxu0 0.0
      %630 = vmatpush1.msra.mxu0 %v576
      %631 = vmatprep.subr.mxu0 0.0
      %632 = vmatpush2.msra.mxu0 0.0
      %633 = vmatprep.subr.mxu0 0.0
      %634 = vmatpush2.msra.mxu0 0.0
      %635 = vmatprep.subr.mxu0 0.0
      %636 = vmatpush2.msra.mxu0 0.0
      %637 = vmatprep.subr.mxu0 0.0
      %638 = vmatpush2.msra.mxu0 0.0
      %639 = vmatprep.subr.mxu0 0.0
      %640 = vmatpush2.msra.mxu0 0.0
      %641 = vmatprep.subr.mxu0 0.0
      %642 = vmatpush2.msra.mxu0 0.0
      %643 = vmatprep.subr.mxu0 0.0
      %644 = vmatpush2.msra.mxu0 0.0
      %645 = vmatprep.subr.mxu0 0.0
      %646 = vmatpush2.msra.mxu0 0.0
      %647 = vmatprep.subr.mxu0 0.0
      %648 = vmatpush2.msra.mxu0 0.0
      %649 = vmatprep.subr.mxu0 0.0
      %650 = vmatpush2.msra.mxu0 0.0
      %651 = vmatprep.subr.mxu0 0.0
      %652 = vmatpush2.msra.mxu0 0.0
      %653 = vmatprep.subr.mxu0 0.0
      %654 = vmatpush2.msra.mxu0 0.0
      %655 = vmatprep.subr.mxu0 0.0
      %656 = vmatpush2.msra.mxu0 0.0
      %657 = vmatprep.subr.mxu0 0.0
      %658 = vmatpush2.msra.mxu0 0.0
      %659 = vmatprep.subr.mxu0 0.0
      %660 = vmatpush2.msra.mxu0 0.0
      %661 = vmatprep.subr.mxu0 0.0
      %662 = vmatpush2.msra.mxu0 0.0
      %663 = vmatprep.mubr.f32.mxu0 0.0
      %664 = vmatmul.mubr.f32.gmra.mxu0 %v560
      %v665 = vpop.f32.mrf.mxu0
      %v666 = vadd.f32 %v597, %v665
      %v667 = vpop.f32.mrf.mxu0
      %668 = vmatprep.mubr.f32.mxu0 0.0
      %669 = vmatmul.mubr.f32.gmra.mxu0 %v561
      %v670 = vpop.f32.mrf.mxu0
      %v671 = vadd.f32 %v597, %v670
      %v672 = vpop.f32.mrf.mxu0
      %673 = vmatprep.mubr.f32.mxu0 0.0
      %674 = vmatmul.mubr.f32.gmra.mxu0 %v562
      %v675 = vpop.f32.mrf.mxu0
      %v676 = vadd.f32 %v597, %v675
      %v677 = vpop.f32.mrf.mxu0
      %678 = vmatprep.mubr.f32.mxu0 0.0
      %679 = vmatmul.mubr.f32.gmra.mxu0 %v563
      %v680 = vpop.f32.mrf.mxu0
      %v681 = vadd.f32 %v597, %v680
      %v682 = vpop.f32.mrf.mxu0
      %683 = vmatprep.mubr.f32.mxu0 0.0
      %684 = vmatmul.mubr.f32.gmra.mxu0 %v564
      %v685 = vpop.f32.mrf.mxu0
      %v686 = vadd.f32 %v597, %v685
      %v687 = vpop.f32.mrf.mxu0
      %688 = vmatprep.mubr.f32.mxu0 0.0
      %689 = vmatmul.mubr.f32.gmra.mxu0 %v565
      %v690 = vpop.f32.mrf.mxu0
      %v691 = vadd.f32 %v597, %v690
      %v692 = vpop.f32.mrf.mxu0
      %693 = vmatprep.mubr.f32.mxu0 0.0
      %694 = vmatmul.mubr.f32.gmra.mxu0 %v566
      %v695 = vpop.f32.mrf.mxu0
      %v696 = vadd.f32 %v597, %v695
      %v697 = vpop.f32.mrf.mxu0
      %698 = vmatprep.mubr.f32.mxu0 0.0
      %699 = vmatmul.mubr.f32.gmra.mxu0 %v567
      %v700 = vpop.f32.mrf.mxu0
      %v701 = vadd.f32 %v597, %v700
      %v702 = vpop.f32.mrf.mxu0
      %703 = vmatprep.mubr.f32.mxu0 0.0
      %704 = vmatmul.mubr.f32.gmra.mxu0 %v568
      %v705 = vpop.f32.mrf.mxu0
      %v706 = vadd.f32 %v597, %v705
      %v707 = vpop.f32.mrf.mxu0
      %708 = vmatprep.mubr.f32.mxu0 0.0
      %709 = vmatmul.mubr.f32.gmra.mxu0 %v569
      %v710 = vpop.f32.mrf.mxu0
      %v711 = vadd.f32 %v597, %v710
      %v712 = vpop.f32.mrf.mxu0
      %713 = vmatprep.mubr.f32.mxu0 0.0
      %714 = vmatmul.mubr.f32.gmra.mxu0 %v570
      %v715 = vpop.f32.mrf.mxu0
      %v716 = vadd.f32 %v597, %v715
      %v717 = vpop.f32.mrf.mxu0
      %718 = vmatprep.mubr.f32.mxu0 0.0
      %719 = vmatmul.mubr.f32.gmra.mxu0 %v571
      %v720 = vpop.f32.mrf.mxu0
      %v721 = vadd.f32 %v597, %v720
      %v722 = vpop.f32.mrf.mxu0
      %723 = vmatprep.mubr.f32.mxu0 0.0
      %724 = vmatmul.mubr.f32.gmra.mxu0 %v572
      %v725 = vpop.f32.mrf.mxu0
      %v726 = vadd.f32 %v597, %v725
      %v727 = vpop.f32.mrf.mxu0
      %728 = vmatprep.mubr.f32.mxu0 0.0
      %729 = vmatmul.mubr.f32.gmra.mxu0 %v573
      %v730 = vpop.f32.mrf.mxu0
      %v731 = vadd.f32 %v597, %v730
      %v732 = vpop.f32.mrf.mxu0
      %733 = vmatprep.mubr.f32.mxu0 0.0
      %734 = vmatmul.mubr.f32.gmra.mxu0 %v574
      %v735 = vpop.f32.mrf.mxu0
      %v736 = vadd.f32 %v597, %v735
      %v737 = vpop.f32.mrf.mxu0
      %738 = vmatprep.mubr.f32.mxu0 0.0
      %739 = vmatmul.mubr.f32.gmra.mxu0 %v575
      %v740 = vpop.f32.mrf.mxu0
      %v741 = vadd.f32 %v597, %v740
      %v742 = vpop.f32.mrf.mxu0
      %743 = vdwg.mxu0
      %v744 = vld [vmem:[%s518] sm:$0xff]
      %v745 = vld [vmem:[%s518 + $0x8] sm:$0xff]
      %s746 = scalar_lea.vmem %s518, %s559
      %v747 = vld [vmem:[%s746] sm:$0xff]
      %v748 = vadd.f32 %v666, %v744
      %v749 = vadd.f32 %v671, %v745
      %v750 = vadd.f32 %v676, %v744
      %v751 = vadd.f32 %v681, %v745
      %v752 = vadd.f32 %v686, %v744
      %v753 = vadd.f32 %v691, %v745
      %v754 = vadd.f32 %v696, %v744
      %v755 = vadd.f32 %v701, %v745
      %v756 = vadd.f32 %v706, %v744
      %v757 = vadd.f32 %v711, %v745
      %v758 = vadd.f32 %v716, %v744
      %v759 = vadd.f32 %v721, %v745
      %v760 = vadd.f32 %v726, %v744
      %v761 = vadd.f32 %v731, %v745
      %v762 = vadd.f32 %v736, %v744
      %v763 = vadd.f32 %v741, %v745
      %v765 = vcombine.high %v747, %v747
      %v767 = vunpack.c.l.s4 1966171168
      %v768 = vunpack.c.0.s8 %v767
      %v769 = vlaneseq
      %v770 = vshrl.u32 %v769, 7
      %v771 = vsub.s32 %v768, %v770
      %v772 = vrot.slane %v747, %v771
      %v774 = vunpack.c.l.s4 1966171168
      %v775 = vunpack.c.0.s8 %v774
      %v776 = vlaneseq
      %v777 = vshrl.u32 %v776, 7
      %v778 = vsub.s32 %v775, %v777
      %v779 = vrot.slane %v765, %v778
      %v780 = vcombine.high %v772, %v772
      %v781 = vcombine.high %v779, %v779
      %v783 = vunpack.c.l.s4 1966171168
      %v784 = vunpack.c.0.s8 %v783
      %v785 = vlaneseq
      %v786 = vshrl.u32 %v785, 7
      %v787 = vsub.s32 %v784, %v786
      %v788 = vrot.slane %v772, %v787
      %v790 = vunpack.c.l.s4 1966171168
      %v791 = vunpack.c.0.s8 %v790
      %v792 = vlaneseq
      %v793 = vshrl.u32 %v792, 7
      %v794 = vsub.s32 %v791, %v793
      %v795 = vrot.slane %v779, %v794
      %v797 = vunpack.c.l.s4 1966171168
      %v798 = vunpack.c.0.s8 %v797
      %v799 = vlaneseq
      %v800 = vshrl.u32 %v799, 7
      %v801 = vsub.s32 %v798, %v800
      %v802 = vrot.slane %v780, %v801
      %v804 = vunpack.c.l.s4 1966171168
      %v805 = vunpack.c.0.s8 %v804
      %v806 = vlaneseq
      %v807 = vshrl.u32 %v806, 7
      %v808 = vsub.s32 %v805, %v807
      %v809 = vrot.slane %v781, %v808
      %v810 = vcombine.high %v788, %v788
      %v811 = vcombine.high %v795, %v795
      %v812 = vcombine.high %v802, %v802
      %v813 = vcombine.high %v809, %v809
      %v814 = vlaneseq
      %v815 = vshrl.u32 %v814, 7
      %v816 = vsub.s32 0, %v815
      %v817 = vrot.slane %v788, %v816
      %v818 = vlaneseq
      %v819 = vshrl.u32 %v818, 7
      %v820 = vsub.s32 0, %v819
      %v821 = vrot.slane %v802, %v820
      %v822 = vlaneseq
      %v823 = vshrl.u32 %v822, 7
      %v824 = vsub.s32 0, %v823
      %v825 = vrot.slane %v810, %v824
      %v826 = vlaneseq
      %v827 = vshrl.u32 %v826, 7
      %v828 = vsub.s32 0, %v827
      %v829 = vrot.slane %v812, %v828
      %v830 = vlaneseq
      %v831 = vshrl.u32 %v830, 7
      %v832 = vsub.s32 0, %v831
      %v833 = vrot.slane %v795, %v832
      %v834 = vlaneseq
      %v835 = vshrl.u32 %v834, 7
      %v836 = vsub.s32 0, %v835
      %v837 = vrot.slane %v809, %v836
      %v838 = vlaneseq
      %v839 = vshrl.u32 %v838, 7
      %v840 = vsub.s32 0, %v839
      %v841 = vrot.slane %v811, %v840
      %v842 = vlaneseq
      %v843 = vshrl.u32 %v842, 7
      %v844 = vsub.s32 0, %v843
      %v845 = vrot.slane %v813, %v844
      %v854 = vadd.f32 %v748, %v817
      %v855 = vadd.f32 %v749, %v817
      %v856 = vadd.f32 %v750, %v821
      %v857 = vadd.f32 %v751, %v821
      %v858 = vadd.f32 %v752, %v825
      %v859 = vadd.f32 %v753, %v825
      %v860 = vadd.f32 %v754, %v829
      %v861 = vadd.f32 %v755, %v829
      %v862 = vadd.f32 %v756, %v833
      %v863 = vadd.f32 %v757, %v833
      %v864 = vadd.f32 %v758, %v837
      %v865 = vadd.f32 %v759, %v837
      %v866 = vadd.f32 %v760, %v841
      %v867 = vadd.f32 %v761, %v841
      %v868 = vadd.f32 %v762, %v845
      %v869 = vadd.f32 %v763, %v845
      %v870 = vld [vmem:[%s4] sm:$0x1]
      %v872 = vlaneseq
      %v873 = vshrl.u32 %v872, 7
      %v874 = vsub.s32 0, %v873
      %v875 = vrot.slane %v870, %v874
      %v877 = vmul.f32 %v854, %v875
      %v878 = vmul.f32 %v855, %v875
      %v879 = vmul.f32 %v856, %v875
      %v880 = vmul.f32 %v857, %v875
      %v881 = vmul.f32 %v858, %v875
      %v882 = vmul.f32 %v859, %v875
      %v883 = vmul.f32 %v860, %v875
      %v884 = vmul.f32 %v861, %v875
      %v885 = vmul.f32 %v862, %v875
      %v886 = vmul.f32 %v863, %v875
      %v887 = vmul.f32 %v864, %v875
      %v888 = vmul.f32 %v865, %v875
      %v889 = vmul.f32 %v866, %v875
      %v890 = vmul.f32 %v867, %v875
      %v891 = vmul.f32 %v868, %v875
      %v892 = vmul.f32 %v869, %v875
      %v893 = vld [vmem:[%s5] sm:$0x1]
      %v895 = vlaneseq
      %v896 = vshrl.u32 %v895, 7
      %v897 = vsub.s32 0, %v896
      %v898 = vrot.slane %v893, %v897
      %v900 = vadd.f32 %v877, %v898
      %v901 = vadd.f32 %v878, %v898
      %v902 = vadd.f32 %v879, %v898
      %v903 = vadd.f32 %v880, %v898
      %v904 = vadd.f32 %v881, %v898
      %v905 = vadd.f32 %v882, %v898
      %v906 = vadd.f32 %v883, %v898
      %v907 = vadd.f32 %v884, %v898
      %v908 = vadd.f32 %v885, %v898
      %v909 = vadd.f32 %v886, %v898
      %v910 = vadd.f32 %v887, %v898
      %v911 = vadd.f32 %v888, %v898
      %v912 = vadd.f32 %v889, %v898
      %v913 = vadd.f32 %v890, %v898
      %v914 = vadd.f32 %v891, %v898
      %v915 = vadd.f32 %v892, %v898
      %v916 = vmax.f32 %v900, 0.0
      %v917 = vmax.f32 %v901, 0.0
      %v918 = vmax.f32 %v902, 0.0
      %v919 = vmax.f32 %v903, 0.0
      %v920 = vmax.f32 %v904, 0.0
      %v921 = vmax.f32 %v905, 0.0
      %v922 = vmax.f32 %v906, 0.0
      %v923 = vmax.f32 %v907, 0.0
      %v924 = vmax.f32 %v908, 0.0
      %v925 = vmax.f32 %v909, 0.0
      %v926 = vmax.f32 %v910, 0.0
      %v927 = vmax.f32 %v911, 0.0
      %v928 = vmax.f32 %v912, 0.0
      %v929 = vmax.f32 %v913, 0.0
      %v930 = vmax.f32 %v914, 0.0
      %v931 = vmax.f32 %v915, 0.0
      %v932 = vadd.f32 %v560, %v916
      %v933 = vadd.f32 %v561, %v917
      %v934 = vadd.f32 %v562, %v918
      %v935 = vadd.f32 %v563, %v919
      %v936 = vadd.f32 %v564, %v920
      %v937 = vadd.f32 %v565, %v921
      %v938 = vadd.f32 %v566, %v922
      %v939 = vadd.f32 %v567, %v923
      %v940 = vadd.f32 %v568, %v924
      %v941 = vadd.f32 %v569, %v925
      %v942 = vadd.f32 %v570, %v926
      %v943 = vadd.f32 %v571, %v927
      %v944 = vadd.f32 %v572, %v928
      %v945 = vadd.f32 %v573, %v929
      %v946 = vadd.f32 %v574, %v930
      %v947 = vadd.f32 %v575, %v931
      %948 = vst [vmem:[%s533] sm:$0xff] %v932
      %949 = vst [vmem:[%s533 + $0x8] sm:$0xff] %v933
      %950 = vst [vmem:[%s533 + $0x10] sm:$0xff] %v934
      %951 = vst [vmem:[%s533 + $0x18] sm:$0xff] %v935
      %952 = vst [vmem:[%s533 + $0x20] sm:$0xff] %v936
      %953 = vst [vmem:[%s533 + $0x28] sm:$0xff] %v937
      %954 = vst [vmem:[%s533 + $0x30] sm:$0xff] %v938
      %955 = vst [vmem:[%s533 + $0x38] sm:$0xff] %v939
      %956 = vst [vmem:[%s533 + $0x40] sm:$0xff] %v940
      %957 = vst [vmem:[%s533 + $0x48] sm:$0xff] %v941
      %958 = vst [vmem:[%s533 + $0x50] sm:$0xff] %v942
      %959 = vst [vmem:[%s533 + $0x58] sm:$0xff] %v943
      %960 = vst [vmem:[%s533 + $0x60] sm:$0xff] %v944
      %961 = vst [vmem:[%s533 + $0x68] sm:$0xff] %v945
      %962 = vst [vmem:[%s533 + $0x70] sm:$0xff] %v946
      %963 = vst [vmem:[%s533 + $0x78] sm:$0xff] %v947
      %v964 = vld [vmem:[%s7] sm:$0xff]
      %v965 = vld [vmem:[%s7 + $0x8] sm:$0xff]
      %v966 = vld [vmem:[%s7 + $0x10] sm:$0xff]
      %v967 = vld [vmem:[%s7 + $0x18] sm:$0xff]
      %v968 = vld [vmem:[%s7 + $0x20] sm:$0xff]
      %v969 = vld [vmem:[%s7 + $0x28] sm:$0xff]
      %v970 = vld [vmem:[%s7 + $0x30] sm:$0xff]
      %v971 = vld [vmem:[%s7 + $0x38] sm:$0xff]
      %v972 = vld [vmem:[%s7 + $0x40] sm:$0xff]
      %v973 = vld [vmem:[%s7 + $0x48] sm:$0xff]
      %v974 = vld [vmem:[%s7 + $0x50] sm:$0xff]
      %v975 = vld [vmem:[%s7 + $0x58] sm:$0xff]
      %v976 = vld [vmem:[%s7 + $0x60] sm:$0xff]
      %v977 = vld [vmem:[%s7 + $0x68] sm:$0xff]
      %v978 = vld [vmem:[%s7 + $0x70] sm:$0xff]
      %v979 = vld [vmem:[%s7 + $0x78] sm:$0xff]
      %v980 = vld [vmem:[%s8] sm:$0x1]
      %v982 = vlaneseq
      %v983 = vshrl.u32 %v982, 7
      %v984 = vsub.s32 0, %v983
      %v985 = vrot.slane %v980, %v984
      %987 = vmatprep.subr.mxu0 0.0
      %988 = vmatpush1.msra.mxu0 %v979
      %989 = vmatprep.subr.mxu0 0.0
      %990 = vmatpush1.msra.mxu0 %v978
      %991 = vmatprep.subr.mxu0 0.0
      %992 = vmatpush1.msra.mxu0 %v977
      %993 = vmatprep.subr.mxu0 0.0
      %994 = vmatpush1.msra.mxu0 %v976
      %995 = vmatprep.subr.mxu0 0.0
      %996 = vmatpush1.msra.mxu0 %v975
      %997 = vmatprep.subr.mxu0 0.0
      %998 = vmatpush1.msra.mxu0 %v974
      %999 = vmatprep.subr.mxu0 0.0
      %1000 = vmatpush1.msra.mxu0 %v973
      %1001 = vmatprep.subr.mxu0 0.0
      %1002 = vmatpush1.msra.mxu0 %v972
      %1003 = vmatprep.subr.mxu0 0.0
      %1004 = vmatpush1.msra.mxu0 %v971
      %1005 = vmatprep.subr.mxu0 0.0
      %1006 = vmatpush1.msra.mxu0 %v970
      %1007 = vmatprep.subr.mxu0 0.0
      %1008 = vmatpush1.msra.mxu0 %v969
      %1009 = vmatprep.subr.mxu0 0.0
      %1010 = vmatpush1.msra.mxu0 %v968
      %1011 = vmatprep.subr.mxu0 0.0
      %1012 = vmatpush1.msra.mxu0 %v967
      %1013 = vmatprep.subr.mxu0 0.0
      %1014 = vmatpush1.msra.mxu0 %v966
      %1015 = vmatprep.subr.mxu0 0.0
      %1016 = vmatpush1.msra.mxu0 %v965
      %1017 = vmatprep.subr.mxu0 0.0
      %1018 = vmatpush1.msra.mxu0 %v964
      %1019 = vmatprep.subr.mxu0 0.0
      %1020 = vmatpush2.msra.mxu0 0.0
      %1021 = vmatprep.subr.mxu0 0.0
      %1022 = vmatpush2.msra.mxu0 0.0
      %1023 = vmatprep.subr.mxu0 0.0
      %1024 = vmatpush2.msra.mxu0 0.0
      %1025 = vmatprep.subr.mxu0 0.0
      %1026 = vmatpush2.msra.mxu0 0.0
      %1027 = vmatprep.subr.mxu0 0.0
      %1028 = vmatpush2.msra.mxu0 0.0
      %1029 = vmatprep.subr.mxu0 0.0
      %1030 = vmatpush2.msra.mxu0 0.0
      %1031 = vmatprep.subr.mxu0 0.0
      %1032 = vmatpush2.msra.mxu0 0.0
      %1033 = vmatprep.subr.mxu0 0.0
      %1034 = vmatpush2.msra.mxu0 0.0
      %1035 = vmatprep.subr.mxu0 0.0
      %1036 = vmatpush2.msra.mxu0 0.0
      %1037 = vmatprep.subr.mxu0 0.0
      %1038 = vmatpush2.msra.mxu0 0.0
      %1039 = vmatprep.subr.mxu0 0.0
      %1040 = vmatpush2.msra.mxu0 0.0
      %1041 = vmatprep.subr.mxu0 0.0
      %1042 = vmatpush2.msra.mxu0 0.0
      %1043 = vmatprep.subr.mxu0 0.0
      %1044 = vmatpush2.msra.mxu0 0.0
      %1045 = vmatprep.subr.mxu0 0.0
      %1046 = vmatpush2.msra.mxu0 0.0
      %1047 = vmatprep.subr.mxu0 0.0
      %1048 = vmatpush2.msra.mxu0 0.0
      %1049 = vmatprep.subr.mxu0 0.0
      %1050 = vmatpush2.msra.mxu0 0.0
      %1051 = vmatprep.mubr.f32.mxu0 0.0
      %1052 = vmatmul.mubr.f32.gmra.mxu0 %v932
      %v1053 = vpop.f32.mrf.mxu0
      %v1054 = vadd.f32 %v985, %v1053
      %v1055 = vpop.f32.mrf.mxu0
      %1056 = vmatprep.mubr.f32.mxu0 0.0
      %1057 = vmatmul.mubr.f32.gmra.mxu0 %v933
      %v1058 = vpop.f32.mrf.mxu0
      %v1059 = vadd.f32 %v985, %v1058
      %v1060 = vpop.f32.mrf.mxu0
      %1061 = vmatprep.mubr.f32.mxu0 0.0
      %1062 = vmatmul.mubr.f32.gmra.mxu0 %v934
      %v1063 = vpop.f32.mrf.mxu0
      %v1064 = vadd.f32 %v985, %v1063
      %v1065 = vpop.f32.mrf.mxu0
      %1066 = vmatprep.mubr.f32.mxu0 0.0
      %1067 = vmatmul.mubr.f32.gmra.mxu0 %v935
      %v1068 = vpop.f32.mrf.mxu0
      %v1069 = vadd.f32 %v985, %v1068
      %v1070 = vpop.f32.mrf.mxu0
      %1071 = vmatprep.mubr.f32.mxu0 0.0
      %1072 = vmatmul.mubr.f32.gmra.mxu0 %v936
      %v1073 = vpop.f32.mrf.mxu0
      %v1074 = vadd.f32 %v985, %v1073
      %v1075 = vpop.f32.mrf.mxu0
      %1076 = vmatprep.mubr.f32.mxu0 0.0
      %1077 = vmatmul.mubr.f32.gmra.mxu0 %v937
      %v1078 = vpop.f32.mrf.mxu0
      %v1079 = vadd.f32 %v985, %v1078
      %v1080 = vpop.f32.mrf.mxu0
      %1081 = vmatprep.mubr.f32.mxu0 0.0
      %1082 = vmatmul.mubr.f32.gmra.mxu0 %v938
      %v1083 = vpop.f32.mrf.mxu0
      %v1084 = vadd.f32 %v985, %v1083
      %v1085 = vpop.f32.mrf.mxu0
      %1086 = vmatprep.mubr.f32.mxu0 0.0
      %1087 = vmatmul.mubr.f32.gmra.mxu0 %v939
      %v1088 = vpop.f32.mrf.mxu0
      %v1089 = vadd.f32 %v985, %v1088
      %v1090 = vpop.f32.mrf.mxu0
      %1091 = vmatprep.mubr.f32.mxu0 0.0
      %1092 = vmatmul.mubr.f32.gmra.mxu0 %v940
      %v1093 = vpop.f32.mrf.mxu0
      %v1094 = vadd.f32 %v985, %v1093
      %v1095 = vpop.f32.mrf.mxu0
      %1096 = vmatprep.mubr.f32.mxu0 0.0
      %1097 = vmatmul.mubr.f32.gmra.mxu0 %v941
      %v1098 = vpop.f32.mrf.mxu0
      %v1099 = vadd.f32 %v985, %v1098
      %v1100 = vpop.f32.mrf.mxu0
      %1101 = vmatprep.mubr.f32.mxu0 0.0
      %1102 = vmatmul.mubr.f32.gmra.mxu0 %v942
      %v1103 = vpop.f32.mrf.mxu0
      %v1104 = vadd.f32 %v985, %v1103
      %v1105 = vpop.f32.mrf.mxu0
      %1106 = vmatprep.mubr.f32.mxu0 0.0
      %1107 = vmatmul.mubr.f32.gmra.mxu0 %v943
      %v1108 = vpop.f32.mrf.mxu0
      %v1109 = vadd.f32 %v985, %v1108
      %v1110 = vpop.f32.mrf.mxu0
      %1111 = vmatprep.mubr.f32.mxu0 0.0
      %1112 = vmatmul.mubr.f32.gmra.mxu0 %v944
      %v1113 = vpop.f32.mrf.mxu0
      %v1114 = vadd.f32 %v985, %v1113
      %v1115 = vpop.f32.mrf.mxu0
      %1116 = vmatprep.mubr.f32.mxu0 0.0
      %1117 = vmatmul.mubr.f32.gmra.mxu0 %v945
      %v1118 = vpop.f32.mrf.mxu0
      %v1119 = vadd.f32 %v985, %v1118
      %v1120 = vpop.f32.mrf.mxu0
      %1121 = vmatprep.mubr.f32.mxu0 0.0
      %1122 = vmatmul.mubr.f32.gmra.mxu0 %v946
      %v1123 = vpop.f32.mrf.mxu0
      %v1124 = vadd.f32 %v985, %v1123
      %v1125 = vpop.f32.mrf.mxu0
      %1126 = vmatprep.mubr.f32.mxu0 0.0
      %1127 = vmatmul.mubr.f32.gmra.mxu0 %v947
      %v1128 = vpop.f32.mrf.mxu0
      %v1129 = vadd.f32 %v985, %v1128
      %v1130 = vpop.f32.mrf.mxu0
      %1131 = vdwg.mxu0
      %v1132 = vld [vmem:[%s523] sm:$0xff]
      %v1133 = vld [vmem:[%s523 + $0x8] sm:$0xff]
      %s1134 = scalar_lea.vmem %s523, %s559
      %v1135 = vld [vmem:[%s1134] sm:$0xff]
      %v1136 = vadd.f32 %v1054, %v1132
      %v1137 = vadd.f32 %v1059, %v1133
      %v1138 = vadd.f32 %v1064, %v1132
      %v1139 = vadd.f32 %v1069, %v1133
      %v1140 = vadd.f32 %v1074, %v1132
      %v1141 = vadd.f32 %v1079, %v1133
      %v1142 = vadd.f32 %v1084, %v1132
      %v1143 = vadd.f32 %v1089, %v1133
      %v1144 = vadd.f32 %v1094, %v1132
      %v1145 = vadd.f32 %v1099, %v1133
      %v1146 = vadd.f32 %v1104, %v1132
      %v1147 = vadd.f32 %v1109, %v1133
      %v1148 = vadd.f32 %v1114, %v1132
      %v1149 = vadd.f32 %v1119, %v1133
      %v1150 = vadd.f32 %v1124, %v1132
      %v1151 = vadd.f32 %v1129, %v1133
      %v1153 = vcombine.high %v1135, %v1135
      %v1155 = vunpack.c.l.s4 1966171168
      %v1156 = vunpack.c.0.s8 %v1155
      %v1157 = vlaneseq
      %v1158 = vshrl.u32 %v1157, 7
      %v1159 = vsub.s32 %v1156, %v1158
      %v1160 = vrot.slane %v1135, %v1159
      %v1162 = vunpack.c.l.s4 1966171168
      %v1163 = vunpack.c.0.s8 %v1162
      %v1164 = vlaneseq
      %v1165 = vshrl.u32 %v1164, 7
      %v1166 = vsub.s32 %v1163, %v1165
      %v1167 = vrot.slane %v1153, %v1166
      %v1168 = vcombine.high %v1160, %v1160
      %v1169 = vcombine.high %v1167, %v1167
      %v1171 = vunpack.c.l.s4 1966171168
      %v1172 = vunpack.c.0.s8 %v1171
      %v1173 = vlaneseq
      %v1174 = vshrl.u32 %v1173, 7
      %v1175 = vsub.s32 %v1172, %v1174
      %v1176 = vrot.slane %v1160, %v1175
      %v1178 = vunpack.c.l.s4 1966171168
      %v1179 = vunpack.c.0.s8 %v1178
      %v1180 = vlaneseq
      %v1181 = vshrl.u32 %v1180, 7
      %v1182 = vsub.s32 %v1179, %v1181
      %v1183 = vrot.slane %v1167, %v1182
      %v1185 = vunpack.c.l.s4 1966171168
      %v1186 = vunpack.c.0.s8 %v1185
      %v1187 = vlaneseq
      %v1188 = vshrl.u32 %v1187, 7
      %v1189 = vsub.s32 %v1186, %v1188
      %v1190 = vrot.slane %v1168, %v1189
      %v1192 = vunpack.c.l.s4 1966171168
      %v1193 = vunpack.c.0.s8 %v1192
      %v1194 = vlaneseq
      %v1195 = vshrl.u32 %v1194, 7
      %v1196 = vsub.s32 %v1193, %v1195
      %v1197 = vrot.slane %v1169, %v1196
      %v1198 = vcombine.high %v1176, %v1176
      %v1199 = vcombine.high %v1183, %v1183
      %v1200 = vcombine.high %v1190, %v1190
      %v1201 = vcombine.high %v1197, %v1197
      %v1202 = vlaneseq
      %v1203 = vshrl.u32 %v1202, 7
      %v1204 = vsub.s32 0, %v1203
      %v1205 = vrot.slane %v1176, %v1204
      %v1206 = vlaneseq
      %v1207 = vshrl.u32 %v1206, 7
      %v1208 = vsub.s32 0, %v1207
      %v1209 = vrot.slane %v1190, %v1208
      %v1210 = vlaneseq
      %v1211 = vshrl.u32 %v1210, 7
      %v1212 = vsub.s32 0, %v1211
      %v1213 = vrot.slane %v1198, %v1212
      %v1214 = vlaneseq
      %v1215 = vshrl.u32 %v1214, 7
      %v1216 = vsub.s32 0, %v1215
      %v1217 = vrot.slane %v1200, %v1216
      %v1218 = vlaneseq
      %v1219 = vshrl.u32 %v1218, 7
      %v1220 = vsub.s32 0, %v1219
      %v1221 = vrot.slane %v1183, %v1220
      %v1222 = vlaneseq
      %v1223 = vshrl.u32 %v1222, 7
      %v1224 = vsub.s32 0, %v1223
      %v1225 = vrot.slane %v1197, %v1224
      %v1226 = vlaneseq
      %v1227 = vshrl.u32 %v1226, 7
      %v1228 = vsub.s32 0, %v1227
      %v1229 = vrot.slane %v1199, %v1228
      %v1230 = vlaneseq
      %v1231 = vshrl.u32 %v1230, 7
      %v1232 = vsub.s32 0, %v1231
      %v1233 = vrot.slane %v1201, %v1232
      %v1242 = vadd.f32 %v1136, %v1205
      %v1243 = vadd.f32 %v1137, %v1205
      %v1244 = vadd.f32 %v1138, %v1209
      %v1245 = vadd.f32 %v1139, %v1209
      %v1246 = vadd.f32 %v1140, %v1213
      %v1247 = vadd.f32 %v1141, %v1213
      %v1248 = vadd.f32 %v1142, %v1217
      %v1249 = vadd.f32 %v1143, %v1217
      %v1250 = vadd.f32 %v1144, %v1221
      %v1251 = vadd.f32 %v1145, %v1221
      %v1252 = vadd.f32 %v1146, %v1225
      %v1253 = vadd.f32 %v1147, %v1225
      %v1254 = vadd.f32 %v1148, %v1229
      %v1255 = vadd.f32 %v1149, %v1229
      %v1256 = vadd.f32 %v1150, %v1233
      %v1257 = vadd.f32 %v1151, %v1233
      %v1258 = vmul.f32 %v1242, 0.5
      %v1259 = vmul.f32 %v1243, 0.5
      %v1260 = vmul.f32 %v1244, 0.5
      %v1261 = vmul.f32 %v1245, 0.5
      %v1262 = vmul.f32 %v1246, 0.5
      %v1263 = vmul.f32 %v1247, 0.5
      %v1264 = vmul.f32 %v1248, 0.5
      %v1265 = vmul.f32 %v1249, 0.5
      %v1266 = vmul.f32 %v1250, 0.5
      %v1267 = vmul.f32 %v1251, 0.5
      %v1268 = vmul.f32 %v1252, 0.5
      %v1269 = vmul.f32 %v1253, 0.5
      %v1270 = vmul.f32 %v1254, 0.5
      %v1271 = vmul.f32 %v1255, 0.5
      %v1272 = vmul.f32 %v1256, 0.5
      %v1273 = vmul.f32 %v1257, 0.5
      %v1274 = vtanh.pop %v1258
      %v1275 = vtanh.pop %v1259
      %v1276 = vtanh.pop %v1260
      %v1277 = vtanh.pop %v1261
      %v1278 = vtanh.pop %v1262
      %v1279 = vtanh.pop %v1263
      %v1280 = vtanh.pop %v1264
      %v1281 = vtanh.pop %v1265
      %v1282 = vtanh.pop %v1266
      %v1283 = vtanh.pop %v1267
      %v1284 = vtanh.pop %v1268
      %v1285 = vtanh.pop %v1269
      %v1286 = vtanh.pop %v1270
      %v1287 = vtanh.pop %v1271
      %v1288 = vtanh.pop %v1272
      %v1289 = vtanh.pop %v1273
      %v1290 = vmul.f32 %v1274, 0.5
      %v1291 = vmul.f32 %v1275, 0.5
      %v1292 = vmul.f32 %v1276, 0.5
      %v1293 = vmul.f32 %v1277, 0.5
      %v1294 = vmul.f32 %v1278, 0.5
      %v1295 = vmul.f32 %v1279, 0.5
      %v1296 = vmul.f32 %v1280, 0.5
      %v1297 = vmul.f32 %v1281, 0.5
      %v1298 = vmul.f32 %v1282, 0.5
      %v1299 = vmul.f32 %v1283, 0.5
      %v1300 = vmul.f32 %v1284, 0.5
      %v1301 = vmul.f32 %v1285, 0.5
      %v1302 = vmul.f32 %v1286, 0.5
      %v1303 = vmul.f32 %v1287, 0.5
      %v1304 = vmul.f32 %v1288, 0.5
      %v1305 = vmul.f32 %v1289, 0.5
      %v1306 = vadd.f32 %v1290, 0.5
      %v1307 = vadd.f32 %v1291, 0.5
      %v1308 = vadd.f32 %v1292, 0.5
      %v1309 = vadd.f32 %v1293, 0.5
      %v1310 = vadd.f32 %v1294, 0.5
      %v1311 = vadd.f32 %v1295, 0.5
      %v1312 = vadd.f32 %v1296, 0.5
      %v1313 = vadd.f32 %v1297, 0.5
      %v1314 = vadd.f32 %v1298, 0.5
      %v1315 = vadd.f32 %v1299, 0.5
      %v1316 = vadd.f32 %v1300, 0.5
      %v1317 = vadd.f32 %v1301, 0.5
      %v1318 = vadd.f32 %v1302, 0.5
      %v1319 = vadd.f32 %v1303, 0.5
      %v1320 = vadd.f32 %v1304, 0.5
      %v1321 = vadd.f32 %v1305, 0.5
      %v1322 = vadd.f32 %v1306, %v1307
      %v1323 = vrot.slane %v1322, 4
      %v1324 = vadd.f32 %v1322, %v1323
      %v1325 = vrot.slane %v1324, 2
      %v1326 = vadd.f32 %v1324, %v1325
      %v1327 = vrot.slane %v1326, 1
      %v1328 = vadd.f32 %v1326, %v1327
      %v1329 = vadd.f32 %v1308, %v1309
      %v1330 = vrot.slane %v1329, 4
      %v1331 = vadd.f32 %v1329, %v1330
      %v1332 = vrot.slane %v1331, 2
      %v1333 = vadd.f32 %v1331, %v1332
      %v1334 = vrot.slane %v1333, 1
      %v1335 = vadd.f32 %v1333, %v1334
      %v1336 = vadd.f32 %v1310, %v1311
      %v1337 = vrot.slane %v1336, 4
      %v1338 = vadd.f32 %v1336, %v1337
      %v1339 = vrot.slane %v1338, 2
      %v1340 = vadd.f32 %v1338, %v1339
      %v1341 = vrot.slane %v1340, 1
      %v1342 = vadd.f32 %v1340, %v1341
      %v1343 = vadd.f32 %v1312, %v1313
      %v1344 = vrot.slane %v1343, 4
      %v1345 = vadd.f32 %v1343, %v1344
      %v1346 = vrot.slane %v1345, 2
      %v1347 = vadd.f32 %v1345, %v1346
      %v1348 = vrot.slane %v1347, 1
      %v1349 = vadd.f32 %v1347, %v1348
      %v1350 = vadd.f32 %v1314, %v1315
      %v1351 = vrot.slane %v1350, 4
      %v1352 = vadd.f32 %v1350, %v1351
      %v1353 = vrot.slane %v1352, 2
      %v1354 = vadd.f32 %v1352, %v1353
      %v1355 = vrot.slane %v1354, 1
      %v1356 = vadd.f32 %v1354, %v1355
      %v1357 = vadd.f32 %v1316, %v1317
      %v1358 = vrot.slane %v1357, 4
      %v1359 = vadd.f32 %v1357, %v1358
      %v1360 = vrot.slane %v1359, 2
      %v1361 = vadd.f32 %v1359, %v1360
      %v1362 = vrot.slane %v1361, 1
      %v1363 = vadd.f32 %v1361, %v1362
      %v1364 = vadd.f32 %v1318, %v1319
      %v1365 = vrot.slane %v1364, 4
      %v1366 = vadd.f32 %v1364, %v1365
      %v1367 = vrot.slane %v1366, 2
      %v1368 = vadd.f32 %v1366, %v1367
      %v1369 = vrot.slane %v1368, 1
      %v1370 = vadd.f32 %v1368, %v1369
      %v1371 = vadd.f32 %v1320, %v1321
      %v1372 = vrot.slane %v1371, 4
      %v1373 = vadd.f32 %v1371, %v1372
      %v1374 = vrot.slane %v1373, 2
      %v1375 = vadd.f32 %v1373, %v1374
      %v1376 = vrot.slane %v1375, 1
      %v1377 = vadd.f32 %v1375, %v1376
      %vm1386 = vcmask 1041409
      %v1387 = vsel %vm1386, %v1335, %v1328
      %vm1388 = vcmask 1042434
      %v1389 = vsel %vm1388, %v1342, %v1387
      %vm1390 = vcmask 1043459
      %v1391 = vsel %vm1390, %v1349, %v1389
      %vm1392 = vcmask 1044484
      %v1393 = vsel %vm1392, %v1356, %v1391
      %vm1394 = vcmask 1045509
      %v1395 = vsel %vm1394, %v1363, %v1393
      %vm1396 = vcmask 1046534
      %v1397 = vsel %vm1396, %v1370, %v1395
      %vm1398 = vcmask 1047559
      %v1399 = vsel %vm1398, %v1377, %v1397
      %1401 = vst [vmem:[%s542] sm:$0xff] %v1399
      %v1402 = vadd.f32 %v1242, %v1243
      %v1403 = vrot.slane %v1402, 4
      %v1404 = vadd.f32 %v1402, %v1403
      %v1405 = vrot.slane %v1404, 2
      %v1406 = vadd.f32 %v1404, %v1405
      %v1407 = vrot.slane %v1406, 1
      %v1408 = vadd.f32 %v1406, %v1407
      %v1409 = vadd.f32 %v1244, %v1245
      %v1410 = vrot.slane %v1409, 4
      %v1411 = vadd.f32 %v1409, %v1410
      %v1412 = vrot.slane %v1411, 2
      %v1413 = vadd.f32 %v1411, %v1412
      %v1414 = vrot.slane %v1413, 1
      %v1415 = vadd.f32 %v1413, %v1414
      %v1416 = vadd.f32 %v1246, %v1247
      %v1417 = vrot.slane %v1416, 4
      %v1418 = vadd.f32 %v1416, %v1417
      %v1419 = vrot.slane %v1418, 2
      %v1420 = vadd.f32 %v1418, %v1419
      %v1421 = vrot.slane %v1420, 1
      %v1422 = vadd.f32 %v1420, %v1421
      %v1423 = vadd.f32 %v1248, %v1249
      %v1424 = vrot.slane %v1423, 4
      %v1425 = vadd.f32 %v1423, %v1424
      %v1426 = vrot.slane %v1425, 2
      %v1427 = vadd.f32 %v1425, %v1426
      %v1428 = vrot.slane %v1427, 1
      %v1429 = vadd.f32 %v1427, %v1428
      %v1430 = vadd.f32 %v1250, %v1251
      %v1431 = vrot.slane %v1430, 4
      %v1432 = vadd.f32 %v1430, %v1431
      %v1433 = vrot.slane %v1432, 2
      %v1434 = vadd.f32 %v1432, %v1433
      %v1435 = vrot.slane %v1434, 1
      %v1436 = vadd.f32 %v1434, %v1435
      %v1437 = vadd.f32 %v1252, %v1253
      %v1438 = vrot.slane %v1437, 4
      %v1439 = vadd.f32 %v1437, %v1438
      %v1440 = vrot.slane %v1439, 2
      %v1441 = vadd.f32 %v1439, %v1440
      %v1442 = vrot.slane %v1441, 1
      %v1443 = vadd.f32 %v1441, %v1442
      %v1444 = vadd.f32 %v1254, %v1255
      %v1445 = vrot.slane %v1444, 4
      %v1446 = vadd.f32 %v1444, %v1445
      %v1447 = vrot.slane %v1446, 2
      %v1448 = vadd.f32 %v1446, %v1447
      %v1449 = vrot.slane %v1448, 1
      %v1450 = vadd.f32 %v1448, %v1449
      %v1451 = vadd.f32 %v1256, %v1257
      %v1452 = vrot.slane %v1451, 4
      %v1453 = vadd.f32 %v1451, %v1452
      %v1454 = vrot.slane %v1453, 2
      %v1455 = vadd.f32 %v1453, %v1454
      %v1456 = vrot.slane %v1455, 1
      %v1457 = vadd.f32 %v1455, %v1456
      %v1466 = vsel %vm1386, %v1415, %v1408
      %v1467 = vsel %vm1388, %v1422, %v1466
      %v1468 = vsel %vm1390, %v1429, %v1467
      %v1469 = vsel %vm1392, %v1436, %v1468
      %v1470 = vsel %vm1394, %v1443, %v1469
      %v1471 = vsel %vm1396, %v1450, %v1470
      %v1472 = vsel %vm1398, %v1457, %v1471
      %1474 = vst [vmem:[%s550] sm:$0xff] %v1472
      %v1475 = vmul.f32 %v1242, %v1242
      %v1476 = vmul.f32 %v1243, %v1243
      %v1477 = vmul.f32 %v1244, %v1244
      %v1478 = vmul.f32 %v1245, %v1245
      %v1479 = vmul.f32 %v1246, %v1246
      %v1480 = vmul.f32 %v1247, %v1247
      %v1481 = vmul.f32 %v1248, %v1248
      %v1482 = vmul.f32 %v1249, %v1249
      %v1483 = vmul.f32 %v1250, %v1250
      %v1484 = vmul.f32 %v1251, %v1251
      %v1485 = vmul.f32 %v1252, %v1252
      %v1486 = vmul.f32 %v1253, %v1253
      %v1487 = vmul.f32 %v1254, %v1254
      %v1488 = vmul.f32 %v1255, %v1255
      %v1489 = vmul.f32 %v1256, %v1256
      %v1490 = vmul.f32 %v1257, %v1257
      %v1491 = vadd.f32 %v1475, %v1476
      %v1492 = vrot.slane %v1491, 4
      %v1493 = vadd.f32 %v1491, %v1492
      %v1494 = vrot.slane %v1493, 2
      %v1495 = vadd.f32 %v1493, %v1494
      %v1496 = vrot.slane %v1495, 1
      %v1497 = vadd.f32 %v1495, %v1496
      %v1498 = vadd.f32 %v1477, %v1478
      %v1499 = vrot.slane %v1498, 4
      %v1500 = vadd.f32 %v1498, %v1499
      %v1501 = vrot.slane %v1500, 2
      %v1502 = vadd.f32 %v1500, %v1501
      %v1503 = vrot.slane %v1502, 1
      %v1504 = vadd.f32 %v1502, %v1503
      %v1505 = vadd.f32 %v1479, %v1480
      %v1506 = vrot.slane %v1505, 4
      %v1507 = vadd.f32 %v1505, %v1506
      %v1508 = vrot.slane %v1507, 2
      %v1509 = vadd.f32 %v1507, %v1508
      %v1510 = vrot.slane %v1509, 1
      %v1511 = vadd.f32 %v1509, %v1510
      %v1512 = vadd.f32 %v1481, %v1482
      %v1513 = vrot.slane %v1512, 4
      %v1514 = vadd.f32 %v1512, %v1513
      %v1515 = vrot.slane %v1514, 2
      %v1516 = vadd.f32 %v1514, %v1515
      %v1517 = vrot.slane %v1516, 1
      %v1518 = vadd.f32 %v1516, %v1517
      %v1519 = vadd.f32 %v1483, %v1484
      %v1520 = vrot.slane %v1519, 4
      %v1521 = vadd.f32 %v1519, %v1520
      %v1522 = vrot.slane %v1521, 2
      %v1523 = vadd.f32 %v1521, %v1522
      %v1524 = vrot.slane %v1523, 1
      %v1525 = vadd.f32 %v1523, %v1524
      %v1526 = vadd.f32 %v1485, %v1486
      %v1527 = vrot.slane %v1526, 4
      %v1528 = vadd.f32 %v1526, %v1527
      %v1529 = vrot.slane %v1528, 2
      %v1530 = vadd.f32 %v1528, %v1529
      %v1531 = vrot.slane %v1530, 1
      %v1532 = vadd.f32 %v1530, %v1531
      %v1533 = vadd.f32 %v1487, %v1488
      %v1534 = vrot.slane %v1533, 4
      %v1535 = vadd.f32 %v1533, %v1534
      %v1536 = vrot.slane %v1535, 2
      %v1537 = vadd.f32 %v1535, %v1536
      %v1538 = vrot.slane %v1537, 1
      %v1539 = vadd.f32 %v1537, %v1538
      %v1540 = vadd.f32 %v1489, %v1490
      %v1541 = vrot.slane %v1540, 4
      %v1542 = vadd.f32 %v1540, %v1541
      %v1543 = vrot.slane %v1542, 2
      %v1544 = vadd.f32 %v1542, %v1543
      %v1545 = vrot.slane %v1544, 1
      %v1546 = vadd.f32 %v1544, %v1545
      %v1555 = vsel %vm1386, %v1504, %v1497
      %v1556 = vsel %vm1388, %v1511, %v1555
      %v1557 = vsel %vm1390, %v1518, %v1556
      %v1558 = vsel %vm1392, %v1525, %v1557
      %v1559 = vsel %vm1394, %v1532, %v1558
      %v1560 = vsel %vm1396, %v1539, %v1559
      %v1561 = vsel %vm1398, %v1546, %v1560
      %1563 = vst [vmem:[%s558] sm:$0xff] %v1561
      %s1564 = smul.u32 8, %s29
      %p1565 = scmp.lt.s32.totalorder %s28, 1
      %s1566 = scalar_select %p1565, %s28, 1
      %p1567 = scmp.lt.s32.totalorder %s1564, 15
      %s1568 = scalar_select %p1567, %s1564, 15
      %s1569 = smul.addr %s1568, 2
      %s1570 = smul.addr %s1566, 32
      %s1571 = sadd.s32 %s1569, %s1570
      %s1572 = smul.addr %s1571, 8
      %s1573 = scalar_lea.vmem %s9, %s1572
      %p1574 = scmp.lt.s32.totalorder %s28, 1
      %s1575 = scalar_select %p1574, %s28, 1
      %p1576 = scmp.lt.s32.totalorder %s29, 1
      %s1577 = scalar_select %p1576, %s29, 1
      %s1578 = smul.addr %s1575, 2
      %s1579 = sadd.s32 %s1577, %s1578
      %s1580 = smul.addr %s1579, 8
      %s1581 = scalar_lea.vmem %s10, %s1580
      %p1582 = scmp.lt.s32.totalorder %s28, 1
      %s1583 = scalar_select %p1582, %s28, 1
      %p1584 = scmp.lt.s32.totalorder %s29, 1
      %s1585 = scalar_select %p1584, %s29, 1
      %s1586 = smul.addr %s1583, 2
      %s1587 = sadd.s32 %s1585, %s1586
      %s1588 = smul.addr %s1587, 8
      %s1589 = scalar_lea.vmem %s11, %s1588
      %p1590 = scmp.lt.s32.totalorder %s28, 1
      %s1591 = scalar_select %p1590, %s28, 1
      %p1592 = scmp.lt.s32.totalorder %s29, 1
      %s1593 = scalar_select %p1592, %s29, 1
      %s1594 = smul.addr %s1591, 2
      %s1595 = sadd.s32 %s1593, %s1594
      %s1596 = smul.addr %s1595, 8
      %s1597 = scalar_lea.vmem %s12, %s1596
      // Predicated region
      $region57: #{gcn_encoder_forward.8} parent=55 // pred_check
        %p1598 = pneg %p262
      $region58: #{gcn_encoder_forward.8} parent=55 // pred_check_branch
        %1600 = sbr.rel (%p1598) target = $region60
      $region59: #{gcn_encoder_forward.8} parent=55 // pred_region
        %s1601 = smul.u32 8, %s29
      $region60: #{gcn_encoder_forward.8} parent=55 // pred_fallthru
        _
      // Predicated region
      $region61: #{gcn_encoder_forward.8} parent=55 // pred_check
        %p1602 = pneg %p290
      $region62: #{gcn_encoder_forward.8} parent=55 // pred_check_branch
        %1604 = sbr.rel (%p1602) target = $region64
      $region63: #{gcn_encoder_forward.8} parent=55 // pred_region
        _
      $region64: #{gcn_encoder_forward.8} parent=55 // pred_fallthru
        _
      // Predicated region
      $region65: #{gcn_encoder_forward.8} parent=55 // pred_check
        %p1605 = pneg %p318
      $region66: #{gcn_encoder_forward.8} parent=55 // pred_check_branch
        %1607 = sbr.rel (%p1605) target = $region68
      $region67: #{gcn_encoder_forward.8} parent=55 // pred_region
        _
      $region68: #{gcn_encoder_forward.8} parent=55 // pred_fallthru
        _
      // Predicated region
      $region69: #{gcn_encoder_forward.8} parent=55 // pred_check
        %p1608 = pneg %p346
      $region70: #{gcn_encoder_forward.8} parent=55 // pred_check_branch
        %1610 = sbr.rel (%p1608) target = $region72
      $region71: #{gcn_encoder_forward.8} parent=55 // pred_region
        _
      $region72: #{gcn_encoder_forward.8} parent=55 // pred_fallthru
        _
    $region56: #{gcn_encoder_forward.8} parent=5 // pred_fallthru
      _
    %p1611 = scmp.le.s32.totalorder 2, %s19
    // Predicated region
    $region73: #{gcn_encoder_forward.8} parent=5 // pred_check
      %p1612 = pneg %p1611
    $region74: #{gcn_encoder_forward.8} parent=5 // pred_check_branch
      %1614 = sbr.rel (%p1612) target = $region76
    $region75: #{gcn_encoder_forward.8} parent=5 // pred_region
      %s1615 = ssub.s32 %s19, 2
      // Predicated region
      $region77: #{gcn_encoder_forward.8} parent=75 // pred_check
        %p1616 = pneg %p268
      $region78: #{gcn_encoder_forward.8} parent=75 // pred_check_branch
        %1618 = sbr.rel (%p1616) target = $region80
      $region79: #{gcn_encoder_forward.8} parent=75 // pred_region
        %s1619 = smul.u32 8, %s31
        %p1620 = scmp.lt.s32.totalorder %s30, 1
        %s1621 = scalar_select %p1620, %s30, 1
        %p1622 = scmp.lt.s32.totalorder %s1619, 15
        %s1623 = scalar_select %p1622, %s1619, 15
        %s1624 = smul.addr %s1623, 2
        %s1625 = smul.addr %s1621, 32
        %s1626 = sadd.s32 %s1624, %s1625
        %s1627 = smul.addr %s1626, 8
        %s1628 = scalar_lea.vmem %s9, %s1627
      $region80: #{gcn_encoder_forward.8} parent=75 // pred_fallthru
        _
      // Predicated region
      $region81: #{gcn_encoder_forward.8} parent=75 // pred_check
        %p1629 = pneg %p296
      $region82: #{gcn_encoder_forward.8} parent=75 // pred_check_branch
        %1631 = sbr.rel (%p1629) target = $region84
      $region83: #{gcn_encoder_forward.8} parent=75 // pred_region
        %p1632 = scmp.lt.s32.totalorder %s30, 1
        %s1633 = scalar_select %p1632, %s30, 1
        %p1634 = scmp.lt.s32.totalorder %s31, 1
        %s1635 = scalar_select %p1634, %s31, 1
        %s1636 = smul.addr %s1633, 2
        %s1637 = sadd.s32 %s1635, %s1636
        %s1638 = smul.addr %s1637, 8
        %s1639 = scalar_lea.vmem %s10, %s1638
      $region84: #{gcn_encoder_forward.8} parent=75 // pred_fallthru
        _
      // Predicated region
      $region85: #{gcn_encoder_forward.8} parent=75 // pred_check
        %p1640 = pneg %p324
      $region86: #{gcn_encoder_forward.8} parent=75 // pred_check_branch
        %1642 = sbr.rel (%p1640) target = $region88
      $region87: #{gcn_encoder_forward.8} parent=75 // pred_region
        %p1643 = scmp.lt.s32.totalorder %s30, 1
        %s1644 = scalar_select %p1643, %s30, 1
        %p1645 = scmp.lt.s32.totalorder %s31, 1
        %s1646 = scalar_select %p1645, %s31, 1
        %s1647 = smul.addr %s1644, 2
        %s1648 = sadd.s32 %s1646, %s1647
        %s1649 = smul.addr %s1648, 8
        %s1650 = scalar_lea.vmem %s11, %s1649
      $region88: #{gcn_encoder_forward.8} parent=75 // pred_fallthru
        _
      // Predicated region
      $region89: #{gcn_encoder_forward.8} parent=75 // pred_check
        %p1651 = pneg %p352
      $region90: #{gcn_encoder_forward.8} parent=75 // pred_check_branch
        %1653 = sbr.rel (%p1651) target = $region92
      $region91: #{gcn_encoder_forward.8} parent=75 // pred_region
        %p1654 = scmp.lt.s32.totalorder %s30, 1
        %s1655 = scalar_select %p1654, %s30, 1
        %p1656 = scmp.lt.s32.totalorder %s31, 1
        %s1657 = scalar_select %p1656, %s31, 1
        %s1658 = smul.addr %s1655, 2
        %s1659 = sadd.s32 %s1657, %s1658
        %s1660 = smul.addr %s1659, 8
        %s1661 = scalar_lea.vmem %s12, %s1660
      $region92: #{gcn_encoder_forward.8} parent=75 // pred_fallthru
        _
    $region76: #{gcn_encoder_forward.8} parent=5 // pred_fallthru
      _
  $region6: #{gcn_encoder_forward.8} parent=0 // loop_footer
    %s23 = sadd.s32 1, %s19
  $region7: #{gcn_encoder_forward.8} parent=0 // loop_footer_branch
    %18 = sbr.rel target = $region3
  $region8: #{gcn_encoder_forward.8} parent=0 // loop_exit
    _

</llo_original>
